<compile_context>
chip_gen: v5e
topology: v5e:2x2
jax: 0.10.0
libtpu: 0.0.40
codegen_flags: <defaults>
</compile_context>

<pallas_src>
import functools
import math
import numpy as np

import jax
import jax.numpy as jnp
from jax.experimental import pallas as pl
from jax.experimental.pallas import tpu as pltpu


EDGE_TYPES = ["contains", "lt", "gt", "may_contain", "diff"]   # order from __init__
CLUSTER_SRC_TYPES = {"contains", "may_contain"}                # src node is a cluster
LANE = 128


# ----------------------------------------------------------------------------
# Fused per-step kernel:
#   grid t over edge types; VMEM scratch accumulates the LSTM input gates.
# ----------------------------------------------------------------------------

def _step_kernel(hsrc_ref, hdst_ref, adj_ref,
                 w1s_ref, w1d_ref, b1_ref, w2_ref, b2_ref,
                 w3_ref, b3_ref, w4_ref, b4_ref, wm_ref,
                 xg_ref, h_ref, c_ref, whh_ref,
                 h_out, c_out, gacc_ref):
    t = pl.program_id(0)
    hidden = h_ref.shape[-1]

    # Recurrent gate term (tiny matmul; computed unconditionally so no dot sits
    # inside the scf.if — only used at t == 0 to initialize the accumulator).
    rec = jnp.dot(h_ref[...], whh_ref[...], preferred_element_type=jnp.float32)

    @pl.when(t == 0)
    def _():
        # x_gates is the hoisted loop-invariant cell_x @ w_ih[:H] contribution.
        gacc_ref[...] = xg_ref[...] + rec

    # --- per-edge-type 4-layer message MLP ----------------------------------
    # first Linear(2H,H) on cat(h_src, h_dst) == h_src @ w1_src + h_dst @ w1_dst
    hs = hsrc_ref[0]                                            # (E, H)
    hd = hdst_ref[0]                                            # (E, H)
    x = (jnp.dot(hs, w1s_ref[0], preferred_element_type=jnp.float32)
         + jnp.dot(hd, w1d_ref[0], preferred_element_type=jnp.float32)
         + b1_ref[0])
    x = jnp.maximum(x, 0.0)
    x = jnp.maximum(
        jnp.dot(x, w2_ref[0], preferred_element_type=jnp.float32) + b2_ref[0], 0.0)
    x = jnp.maximum(
        jnp.dot(x, w3_ref[0], preferred_element_type=jnp.float32) + b3_ref[0], 0.0)
    msg = jnp.dot(x, w4_ref[0], preferred_element_type=jnp.float32) + b4_ref[0]

    # --- aggregate to destination cells (padded edges have zero adj columns) -
    agg = jnp.dot(adj_ref[0], msg, preferred_element_type=jnp.float32)  # (N, H)

    # --- fold directly into the LSTM input gates (no (N,5H) concat in HBM) --
    gacc_ref[...] += jnp.dot(agg, wm_ref[0], preferred_element_type=jnp.float32)

    # --- epilogue: bias-free LSTMCell, PyTorch gate order [i, f, g, o] -------
    @pl.when(t == pl.num_programs(0) - 1)
    def _():
        g = gacc_ref[...]
        i_g = jax.nn.sigmoid(g[:, 0 * hidden:1 * hidden])
        f_g = jax.nn.sigmoid(g[:, 1 * hidden:2 * hidden])
        g_g = jnp.tanh(g[:, 2 * hidden:3 * hidden])
        o_g = jax.nn.sigmoid(g[:, 3 * hidden:4 * hidden])
        new_c = f_g * c_ref[...] + i_g * g_g
        c_out[...] = new_c
        h_out[...] = o_g * jnp.tanh(new_c)


def fused_step(h_src, h_dst, adj, kp, x_gates, rnn_h, rnn_c):
    """One full message-passing step: 5 message MLPs + aggregation + LSTM update."""
    n_types, e_max, hidden = h_src.shape
    n_cell = adj.shape[1]

    per_type3 = lambda t: (t, 0, 0)
    shared2 = lambda t: (0, 0)

    in_specs = [
        pl.BlockSpec((1, e_max, hidden), per_type3),        # h_src
        pl.BlockSpec((1, e_max, hidden), per_type3),        # h_dst
        pl.BlockSpec((1, n_cell, e_max), per_type3),        # adj
        pl.BlockSpec((1, hidden, hidden), per_type3),       # w1_src
        pl.BlockSpec((1, hidden, hidden), per_type3),       # w1_dst
        pl.BlockSpec((1, 1, hidden), per_type3),            # b1
        pl.BlockSpec((1, hidden, hidden), per_type3),       # w2
        pl.BlockSpec((1, 1, hidden), per_type3),            # b2
        pl.BlockSpec((1, hidden, hidden), per_type3),       # w3
        pl.BlockSpec((1, 1, hidden), per_type3),            # b3
        pl.BlockSpec((1, hidden, hidden), per_type3),       # w4
        pl.BlockSpec((1, 1, hidden), per_type3),            # b4
        pl.BlockSpec((1, hidden, 4 * hidden), per_type3),   # w_m (per-type w_ih slice)
        pl.BlockSpec((n_cell, 4 * hidden), shared2),        # x_gates (loop-invariant)
        pl.BlockSpec((n_cell, hidden), shared2),            # rnn_h
        pl.BlockSpec((n_cell, hidden), shared2),            # rnn_c
        pl.BlockSpec((hidden, 4 * hidden), shared2),        # w_hh
    ]
    out_specs = (pl.BlockSpec((n_cell, hidden), shared2),
                 pl.BlockSpec((n_cell, hidden), shared2))

    return pl.pallas_call(
        _step_kernel,
        out_shape=(jax.ShapeDtypeStruct((n_cell, hidden), jnp.float32),
                   jax.ShapeDtypeStruct((n_cell, hidden), jnp.float32)),
        grid=(n_types,),
        in_specs=in_specs,
        out_specs=out_specs,
        scratch_shapes=[pltpu.VMEM((n_cell, 4 * hidden), jnp.float32)],
        compiler_params=pltpu.CompilerParams(
            dimension_semantics=("arbitrary",)),
    )(h_src, h_dst, adj,
      kp["w1_src"], kp["w1_dst"], kp["b1"], kp["w2"], kp["b2"],
      kp["w3"], kp["b3"], kp["w4"], kp["b4"], kp["w_m"],
      x_gates, rnn_h, rnn_c, kp["w_hh"])


# ----------------------------------------------------------------------------
# calc_logits: single pallas_call, grid over batch, lane-dense (padded) class axis
# ----------------------------------------------------------------------------

def _logits_kernel(c_ref, e_ref, o_ref):
    c = c_ref[0]                     # (T*P, H)
    e = e_ref[0]                     # (K_pad, H)
    o_ref[0] = jax.lax.dot_general(
        c, e, (((1,), (1,)), ((), ())), preferred_element_type=jnp.float32)


def calc_logits_pallas(output_embeddings, batch_size, board_size, cell_outputs):
    """logits[t, b*P + p, k] = sum_h cell[t,b,p,h] * emb[b,k,h]  (exact port)."""
    steps, _, hidden = cell_outputs.shape
    n_cells = board_size * board_size            # P
    n_classes = board_size + 1                   # K
    k_pad = ((n_classes + LANE - 1) // LANE) * LANE

    # (T, B*P, H) -> (B, T*P, H): all steps per batch processed in one grid step.
    cell = cell_outputs.reshape(steps, batch_size, n_cells, hidden)
    cell = jnp.transpose(cell, (1, 0, 2, 3)).reshape(
        batch_size, steps * n_cells, hidden)
    emb = output_embeddings.reshape(batch_size, n_classes, hidden)
    emb = jnp.pad(emb, ((0, 0), (0, k_pad - n_classes), (0, 0)))   # zero rows

    out = pl.pallas_call(
        _logits_kernel,
        out_shape=jax.ShapeDtypeStruct((batch_size, steps * n_cells, k_pad),
                                       jnp.float32),
        grid=(batch_size,),
        in_specs=[
            pl.BlockSpec((1, steps * n_cells, hidden), lambda b: (b, 0, 0)),
            pl.BlockSpec((1, k_pad, hidden), lambda b: (b, 0, 0)),
        ],
        out_specs=pl.BlockSpec((1, steps * n_cells, k_pad), lambda b: (b, 0, 0)),
        compiler_params=pltpu.CompilerParams(
            dimension_semantics=("parallel",)),
    )(cell, emb)

    out = out.reshape(batch_size, steps, n_cells, k_pad)
    out = jnp.transpose(out, (1, 0, 2, 3))[..., :n_classes]
    return out.reshape(steps, batch_size * n_cells, n_classes)


# ----------------------------------------------------------------------------
# Deterministic parameter construction
# ----------------------------------------------------------------------------

def make_linear(key, fan_in, fan_out):
    kw, kb = jax.random.split(key)
    bound = 1.0 / math.sqrt(fan_in)
    w = jax.random.uniform(kw, (fan_in, fan_out), jnp.float32, -bound, bound)
    b = jax.random.uniform(kb, (1, fan_out), jnp.float32, -bound, bound)
    return w, b


def make_params(key, hidden_dim):
    params = {}
    keys = jax.random.split(key, len(EDGE_TYPES) * 4 + 4)
    idx = 0
    for et in EDGE_TYPES:
        w1, b1 = make_linear(keys[idx], 2 * hidden_dim, hidden_dim); idx += 1
        w2, b2 = make_linear(keys[idx], hidden_dim, hidden_dim); idx += 1
        w3, b3 = make_linear(keys[idx], hidden_dim, hidden_dim); idx += 1
        w4, b4 = make_linear(keys[idx], hidden_dim, hidden_dim); idx += 1
        params[et] = (w1, b1, w2, b2, w3, b3, w4, b4)
    lstm_in = (len(EDGE_TYPES) + 1) * hidden_dim                # 6H
    bound = 1.0 / math.sqrt(hidden_dim)
    params["w_ih"] = jax.random.uniform(keys[idx], (lstm_in, 4 * hidden_dim),
                                        jnp.float32, -bound, bound); idx += 1
    params["w_hh"] = jax.random.uniform(keys[idx], (hidden_dim, 4 * hidden_dim),
                                        jnp.float32, -bound, bound); idx += 1
    return params


def prepare_kernel_params(params, hidden_dim):
    """Stack per-edge-type weights along a leading type axis for the fused kernel."""
    def stack(i):
        return jnp.stack([params[et][i] for et in EDGE_TYPES])
    w1 = stack(0)                                               # (5, 2H, H)
    return {
        "w1_src": w1[:, :hidden_dim, :],                        # (5, H, H)
        "w1_dst": w1[:, hidden_dim:, :],                        # (5, H, H)
        "b1": stack(1), "w2": stack(2), "b2": stack(3),
        "w3": stack(4), "b3": stack(5), "w4": stack(6), "b4": stack(7),
        "w_ih_x": params["w_ih"][:hidden_dim, :],               # (H, 4H)
        "w_m": params["w_ih"][hidden_dim:, :].reshape(
            len(EDGE_TYPES), hidden_dim, 4 * hidden_dim),       # (5, H, 4H)
        "w_hh": params["w_hh"],                                 # (H, 4H)
    }


# ----------------------------------------------------------------------------
# Graph construction (deterministic synthetic Futoshiki board graph)
# ----------------------------------------------------------------------------

def build_graph(batch_size, n, q_np):
    """Stacked per-type padded edge lists + dense 0/1 adjacencies.

    src indices point into concat([cell_pool, cluster_pool]); dst are cell ids.
    Padded edges gather row 0 and have all-zero adjacency columns.
    """
    n_cell = batch_size * n * n

    def cell_id(b, r, c): return b * n * n + r * n + c
    def clus_id(b, k): return b * (n + 1) + k

    edges = {et: [] for et in EDGE_TYPES}
    for b in range(batch_size):
        for r in range(n):
            for c in range(n):
                d = cell_id(b, r, c)
                # 'diff': all-different with same row / same column
                for c2 in range(n):
                    if c2 != c:
                        edges["diff"].append((cell_id(b, r, c2), d))
                for r2 in range(n):
                    if r2 != r:
                        edges["diff"].append((cell_id(b, r2, c), d))
                # 'contains': digit-cluster of the given value -> cell
                edges["contains"].append((clus_id(b, int(q_np[d])), d))
                # 'may_contain': every digit-cluster 1..n -> cell
                for k in range(1, n + 1):
                    edges["may_contain"].append((clus_id(b, k), d))
                # 'lt' / 'gt': deterministic inequality constraints
                if (r + c) % 2 == 0 and c < n - 1:
                    edges["lt"].append((cell_id(b, r, c), cell_id(b, r, c + 1)))
                    edges["gt"].append((cell_id(b, r, c + 1), cell_id(b, r, c)))

    e_max = max(len(e) for e in edges.values())
    e_max = ((e_max + 7) // 8) * 8                  # sublane alignment

    n_types = len(EDGE_TYPES)
    src = np.zeros((n_types, e_max), np.int32)
    dst = np.zeros((n_types, e_max), np.int32)
    adj = np.zeros((n_types, n_cell, e_max), np.float32)
    for ti, et in enumerate(EDGE_TYPES):
        off = n_cell if et in CLUSTER_SRC_TYPES else 0
        for j, (s, d) in enumerate(edges[et]):
            src[ti, j] = s + off
            dst[ti, j] = d
            adj[ti, d, j] = 1.0
    return (jnp.asarray(src.reshape(-1)),
            jnp.asarray(dst.reshape(-1)),
            jnp.asarray(adj))


# ----------------------------------------------------------------------------
# Forward pass
# ----------------------------------------------------------------------------

@functools.partial(jax.jit, static_argnames=("batch_size", "board_size",
                                             "hidden_dim", "num_steps"))
def futoshiki_forward(kparams, graph, q, input_embeddings, output_embeddings,
                      *, batch_size, board_size, hidden_dim, num_steps):
    n = board_size
    n_classes = n + 1
    n_types = len(EDGE_TYPES)
    src_flat, dst_flat, adj = graph
    e_max = adj.shape[-1]

    # --- class-embedding lookups (exact port of the PyTorch glue) -----------
    cluster_x = input_embeddings.reshape(batch_size * n_classes, hidden_dim)

    emb = input_embeddings.reshape(batch_size, n_classes, hidden_dim)
    avg_of_embeddings = jnp.mean(emb[:, 1:, :], axis=1, keepdims=True)
    cell_embeddings_lookup = jnp.concatenate(
        [avg_of_embeddings, emb[:, 1:, :]], axis=1
    ).reshape(batch_size * n_classes, hidden_dim)
    sno = jnp.repeat(jnp.arange(batch_size, dtype=jnp.int32), n * n)
    lookup_at = q.astype(jnp.int32) + n_classes * sno
    cell_x = cell_embeddings_lookup[lookup_at]                  # (B*P, H)

    cell_h = cell_x
    rnn_h = jnp.zeros_like(cell_x)
    rnn_c = jnp.zeros_like(cell_x)
    cluster_h = cluster_x

    # loop-invariant LSTM input-gate contribution of cell_x (hoisted)
    x_gates = jnp.dot(cell_x, kparams["w_ih_x"])                # (B*P, 4H)

    # --- RRCN message-passing steps: one fused Pallas kernel per step -------
    cell_outputs, cluster_outputs = [], []
    for _ in range(num_steps):
        pool = jnp.concatenate([cell_h, cluster_h], axis=0)     # cell ++ cluster
        h_src = pool[src_flat].reshape(n_types, e_max, hidden_dim)
        h_dst = cell_h[dst_flat].reshape(n_types, e_max, hidden_dim)
        rnn_h, rnn_c = fused_step(h_src, h_dst, adj, kparams,
                                  x_gates, rnn_h, rnn_c)
        cell_h = rnn_h
        cell_outputs.append(cell_h)
        cluster_outputs.append(cluster_h)

    cell_outputs = jnp.stack(cell_outputs, axis=0)              # (T, B*P, H)
    cluster_outputs = jnp.stack(cluster_outputs, axis=0)        # (T, B*(n+1), H)

    # --- logits (calc_logits) ------------------------------------------------
    logits = calc_logits_pallas(output_embeddings, batch_size, board_size,
                                cell_outputs)                   # (T, B*P, n+1)

    ret_dict = {
        "cluster_embed": cluster_outputs,
        "cell_embed": cell_outputs,
        "cluster_input": cluster_x,
        "cell_input": cell_x,
        "cluster_x": cluster_x,
        "cell_x": cell_x,
        "input_embeddings": input_embeddings,
        "output_embeddings": output_embeddings,
        "gol": jnp.float32(0.0),
    }
    return ret_dict, logits


# ----------------------------------------------------------------------------
# Main
# ----------------------------------------------------------------------------

if __name__ == "__main__":
    batch_size = 2
    board_size = 4                 # 4x4 board -> 16 cells, 5 classes per batch
    hidden_dim = 128               # lane-aligned: full 128-wide vregs / MXU tiles
    num_steps = 3

    key = jax.random.PRNGKey(0)
    k_param, k_in, k_out, k_q = jax.random.split(key, 4)

    params = make_params(k_param, hidden_dim)
    kparams = prepare_kernel_params(params, hidden_dim)

    n_classes = board_size + 1
    input_embeddings = jax.random.normal(
        k_in, (batch_size * n_classes, hidden_dim), jnp.float32)
    output_embeddings = jax.random.normal(
        k_out, (batch_size * n_classes, hidden_dim), jnp.float32)

    # given digits q in [0..board_size], 0 == empty cell
    q = jax.random.randint(k_q, (batch_size * board_size * board_size,),
                           0, board_size + 1, dtype=jnp.int32)

    graph = build_graph(batch_size, board_size, np.asarray(q))

    ret_dict, logits = futoshiki_forward(
        kparams, graph, q, input_embeddings, output_embeddings,
        batch_size=batch_size, board_size=board_size,
        hidden_dim=hidden_dim, num_steps=num_steps)

    logits = jax.block_until_ready(logits)
    assert logits.shape == (num_steps,
                            batch_size * board_size * board_size,
                            board_size + 1)
    assert bool(jnp.all(jnp.isfinite(logits)))
    print("KERNEL_OK")
</pallas_src>

<mosaic_0001>
module attributes {stable_mosaic.version = 11 : i64} {
  func.func @_step_kernel(%arg0: i32, %arg1: memref<1x192x128xf32, #tpu.memory_space<vmem>>, %arg2: memref<1x192x128xf32, #tpu.memory_space<vmem>>, %arg3: memref<1x32x192xf32, #tpu.memory_space<vmem>>, %arg4: memref<1x128x128xf32, #tpu.memory_space<vmem>>, %arg5: memref<1x128x128xf32, #tpu.memory_space<vmem>>, %arg6: memref<1x1x128xf32, #tpu.memory_space<vmem>>, %arg7: memref<1x128x128xf32, #tpu.memory_space<vmem>>, %arg8: memref<1x1x128xf32, #tpu.memory_space<vmem>>, %arg9: memref<1x128x128xf32, #tpu.memory_space<vmem>>, %arg10: memref<1x1x128xf32, #tpu.memory_space<vmem>>, %arg11: memref<1x128x128xf32, #tpu.memory_space<vmem>>, %arg12: memref<1x1x128xf32, #tpu.memory_space<vmem>>, %arg13: memref<1x128x512xf32, #tpu.memory_space<vmem>>, %arg14: memref<32x512xf32, #tpu.memory_space<vmem>>, %arg15: memref<32x128xf32, #tpu.memory_space<vmem>>, %arg16: memref<32x128xf32, #tpu.memory_space<vmem>>, %arg17: memref<128x512xf32, #tpu.memory_space<vmem>>, %arg18: memref<32x128xf32, #tpu.memory_space<vmem>>, %arg19: memref<32x128xf32, #tpu.memory_space<vmem>>, %arg20: memref<32x512xf32, #tpu.memory_space<vmem>>) attributes {dimension_semantics = [#tpu.dimension_semantics<arbitrary>], iteration_bounds = array<i64: 5>, scalar_prefetch = 0 : i64, scratch_operands = 1 : i64, tpu.core_type = #tpu.core_type<tc>, window_params = [{transform_indices = @transform_0, window_bounds = array<i64: 1, 192, 128>}, {transform_indices = @transform_1, window_bounds = array<i64: 1, 192, 128>}, {transform_indices = @transform_2, window_bounds = array<i64: 1, 32, 192>}, {transform_indices = @transform_3, window_bounds = array<i64: 1, 128, 128>}, {transform_indices = @transform_4, window_bounds = array<i64: 1, 128, 128>}, {transform_indices = @transform_5, window_bounds = array<i64: 1, 1, 128>}, {transform_indices = @transform_6, window_bounds = array<i64: 1, 128, 128>}, {transform_indices = @transform_7, window_bounds = array<i64: 1, 1, 128>}, {transform_indices = @transform_8, window_bounds = array<i64: 1, 128, 128>}, {transform_indices = @transform_9, window_bounds = array<i64: 1, 1, 128>}, {transform_indices = @transform_10, window_bounds = array<i64: 1, 128, 128>}, {transform_indices = @transform_11, window_bounds = array<i64: 1, 1, 128>}, {transform_indices = @transform_12, window_bounds = array<i64: 1, 128, 512>}, {pipeline_mode = #tpu.pipeline_mode<synchronous>, transform_indices = @transform_13, window_bounds = array<i64: 32, 512>}, {pipeline_mode = #tpu.pipeline_mode<synchronous>, transform_indices = @transform_14, window_bounds = array<i64: 32, 128>}, {pipeline_mode = #tpu.pipeline_mode<synchronous>, transform_indices = @transform_15, window_bounds = array<i64: 32, 128>}, {pipeline_mode = #tpu.pipeline_mode<synchronous>, transform_indices = @transform_16, window_bounds = array<i64: 128, 512>}, {pipeline_mode = #tpu.pipeline_mode<synchronous>, transform_indices = @transform_17, window_bounds = array<i64: 32, 128>}, {pipeline_mode = #tpu.pipeline_mode<synchronous>, transform_indices = @transform_18, window_bounds = array<i64: 32, 128>}]} {
    %c0 = arith.constant 0 : index
    %c0_0 = arith.constant 0 : index
    %0 = vector.load %arg15[%c0, %c0_0] : memref<32x128xf32, #tpu.memory_space<vmem>>, vector<32x128xf32>
    %c0_1 = arith.constant 0 : index
    %c0_2 = arith.constant 0 : index
    %1 = vector.load %arg17[%c0_1, %c0_2] : memref<128x512xf32, #tpu.memory_space<vmem>>, vector<128x512xf32>
    %cst = arith.constant dense<0.000000e+00> : vector<32x512xf32>
    %2 = tpu.matmul %0, %1, %cst {dimension_numbers = #tpu.dot_dimension_numbers<[1], [0], [0], [1], [0, 0, 1, 1], [], []>} : vector<32x128xf32>, vector<128x512xf32>, vector<32x512xf32> -> vector<32x512xf32>
    %c0_i32 = arith.constant 0 : i32
    %3 = arith.cmpi eq, %arg0, %c0_i32 : i32
    %4 = arith.extui %3 : i1 to i32
    %c0_i32_3 = arith.constant 0 : i32
    %5 = arith.cmpi ne, %4, %c0_i32_3 : i32
    scf.if %5 {
      %c0_58 = arith.constant 0 : index
      %c0_59 = arith.constant 0 : index
      %60 = vector.load %arg14[%c0_58, %c0_59] : memref<32x512xf32, #tpu.memory_space<vmem>>, vector<32x512xf32>
      %61 = arith.addf %60, %2 : vector<32x512xf32>
      %c0_60 = arith.constant 0 : index
      %c0_61 = arith.constant 0 : index
      %62 = vector.load %arg20[%c0_60, %c0_61] : memref<32x512xf32, #tpu.memory_space<vmem>>, vector<32x512xf32>
      tpu.vector_store %arg20[%c0_60, %c0_61], %61 {strides = array<i32>} : memref<32x512xf32, #tpu.memory_space<vmem>>, vector<32x512xf32>,
    } else {
    }
    %c0_4 = arith.constant 0 : index
    %c0_5 = arith.constant 0 : index
    %c0_6 = arith.constant 0 : index
    %6 = vector.load %arg1[%c0_4, %c0_5, %c0_6] : memref<1x192x128xf32, #tpu.memory_space<vmem>>, vector<1x192x128xf32>
    %7 = vector.shape_cast %6 : vector<1x192x128xf32> to vector<192x128xf32>
    %c0_7 = arith.constant 0 : index
    %c0_8 = arith.constant 0 : index
    %c0_9 = arith.constant 0 : index
    %8 = vector.load %arg2[%c0_7, %c0_8, %c0_9] : memref<1x192x128xf32, #tpu.memory_space<vmem>>, vector<1x192x128xf32>
    %9 = vector.shape_cast %8 : vector<1x192x128xf32> to vector<192x128xf32>
    %c0_10 = arith.constant 0 : index
    %c0_11 = arith.constant 0 : index
    %c0_12 = arith.constant 0 : index
    %10 = vector.load %arg4[%c0_10, %c0_11, %c0_12] : memref<1x128x128xf32, #tpu.memory_space<vmem>>, vector<1x128x128xf32>
    %11 = vector.shape_cast %10 : vector<1x128x128xf32> to vector<128x128xf32>
    %cst_13 = arith.constant dense<0.000000e+00> : vector<192x128xf32>
    %12 = tpu.matmul %7, %11, %cst_13 {dimension_numbers = #tpu.dot_dimension_numbers<[1], [0], [0], [1], [0, 0, 1, 1], [], []>} : vector<192x128xf32>, vector<128x128xf32>, vector<192x128xf32> -> vector<192x128xf32>
    %c0_14 = arith.constant 0 : index
    %c0_15 = arith.constant 0 : index
    %c0_16 = arith.constant 0 : index
    %13 = vector.load %arg5[%c0_14, %c0_15, %c0_16] : memref<1x128x128xf32, #tpu.memory_space<vmem>>, vector<1x128x128xf32>
    %14 = vector.shape_cast %13 : vector<1x128x128xf32> to vector<128x128xf32>
    %cst_17 = arith.constant dense<0.000000e+00> : vector<192x128xf32>
    %15 = tpu.matmul %9, %14, %cst_17 {dimension_numbers = #tpu.dot_dimension_numbers<[1], [0], [0], [1], [0, 0, 1, 1], [], []>} : vector<192x128xf32>, vector<128x128xf32>, vector<192x128xf32> -> vector<192x128xf32>
    %16 = arith.addf %12, %15 : vector<192x128xf32>
    %c0_18 = arith.constant 0 : index
    %c0_19 = arith.constant 0 : index
    %c0_20 = arith.constant 0 : index
    %17 = vector.load %arg6[%c0_18, %c0_19, %c0_20] : memref<1x1x128xf32, #tpu.memory_space<vmem>>, vector<1x1x128xf32>
    %18 = vector.shape_cast %17 : vector<1x1x128xf32> to vector<1x128xf32>
    %19 = vector.broadcast %18 : vector<1x128xf32> to vector<192x128xf32>
    %20 = arith.addf %16, %19 : vector<192x128xf32>
    %cst_21 = arith.constant 0.000000e+00 : f32
    %21 = vector.broadcast %cst_21 : f32 to vector<192x128xf32>
    %22 = arith.maximumf %20, %21 : vector<192x128xf32>
    %c0_22 = arith.constant 0 : index
    %c0_23 = arith.constant 0 : index
    %c0_24 = arith.constant 0 : index
    %23 = vector.load %arg7[%c0_22, %c0_23, %c0_24] : memref<1x128x128xf32, #tpu.memory_space<vmem>>, vector<1x128x128xf32>
    %24 = vector.shape_cast %23 : vector<1x128x128xf32> to vector<128x128xf32>
    %cst_25 = arith.constant dense<0.000000e+00> : vector<192x128xf32>
    %25 = tpu.matmul %22, %24, %cst_25 {dimension_numbers = #tpu.dot_dimension_numbers<[1], [0], [0], [1], [0, 0, 1, 1], [], []>} : vector<192x128xf32>, vector<128x128xf32>, vector<192x128xf32> -> vector<192x128xf32>
    %c0_26 = arith.constant 0 : index
    %c0_27 = arith.constant 0 : index
    %c0_28 = arith.constant 0 : index
    %26 = vector.load %arg8[%c0_26, %c0_27, %c0_28] : memref<1x1x128xf32, #tpu.memory_space<vmem>>, vector<1x1x128xf32>
    %27 = vector.shape_cast %26 : vector<1x1x128xf32> to vector<1x128xf32>
    %28 = vector.broadcast %27 : vector<1x128xf32> to vector<192x128xf32>
    %29 = arith.addf %25, %28 : vector<192x128xf32>
    %cst_29 = arith.constant 0.000000e+00 : f32
    %30 = vector.broadcast %cst_29 : f32 to vector<192x128xf32>
    %31 = arith.maximumf %29, %30 : vector<192x128xf32>
    %c0_30 = arith.constant 0 : index
    %c0_31 = arith.constant 0 : index
    %c0_32 = arith.constant 0 : index
    %32 = vector.load %arg9[%c0_30, %c0_31, %c0_32] : memref<1x128x128xf32, #tpu.memory_space<vmem>>, vector<1x128x128xf32>
    %33 = vector.shape_cast %32 : vector<1x128x128xf32> to vector<128x128xf32>
    %cst_33 = arith.constant dense<0.000000e+00> : vector<192x128xf32>
    %34 = tpu.matmul %31, %33, %cst_33 {dimension_numbers = #tpu.dot_dimension_numbers<[1], [0], [0], [1], [0, 0, 1, 1], [], []>} : vector<192x128xf32>, vector<128x128xf32>, vector<192x128xf32> -> vector<192x128xf32>
    %c0_34 = arith.constant 0 : index
    %c0_35 = arith.constant 0 : index
    %c0_36 = arith.constant 0 : index
    %35 = vector.load %arg10[%c0_34, %c0_35, %c0_36] : memref<1x1x128xf32, #tpu.memory_space<vmem>>, vector<1x1x128xf32>
    %36 = vector.shape_cast %35 : vector<1x1x128xf32> to vector<1x128xf32>
    %37 = vector.broadcast %36 : vector<1x128xf32> to vector<192x128xf32>
    %38 = arith.addf %34, %37 : vector<192x128xf32>
    %cst_37 = arith.constant 0.000000e+00 : f32
    %39 = vector.broadcast %cst_37 : f32 to vector<192x128xf32>
    %40 = arith.maximumf %38, %39 : vector<192x128xf32>
    %c0_38 = arith.constant 0 : index
    %c0_39 = arith.constant 0 : index
    %c0_40 = arith.constant 0 : index
    %41 = vector.load %arg11[%c0_38, %c0_39, %c0_40] : memref<1x128x128xf32, #tpu.memory_space<vmem>>, vector<1x128x128xf32>
    %42 = vector.shape_cast %41 : vector<1x128x128xf32> to vector<128x128xf32>
    %cst_41 = arith.constant dense<0.000000e+00> : vector<192x128xf32>
    %43 = tpu.matmul %40, %42, %cst_41 {dimension_numbers = #tpu.dot_dimension_numbers<[1], [0], [0], [1], [0, 0, 1, 1], [], []>} : vector<192x128xf32>, vector<128x128xf32>, vector<192x128xf32> -> vector<192x128xf32>
    %c0_42 = arith.constant 0 : index
    %c0_43 = arith.constant 0 : index
    %c0_44 = arith.constant 0 : index
    %44 = vector.load %arg12[%c0_42, %c0_43, %c0_44] : memref<1x1x128xf32, #tpu.memory_space<vmem>>, vector<1x1x128xf32>
    %45 = vector.shape_cast %44 : vector<1x1x128xf32> to vector<1x128xf32>
    %46 = vector.broadcast %45 : vector<1x128xf32> to vector<192x128xf32>
    %47 = arith.addf %43, %46 : vector<192x128xf32>
    %c0_45 = arith.constant 0 : index
    %c0_46 = arith.constant 0 : index
    %c0_47 = arith.constant 0 : index
    %48 = vector.load %arg3[%c0_45, %c0_46, %c0_47] : memref<1x32x192xf32, #tpu.memory_space<vmem>>, vector<1x32x192xf32>
    %49 = vector.shape_cast %48 : vector<1x32x192xf32> to vector<32x192xf32>
    %cst_48 = arith.constant dense<0.000000e+00> : vector<32x128xf32>
    %50 = tpu.matmul %49, %47, %cst_48 {dimension_numbers = #tpu.dot_dimension_numbers<[1], [0], [0], [1], [0, 0, 1, 1], [], []>} : vector<32x192xf32>, vector<192x128xf32>, vector<32x128xf32> -> vector<32x128xf32>
    %c0_49 = arith.constant 0 : index
    %c0_50 = arith.constant 0 : index
    %51 = vector.load %arg20[%c0_49, %c0_50] : memref<32x512xf32, #tpu.memory_space<vmem>>, vector<32x512xf32>
    %c0_51 = arith.constant 0 : index
    %c0_52 = arith.constant 0 : index
    %c0_53 = arith.constant 0 : index
    %52 = vector.load %arg13[%c0_51, %c0_52, %c0_53] : memref<1x128x512xf32, #tpu.memory_space<vmem>>, vector<1x128x512xf32>
    %53 = vector.shape_cast %52 : vector<1x128x512xf32> to vector<128x512xf32>
    %cst_54 = arith.constant dense<0.000000e+00> : vector<32x512xf32>
    %54 = tpu.matmul %50, %53, %cst_54 {dimension_numbers = #tpu.dot_dimension_numbers<[1], [0], [0], [1], [0, 0, 1, 1], [], []>} : vector<32x128xf32>, vector<128x512xf32>, vector<32x512xf32> -> vector<32x512xf32>
    %55 = arith.addf %51, %54 : vector<32x512xf32>
    %c0_55 = arith.constant 0 : index
    %c0_56 = arith.constant 0 : index
    %56 = vector.load %arg20[%c0_55, %c0_56] : memref<32x512xf32, #tpu.memory_space<vmem>>, vector<32x512xf32>
    tpu.vector_store %arg20[%c0_55, %c0_56], %55 {strides = array<i32>} : memref<32x512xf32, #tpu.memory_space<vmem>>, vector<32x512xf32>,
    %c4_i32 = arith.constant 4 : i32
    %57 = arith.cmpi eq, %arg0, %c4_i32 : i32
    %58 = arith.extui %57 : i1 to i32
    %c0_i32_57 = arith.constant 0 : i32
    %59 = arith.cmpi ne, %58, %c0_i32_57 : i32
    scf.if %59 {
      %c0_58 = arith.constant 0 : index
      %c0_59 = arith.constant 0 : index
      %60 = vector.load %arg20[%c0_58, %c0_59] : memref<32x512xf32, #tpu.memory_space<vmem>>, vector<32x512xf32>
      %61 = vector.extract_strided_slice %60 {offsets = [0, 0], sizes = [32, 128], strides = [1, 1]} : vector<32x512xf32> to vector<32x128xf32>
      %62 = arith.negf %61 : vector<32x128xf32>
      %63 = math.exp %62 : vector<32x128xf32>
      %cst_60 = arith.constant 1.000000e+00 : f32
      %64 = vector.broadcast %cst_60 : f32 to vector<32x128xf32>
      %65 = arith.addf %64, %63 : vector<32x128xf32>
      %66 = arith.divf %64, %65 : vector<32x128xf32>
      %67 = vector.extract_strided_slice %60 {offsets = [0, 128], sizes = [32, 128], strides = [1, 1]} : vector<32x512xf32> to vector<32x128xf32>
      %68 = arith.negf %67 : vector<32x128xf32>
      %69 = math.exp %68 : vector<32x128xf32>
      %cst_61 = arith.constant 1.000000e+00 : f32
      %70 = vector.broadcast %cst_61 : f32 to vector<32x128xf32>
      %71 = arith.addf %70, %69 : vector<32x128xf32>
      %72 = arith.divf %70, %71 : vector<32x128xf32>
      %73 = vector.extract_strided_slice %60 {offsets = [0, 256], sizes = [32, 128], strides = [1, 1]} : vector<32x512xf32> to vector<32x128xf32>
      %74 = math.tanh %73 : vector<32x128xf32>
      %75 = vector.extract_strided_slice %60 {offsets = [0, 384], sizes = [32, 128], strides = [1, 1]} : vector<32x512xf32> to vector<32x128xf32>
      %76 = arith.negf %75 : vector<32x128xf32>
      %77 = math.exp %76 : vector<32x128xf32>
      %cst_62 = arith.constant 1.000000e+00 : f32
      %78 = vector.broadcast %cst_62 : f32 to vector<32x128xf32>
      %79 = arith.addf %78, %77 : vector<32x128xf32>
      %80 = arith.divf %78, %79 : vector<32x128xf32>
      %c0_63 = arith.constant 0 : index
      %c0_64 = arith.constant 0 : index
      %81 = vector.load %arg16[%c0_63, %c0_64] : memref<32x128xf32, #tpu.memory_space<vmem>>, vector<32x128xf32>
      %82 = arith.mulf %72, %81 : vector<32x128xf32>
      %83 = arith.mulf %66, %74 : vector<32x128xf32>
      %84 = arith.addf %82, %83 : vector<32x128xf32>
      %c0_65 = arith.constant 0 : index
      %c0_66 = arith.constant 0 : index
      %85 = vector.load %arg19[%c0_65, %c0_66] : memref<32x128xf32, #tpu.memory_space<vmem>>, vector<32x128xf32>
      tpu.vector_store %arg19[%c0_65, %c0_66], %84 {strides = array<i32>} : memref<32x128xf32, #tpu.memory_space<vmem>>, vector<32x128xf32>,
      %86 = math.tanh %84 : vector<32x128xf32>
      %87 = arith.mulf %80, %86 : vector<32x128xf32>
      %c0_67 = arith.constant 0 : index
      %c0_68 = arith.constant 0 : index
      %88 = vector.load %arg18[%c0_67, %c0_68] : memref<32x128xf32, #tpu.memory_space<vmem>>, vector<32x128xf32>
      tpu.vector_store %arg18[%c0_67, %c0_68], %87 {strides = array<i32>} : memref<32x128xf32, #tpu.memory_space<vmem>>, vector<32x128xf32>,
    } else {
    }
    return
  }
  func.func @transform_0(%arg0: i32) -> (i32, i32, i32) {
    %c0_i32 = arith.constant 0 : i32
    %c0_i32_0 = arith.constant 0 : i32
    %c0_i32_1 = arith.constant 0 : i32
    return %arg0, %c0_i32, %c0_i32_0 : i32, i32, i32
  }
  func.func @transform_1(%arg0: i32) -> (i32, i32, i32) {
    %c0_i32 = arith.constant 0 : i32
    %c0_i32_0 = arith.constant 0 : i32
    %c0_i32_1 = arith.constant 0 : i32
    return %arg0, %c0_i32, %c0_i32_0 : i32, i32, i32
  }
  func.func @transform_2(%arg0: i32) -> (i32, i32, i32) {
    %c0_i32 = arith.constant 0 : i32
    %c0_i32_0 = arith.constant 0 : i32
    %c0_i32_1 = arith.constant 0 : i32
    return %arg0, %c0_i32, %c0_i32_0 : i32, i32, i32
  }
  func.func @transform_3(%arg0: i32) -> (i32, i32, i32) {
    %c0_i32 = arith.constant 0 : i32
    %c0_i32_0 = arith.constant 0 : i32
    %c0_i32_1 = arith.constant 0 : i32
    return %arg0, %c0_i32, %c0_i32_0 : i32, i32, i32
  }
  func.func @transform_4(%arg0: i32) -> (i32, i32, i32) {
    %c0_i32 = arith.constant 0 : i32
    %c0_i32_0 = arith.constant 0 : i32
    %c0_i32_1 = arith.constant 0 : i32
    return %arg0, %c0_i32, %c0_i32_0 : i32, i32, i32
  }
  func.func @transform_5(%arg0: i32) -> (i32, i32, i32) {
    %c0_i32 = arith.constant 0 : i32
    %c0_i32_0 = arith.constant 0 : i32
    %c0_i32_1 = arith.constant 0 : i32
    return %arg0, %c0_i32, %c0_i32_0 : i32, i32, i32
  }
  func.func @transform_6(%arg0: i32) -> (i32, i32, i32) {
    %c0_i32 = arith.constant 0 : i32
    %c0_i32_0 = arith.constant 0 : i32
    %c0_i32_1 = arith.constant 0 : i32
    return %arg0, %c0_i32, %c0_i32_0 : i32, i32, i32
  }
  func.func @transform_7(%arg0: i32) -> (i32, i32, i32) {
    %c0_i32 = arith.constant 0 : i32
    %c0_i32_0 = arith.constant 0 : i32
    %c0_i32_1 = arith.constant 0 : i32
    return %arg0, %c0_i32, %c0_i32_0 : i32, i32, i32
  }
  func.func @transform_8(%arg0: i32) -> (i32, i32, i32) {
    %c0_i32 = arith.constant 0 : i32
    %c0_i32_0 = arith.constant 0 : i32
    %c0_i32_1 = arith.constant 0 : i32
    return %arg0, %c0_i32, %c0_i32_0 : i32, i32, i32
  }
  func.func @transform_9(%arg0: i32) -> (i32, i32, i32) {
    %c0_i32 = arith.constant 0 : i32
    %c0_i32_0 = arith.constant 0 : i32
    %c0_i32_1 = arith.constant 0 : i32
    return %arg0, %c0_i32, %c0_i32_0 : i32, i32, i32
  }
  func.func @transform_10(%arg0: i32) -> (i32, i32, i32) {
    %c0_i32 = arith.constant 0 : i32
    %c0_i32_0 = arith.constant 0 : i32
    %c0_i32_1 = arith.constant 0 : i32
    return %arg0, %c0_i32, %c0_i32_0 : i32, i32, i32
  }
  func.func @transform_11(%arg0: i32) -> (i32, i32, i32) {
    %c0_i32 = arith.constant 0 : i32
    %c0_i32_0 = arith.constant 0 : i32
    %c0_i32_1 = arith.constant 0 : i32
    return %arg0, %c0_i32, %c0_i32_0 : i32, i32, i32
  }
  func.func @transform_12(%arg0: i32) -> (i32, i32, i32) {
    %c0_i32 = arith.constant 0 : i32
    %c0_i32_0 = arith.constant 0 : i32
    %c0_i32_1 = arith.constant 0 : i32
    return %arg0, %c0_i32, %c0_i32_0 : i32, i32, i32
  }
  func.func @transform_13(%arg0: i32) -> (i32, i32) {
    %c0_i32 = arith.constant 0 : i32
    %c0_i32_0 = arith.constant 0 : i32
    %c0_i32_1 = arith.constant 0 : i32
    return %c0_i32, %c0_i32_0 : i32, i32
  }
  func.func @transform_14(%arg0: i32) -> (i32, i32) {
    %c0_i32 = arith.constant 0 : i32
    %c0_i32_0 = arith.constant 0 : i32
    %c0_i32_1 = arith.constant 0 : i32
    return %c0_i32, %c0_i32_0 : i32, i32
  }
  func.func @transform_15(%arg0: i32) -> (i32, i32) {
    %c0_i32 = arith.constant 0 : i32
    %c0_i32_0 = arith.constant 0 : i32
    %c0_i32_1 = arith.constant 0 : i32
    return %c0_i32, %c0_i32_0 : i32, i32
  }
  func.func @transform_16(%arg0: i32) -> (i32, i32) {
    %c0_i32 = arith.constant 0 : i32
    %c0_i32_0 = arith.constant 0 : i32
    %c0_i32_1 = arith.constant 0 : i32
    return %c0_i32, %c0_i32_0 : i32, i32
  }
  func.func @transform_17(%arg0: i32) -> (i32, i32) {
    %c0_i32 = arith.constant 0 : i32
    %c0_i32_0 = arith.constant 0 : i32
    %c0_i32_1 = arith.constant 0 : i32
    return %c0_i32, %c0_i32_0 : i32, i32
  }
  func.func @transform_18(%arg0: i32) -> (i32, i32) {
    %c0_i32 = arith.constant 0 : i32
    %c0_i32_0 = arith.constant 0 : i32
    %c0_i32_1 = arith.constant 0 : i32
    return %c0_i32, %c0_i32_0 : i32, i32
  }
}

module attributes {stable_mosaic.version = 11 : i64} {
  func.func @_step_kernel(%arg0: i32, %arg1: memref<1x192x128xf32, #tpu.memory_space<vmem>>, %arg2: memref<1x192x128xf32, #tpu.memory_space<vmem>>, %arg3: memref<1x32x192xf32, #tpu.memory_space<vmem>>, %arg4: memref<1x128x128xf32, #tpu.memory_space<vmem>>, %arg5: memref<1x128x128xf32, #tpu.memory_space<vmem>>, %arg6: memref<1x1x128xf32, #tpu.memory_space<vmem>>, %arg7: memref<1x128x128xf32, #tpu.memory_space<vmem>>, %arg8: memref<1x1x128xf32, #tpu.memory_space<vmem>>, %arg9: memref<1x128x128xf32, #tpu.memory_space<vmem>>, %arg10: memref<1x1x128xf32, #tpu.memory_space<vmem>>, %arg11: memref<1x128x128xf32, #tpu.memory_space<vmem>>, %arg12: memref<1x1x128xf32, #tpu.memory_space<vmem>>, %arg13: memref<1x128x512xf32, #tpu.memory_space<vmem>>, %arg14: memref<32x512xf32, #tpu.memory_space<vmem>>, %arg15: memref<32x128xf32, #tpu.memory_space<vmem>>, %arg16: memref<32x128xf32, #tpu.memory_space<vmem>>, %arg17: memref<128x512xf32, #tpu.memory_space<vmem>>, %arg18: memref<32x128xf32, #tpu.memory_space<vmem>>, %arg19: memref<32x128xf32, #tpu.memory_space<vmem>>, %arg20: memref<32x512xf32, #tpu.memory_space<vmem>>) attributes {dimension_semantics = [#tpu.dimension_semantics<arbitrary>], iteration_bounds = array<i64: 5>, scalar_prefetch = 0 : i64, scratch_operands = 1 : i64, tpu.core_type = #tpu.core_type<tc>, window_params = [{transform_indices = @transform_0, window_bounds = array<i64: 1, 192, 128>}, {transform_indices = @transform_1, window_bounds = array<i64: 1, 192, 128>}, {transform_indices = @transform_2, window_bounds = array<i64: 1, 32, 192>}, {transform_indices = @transform_3, window_bounds = array<i64: 1, 128, 128>}, {transform_indices = @transform_4, window_bounds = array<i64: 1, 128, 128>}, {transform_indices = @transform_5, window_bounds = array<i64: 1, 1, 128>}, {transform_indices = @transform_6, window_bounds = array<i64: 1, 128, 128>}, {transform_indices = @transform_7, window_bounds = array<i64: 1, 1, 128>}, {transform_indices = @transform_8, window_bounds = array<i64: 1, 128, 128>}, {transform_indices = @transform_9, window_bounds = array<i64: 1, 1, 128>}, {transform_indices = @transform_10, window_bounds = array<i64: 1, 128, 128>}, {transform_indices = @transform_11, window_bounds = array<i64: 1, 1, 128>}, {transform_indices = @transform_12, window_bounds = array<i64: 1, 128, 512>}, {pipeline_mode = #tpu.pipeline_mode<synchronous>, transform_indices = @transform_13, window_bounds = array<i64: 32, 512>}, {pipeline_mode = #tpu.pipeline_mode<synchronous>, transform_indices = @transform_14, window_bounds = array<i64: 32, 128>}, {pipeline_mode = #tpu.pipeline_mode<synchronous>, transform_indices = @transform_15, window_bounds = array<i64: 32, 128>}, {pipeline_mode = #tpu.pipeline_mode<synchronous>, transform_indices = @transform_16, window_bounds = array<i64: 128, 512>}, {pipeline_mode = #tpu.pipeline_mode<synchronous>, transform_indices = @transform_17, window_bounds = array<i64: 32, 128>}, {pipeline_mode = #tpu.pipeline_mode<synchronous>, transform_indices = @transform_18, window_bounds = array<i64: 32, 128>}]} {
    %c0 = arith.constant 0 : index
    %c0_0 = arith.constant 0 : index
    %0 = vector.load %arg15[%c0, %c0_0] : memref<32x128xf32, #tpu.memory_space<vmem>>, vector<32x128xf32>
    %c0_1 = arith.constant 0 : index
    %c0_2 = arith.constant 0 : index
    %1 = vector.load %arg17[%c0_1, %c0_2] : memref<128x512xf32, #tpu.memory_space<vmem>>, vector<128x512xf32>
    %cst = arith.constant dense<0.000000e+00> : vector<32x512xf32>
    %2 = tpu.matmul %0, %1, %cst {dimension_numbers = #tpu.dot_dimension_numbers<[1], [0], [0], [1], [0, 0, 1, 1], [], []>} : vector<32x128xf32>, vector<128x512xf32>, vector<32x512xf32> -> vector<32x512xf32>
    %c0_i32 = arith.constant 0 : i32
    %3 = arith.cmpi eq, %arg0, %c0_i32 : i32
    %4 = arith.extui %3 : i1 to i32
    %c0_i32_3 = arith.constant 0 : i32
    %5 = arith.cmpi ne, %4, %c0_i32_3 : i32
    scf.if %5 {
      %c0_58 = arith.constant 0 : index
      %c0_59 = arith.constant 0 : index
      %60 = vector.load %arg14[%c0_58, %c0_59] : memref<32x512xf32, #tpu.memory_space<vmem>>, vector<32x512xf32>
      %61 = arith.addf %60, %2 : vector<32x512xf32>
      %c0_60 = arith.constant 0 : index
      %c0_61 = arith.constant 0 : index
      %62 = vector.load %arg20[%c0_60, %c0_61] : memref<32x512xf32, #tpu.memory_space<vmem>>, vector<32x512xf32>
      tpu.vector_store %arg20[%c0_60, %c0_61], %61 {strides = array<i32>} : memref<32x512xf32, #tpu.memory_space<vmem>>, vector<32x512xf32>,
    } else {
    }
    %c0_4 = arith.constant 0 : index
    %c0_5 = arith.constant 0 : index
    %c0_6 = arith.constant 0 : index
    %6 = vector.load %arg1[%c0_4, %c0_5, %c0_6] : memref<1x192x128xf32, #tpu.memory_space<vmem>>, vector<1x192x128xf32>
    %7 = vector.shape_cast %6 : vector<1x192x128xf32> to vector<192x128xf32>
    %c0_7 = arith.constant 0 : index
    %c0_8 = arith.constant 0 : index
    %c0_9 = arith.constant 0 : index
    %8 = vector.load %arg2[%c0_7, %c0_8, %c0_9] : memref<1x192x128xf32, #tpu.memory_space<vmem>>, vector<1x192x128xf32>
    %9 = vector.shape_cast %8 : vector<1x192x128xf32> to vector<192x128xf32>
    %c0_10 = arith.constant 0 : index
    %c0_11 = arith.constant 0 : index
    %c0_12 = arith.constant 0 : index
    %10 = vector.load %arg4[%c0_10, %c0_11, %c0_12] : memref<1x128x128xf32, #tpu.memory_space<vmem>>, vector<1x128x128xf32>
    %11 = vector.shape_cast %10 : vector<1x128x128xf32> to vector<128x128xf32>
    %cst_13 = arith.constant dense<0.000000e+00> : vector<192x128xf32>
    %12 = tpu.matmul %7, %11, %cst_13 {dimension_numbers = #tpu.dot_dimension_numbers<[1], [0], [0], [1], [0, 0, 1, 1], [], []>} : vector<192x128xf32>, vector<128x128xf32>, vector<192x128xf32> -> vector<192x128xf32>
    %c0_14 = arith.constant 0 : index
    %c0_15 = arith.constant 0 : index
    %c0_16 = arith.constant 0 : index
    %13 = vector.load %arg5[%c0_14, %c0_15, %c0_16] : memref<1x128x128xf32, #tpu.memory_space<vmem>>, vector<1x128x128xf32>
    %14 = vector.shape_cast %13 : vector<1x128x128xf32> to vector<128x128xf32>
    %cst_17 = arith.constant dense<0.000000e+00> : vector<192x128xf32>
    %15 = tpu.matmul %9, %14, %cst_17 {dimension_numbers = #tpu.dot_dimension_numbers<[1], [0], [0], [1], [0, 0, 1, 1], [], []>} : vector<192x128xf32>, vector<128x128xf32>, vector<192x128xf32> -> vector<192x128xf32>
    %16 = arith.addf %12, %15 : vector<192x128xf32>
    %c0_18 = arith.constant 0 : index
    %c0_19 = arith.constant 0 : index
    %c0_20 = arith.constant 0 : index
    %17 = vector.load %arg6[%c0_18, %c0_19, %c0_20] : memref<1x1x128xf32, #tpu.memory_space<vmem>>, vector<1x1x128xf32>
    %18 = vector.shape_cast %17 : vector<1x1x128xf32> to vector<1x128xf32>
    %19 = vector.broadcast %18 : vector<1x128xf32> to vector<192x128xf32>
    %20 = arith.addf %16, %19 : vector<192x128xf32>
    %cst_21 = arith.constant 0.000000e+00 : f32
    %21 = vector.broadcast %cst_21 : f32 to vector<192x128xf32>
    %22 = arith.maximumf %20, %21 : vector<192x128xf32>
    %c0_22 = arith.constant 0 : index
    %c0_23 = arith.constant 0 : index
    %c0_24 = arith.constant 0 : index
    %23 = vector.load %arg7[%c0_22, %c0_23, %c0_24] : memref<1x128x128xf32, #tpu.memory_space<vmem>>, vector<1x128x128xf32>
    %24 = vector.shape_cast %23 : vector<1x128x128xf32> to vector<128x128xf32>
    %cst_25 = arith.constant dense<0.000000e+00> : vector<192x128xf32>
    %25 = tpu.matmul %22, %24, %cst_25 {dimension_numbers = #tpu.dot_dimension_numbers<[1], [0], [0], [1], [0, 0, 1, 1], [], []>} : vector<192x128xf32>, vector<128x128xf32>, vector<192x128xf32> -> vector<192x128xf32>
    %c0_26 = arith.constant 0 : index
    %c0_27 = arith.constant 0 : index
    %c0_28 = arith.constant 0 : index
    %26 = vector.load %arg8[%c0_26, %c0_27, %c0_28] : memref<1x1x128xf32, #tpu.memory_space<vmem>>, vector<1x1x128xf32>
    %27 = vector.shape_cast %26 : vector<1x1x128xf32> to vector<1x128xf32>
    %28 = vector.broadcast %27 : vector<1x128xf32> to vector<192x128xf32>
    %29 = arith.addf %25, %28 : vector<192x128xf32>
    %cst_29 = arith.constant 0.000000e+00 : f32
    %30 = vector.broadcast %cst_29 : f32 to vector<192x128xf32>
    %31 = arith.maximumf %29, %30 : vector<192x128xf32>
    %c0_30 = arith.constant 0 : index
    %c0_31 = arith.constant 0 : index
    %c0_32 = arith.constant 0 : index
    %32 = vector.load %arg9[%c0_30, %c0_31, %c0_32] : memref<1x128x128xf32, #tpu.memory_space<vmem>>, vector<1x128x128xf32>
    %33 = vector.shape_cast %32 : vector<1x128x128xf32> to vector<128x128xf32>
    %cst_33 = arith.constant dense<0.000000e+00> : vector<192x128xf32>
    %34 = tpu.matmul %31, %33, %cst_33 {dimension_numbers = #tpu.dot_dimension_numbers<[1], [0], [0], [1], [0, 0, 1, 1], [], []>} : vector<192x128xf32>, vector<128x128xf32>, vector<192x128xf32> -> vector<192x128xf32>
    %c0_34 = arith.constant 0 : index
    %c0_35 = arith.constant 0 : index
    %c0_36 = arith.constant 0 : index
    %35 = vector.load %arg10[%c0_34, %c0_35, %c0_36] : memref<1x1x128xf32, #tpu.memory_space<vmem>>, vector<1x1x128xf32>
    %36 = vector.shape_cast %35 : vector<1x1x128xf32> to vector<1x128xf32>
    %37 = vector.broadcast %36 : vector<1x128xf32> to vector<192x128xf32>
    %38 = arith.addf %34, %37 : vector<192x128xf32>
    %cst_37 = arith.constant 0.000000e+00 : f32
    %39 = vector.broadcast %cst_37 : f32 to vector<192x128xf32>
    %40 = arith.maximumf %38, %39 : vector<192x128xf32>
    %c0_38 = arith.constant 0 : index
    %c0_39 = arith.constant 0 : index
    %c0_40 = arith.constant 0 : index
    %41 = vector.load %arg11[%c0_38, %c0_39, %c0_40] : memref<1x128x128xf32, #tpu.memory_space<vmem>>, vector<1x128x128xf32>
    %42 = vector.shape_cast %41 : vector<1x128x128xf32> to vector<128x128xf32>
    %cst_41 = arith.constant dense<0.000000e+00> : vector<192x128xf32>
    %43 = tpu.matmul %40, %42, %cst_41 {dimension_numbers = #tpu.dot_dimension_numbers<[1], [0], [0], [1], [0, 0, 1, 1], [], []>} : vector<192x128xf32>, vector<128x128xf32>, vector<192x128xf32> -> vector<192x128xf32>
    %c0_42 = arith.constant 0 : index
    %c0_43 = arith.constant 0 : index
    %c0_44 = arith.constant 0 : index
    %44 = vector.load %arg12[%c0_42, %c0_43, %c0_44] : memref<1x1x128xf32, #tpu.memory_space<vmem>>, vector<1x1x128xf32>
    %45 = vector.shape_cast %44 : vector<1x1x128xf32> to vector<1x128xf32>
    %46 = vector.broadcast %45 : vector<1x128xf32> to vector<192x128xf32>
    %47 = arith.addf %43, %46 : vector<192x128xf32>
    %c0_45 = arith.constant 0 : index
    %c0_46 = arith.constant 0 : index
    %c0_47 = arith.constant 0 : index
    %48 = vector.load %arg3[%c0_45, %c0_46, %c0_47] : memref<1x32x192xf32, #tpu.memory_space<vmem>>, vector<1x32x192xf32>
    %49 = vector.shape_cast %48 : vector<1x32x192xf32> to vector<32x192xf32>
    %cst_48 = arith.constant dense<0.000000e+00> : vector<32x128xf32>
    %50 = tpu.matmul %49, %47, %cst_48 {dimension_numbers = #tpu.dot_dimension_numbers<[1], [0], [0], [1], [0, 0, 1, 1], [], []>} : vector<32x192xf32>, vector<192x128xf32>, vector<32x128xf32> -> vector<32x128xf32>
    %c0_49 = arith.constant 0 : index
    %c0_50 = arith.constant 0 : index
    %51 = vector.load %arg20[%c0_49, %c0_50] : memref<32x512xf32, #tpu.memory_space<vmem>>, vector<32x512xf32>
    %c0_51 = arith.constant 0 : index
    %c0_52 = arith.constant 0 : index
    %c0_53 = arith.constant 0 : index
    %52 = vector.load %arg13[%c0_51, %c0_52, %c0_53] : memref<1x128x512xf32, #tpu.memory_space<vmem>>, vector<1x128x512xf32>
    %53 = vector.shape_cast %52 : vector<1x128x512xf32> to vector<128x512xf32>
    %cst_54 = arith.constant dense<0.000000e+00> : vector<32x512xf32>
    %54 = tpu.matmul %50, %53, %cst_54 {dimension_numbers = #tpu.dot_dimension_numbers<[1], [0], [0], [1], [0, 0, 1, 1], [], []>} : vector<32x128xf32>, vector<128x512xf32>, vector<32x512xf32> -> vector<32x512xf32>
    %55 = arith.addf %51, %54 : vector<32x512xf32>
    %c0_55 = arith.constant 0 : index
    %c0_56 = arith.constant 0 : index
    %56 = vector.load %arg20[%c0_55, %c0_56] : memref<32x512xf32, #tpu.memory_space<vmem>>, vector<32x512xf32>
    tpu.vector_store %arg20[%c0_55, %c0_56], %55 {strides = array<i32>} : memref<32x512xf32, #tpu.memory_space<vmem>>, vector<32x512xf32>,
    %c4_i32 = arith.constant 4 : i32
    %57 = arith.cmpi eq, %arg0, %c4_i32 : i32
    %58 = arith.extui %57 : i1 to i32
    %c0_i32_57 = arith.constant 0 : i32
    %59 = arith.cmpi ne, %58, %c0_i32_57 : i32
    scf.if %59 {
      %c0_58 = arith.constant 0 : index
      %c0_59 = arith.constant 0 : index
      %60 = vector.load %arg20[%c0_58, %c0_59] : memref<32x512xf32, #tpu.memory_space<vmem>>, vector<32x512xf32>
      %61 = vector.extract_strided_slice %60 {offsets = [0, 0], sizes = [32, 128], strides = [1, 1]} : vector<32x512xf32> to vector<32x128xf32>
      %62 = arith.negf %61 : vector<32x128xf32>
      %63 = math.exp %62 : vector<32x128xf32>
      %cst_60 = arith.constant 1.000000e+00 : f32
      %64 = vector.broadcast %cst_60 : f32 to vector<32x128xf32>
      %65 = arith.addf %64, %63 : vector<32x128xf32>
      %66 = arith.divf %64, %65 : vector<32x128xf32>
      %67 = vector.extract_strided_slice %60 {offsets = [0, 128], sizes = [32, 128], strides = [1, 1]} : vector<32x512xf32> to vector<32x128xf32>
      %68 = arith.negf %67 : vector<32x128xf32>
      %69 = math.exp %68 : vector<32x128xf32>
      %cst_61 = arith.constant 1.000000e+00 : f32
      %70 = vector.broadcast %cst_61 : f32 to vector<32x128xf32>
      %71 = arith.addf %70, %69 : vector<32x128xf32>
      %72 = arith.divf %70, %71 : vector<32x128xf32>
      %73 = vector.extract_strided_slice %60 {offsets = [0, 256], sizes = [32, 128], strides = [1, 1]} : vector<32x512xf32> to vector<32x128xf32>
      %74 = math.tanh %73 : vector<32x128xf32>
      %75 = vector.extract_strided_slice %60 {offsets = [0, 384], sizes = [32, 128], strides = [1, 1]} : vector<32x512xf32> to vector<32x128xf32>
      %76 = arith.negf %75 : vector<32x128xf32>
      %77 = math.exp %76 : vector<32x128xf32>
      %cst_62 = arith.constant 1.000000e+00 : f32
      %78 = vector.broadcast %cst_62 : f32 to vector<32x128xf32>
      %79 = arith.addf %78, %77 : vector<32x128xf32>
      %80 = arith.divf %78, %79 : vector<32x128xf32>
      %c0_63 = arith.constant 0 : index
      %c0_64 = arith.constant 0 : index
      %81 = vector.load %arg16[%c0_63, %c0_64] : memref<32x128xf32, #tpu.memory_space<vmem>>, vector<32x128xf32>
      %82 = arith.mulf %72, %81 : vector<32x128xf32>
      %83 = arith.mulf %66, %74 : vector<32x128xf32>
      %84 = arith.addf %82, %83 : vector<32x128xf32>
      %c0_65 = arith.constant 0 : index
      %c0_66 = arith.constant 0 : index
      %85 = vector.load %arg19[%c0_65, %c0_66] : memref<32x128xf32, #tpu.memory_space<vmem>>, vector<32x128xf32>
      tpu.vector_store %arg19[%c0_65, %c0_66], %84 {strides = array<i32>} : memref<32x128xf32, #tpu.memory_space<vmem>>, vector<32x128xf32>,
      %86 = math.tanh %84 : vector<32x128xf32>
      %87 = arith.mulf %80, %86 : vector<32x128xf32>
      %c0_67 = arith.constant 0 : index
      %c0_68 = arith.constant 0 : index
      %88 = vector.load %arg18[%c0_67, %c0_68] : memref<32x128xf32, #tpu.memory_space<vmem>>, vector<32x128xf32>
      tpu.vector_store %arg18[%c0_67, %c0_68], %87 {strides = array<i32>} : memref<32x128xf32, #tpu.memory_space<vmem>>, vector<32x128xf32>,
    } else {
    }
    return
  }
  func.func @transform_0(%arg0: i32) -> (i32, i32, i32) {
    %c0_i32 = arith.constant 0 : i32
    %c0_i32_0 = arith.constant 0 : i32
    %c0_i32_1 = arith.constant 0 : i32
    return %arg0, %c0_i32, %c0_i32_0 : i32, i32, i32
  }
  func.func @transform_1(%arg0: i32) -> (i32, i32, i32) {
    %c0_i32 = arith.constant 0 : i32
    %c0_i32_0 = arith.constant 0 : i32
    %c0_i32_1 = arith.constant 0 : i32
    return %arg0, %c0_i32, %c0_i32_0 : i32, i32, i32
  }
  func.func @transform_2(%arg0: i32) -> (i32, i32, i32) {
    %c0_i32 = arith.constant 0 : i32
    %c0_i32_0 = arith.constant 0 : i32
    %c0_i32_1 = arith.constant 0 : i32
    return %arg0, %c0_i32, %c0_i32_0 : i32, i32, i32
  }
  func.func @transform_3(%arg0: i32) -> (i32, i32, i32) {
    %c0_i32 = arith.constant 0 : i32
    %c0_i32_0 = arith.constant 0 : i32
    %c0_i32_1 = arith.constant 0 : i32
    return %arg0, %c0_i32, %c0_i32_0 : i32, i32, i32
  }
  func.func @transform_4(%arg0: i32) -> (i32, i32, i32) {
    %c0_i32 = arith.constant 0 : i32
    %c0_i32_0 = arith.constant 0 : i32
    %c0_i32_1 = arith.constant 0 : i32
    return %arg0, %c0_i32, %c0_i32_0 : i32, i32, i32
  }
  func.func @transform_5(%arg0: i32) -> (i32, i32, i32) {
    %c0_i32 = arith.constant 0 : i32
    %c0_i32_0 = arith.constant 0 : i32
    %c0_i32_1 = arith.constant 0 : i32
    return %arg0, %c0_i32, %c0_i32_0 : i32, i32, i32
  }
  func.func @transform_6(%arg0: i32) -> (i32, i32, i32) {
    %c0_i32 = arith.constant 0 : i32
    %c0_i32_0 = arith.constant 0 : i32
    %c0_i32_1 = arith.constant 0 : i32
    return %arg0, %c0_i32, %c0_i32_0 : i32, i32, i32
  }
  func.func @transform_7(%arg0: i32) -> (i32, i32, i32) {
    %c0_i32 = arith.constant 0 : i32
    %c0_i32_0 = arith.constant 0 : i32
    %c0_i32_1 = arith.constant 0 : i32
    return %arg0, %c0_i32, %c0_i32_0 : i32, i32, i32
  }
  func.func @transform_8(%arg0: i32) -> (i32, i32, i32) {
    %c0_i32 = arith.constant 0 : i32
    %c0_i32_0 = arith.constant 0 : i32
    %c0_i32_1 = arith.constant 0 : i32
    return %arg0, %c0_i32, %c0_i32_0 : i32, i32, i32
  }
  func.func @transform_9(%arg0: i32) -> (i32, i32, i32) {
    %c0_i32 = arith.constant 0 : i32
    %c0_i32_0 = arith.constant 0 : i32
    %c0_i32_1 = arith.constant 0 : i32
    return %arg0, %c0_i32, %c0_i32_0 : i32, i32, i32
  }
  func.func @transform_10(%arg0: i32) -> (i32, i32, i32) {
    %c0_i32 = arith.constant 0 : i32
    %c0_i32_0 = arith.constant 0 : i32
    %c0_i32_1 = arith.constant 0 : i32
    return %arg0, %c0_i32, %c0_i32_0 : i32, i32, i32
  }
  func.func @transform_11(%arg0: i32) -> (i32, i32, i32) {
    %c0_i32 = arith.constant 0 : i32
    %c0_i32_0 = arith.constant 0 : i32
    %c0_i32_1 = arith.constant 0 : i32
    return %arg0, %c0_i32, %c0_i32_0 : i32, i32, i32
  }
  func.func @transform_12(%arg0: i32) -> (i32, i32, i32) {
    %c0_i32 = arith.constant 0 : i32
    %c0_i32_0 = arith.constant 0 : i32
    %c0_i32_1 = arith.constant 0 : i32
    return %arg0, %c0_i32, %c0_i32_0 : i32, i32, i32
  }
  func.func @transform_13(%arg0: i32) -> (i32, i32) {
    %c0_i32 = arith.constant 0 : i32
    %c0_i32_0 = arith.constant 0 : i32
    %c0_i32_1 = arith.constant 0 : i32
    return %c0_i32, %c0_i32_0 : i32, i32
  }
  func.func @transform_14(%arg0: i32) -> (i32, i32) {
    %c0_i32 = arith.constant 0 : i32
    %c0_i32_0 = arith.constant 0 : i32
    %c0_i32_1 = arith.constant 0 : i32
    return %c0_i32, %c0_i32_0 : i32, i32
  }
  func.func @transform_15(%arg0: i32) -> (i32, i32) {
    %c0_i32 = arith.constant 0 : i32
    %c0_i32_0 = arith.constant 0 : i32
    %c0_i32_1 = arith.constant 0 : i32
    return %c0_i32, %c0_i32_0 : i32, i32
  }
  func.func @transform_16(%arg0: i32) -> (i32, i32) {
    %c0_i32 = arith.constant 0 : i32
    %c0_i32_0 = arith.constant 0 : i32
    %c0_i32_1 = arith.constant 0 : i32
    return %c0_i32, %c0_i32_0 : i32, i32
  }
  func.func @transform_17(%arg0: i32) -> (i32, i32) {
    %c0_i32 = arith.constant 0 : i32
    %c0_i32_0 = arith.constant 0 : i32
    %c0_i32_1 = arith.constant 0 : i32
    return %c0_i32, %c0_i32_0 : i32, i32
  }
  func.func @transform_18(%arg0: i32) -> (i32, i32) {
    %c0_i32 = arith.constant 0 : i32
    %c0_i32_0 = arith.constant 0 : i32
    %c0_i32_1 = arith.constant 0 : i32
    return %c0_i32, %c0_i32_0 : i32, i32
  }
}

module attributes {stable_mosaic.version = 11 : i64} {
  func.func @_logits_kernel(%arg0: i32, %arg1: memref<1x48x128xf32, #tpu.memory_space<vmem>>, %arg2: memref<1x128x128xf32, #tpu.memory_space<vmem>>, %arg3: memref<1x48x128xf32, #tpu.memory_space<vmem>>) attributes {dimension_semantics = [#tpu.dimension_semantics<parallel>], iteration_bounds = array<i64: 2>, scalar_prefetch = 0 : i64, scratch_operands = 0 : i64, tpu.core_type = #tpu.core_type<tc>, window_params = [{transform_indices = @transform_0, window_bounds = array<i64: 1, 48, 128>}, {transform_indices = @transform_1, window_bounds = array<i64: 1, 128, 128>}, {transform_indices = @transform_2, window_bounds = array<i64: 1, 48, 128>}]} {
    %c0 = arith.constant 0 : index
    %c0_0 = arith.constant 0 : index
    %c0_1 = arith.constant 0 : index
    %0 = vector.load %arg1[%c0, %c0_0, %c0_1] : memref<1x48x128xf32, #tpu.memory_space<vmem>>, vector<1x48x128xf32>
    %1 = vector.shape_cast %0 : vector<1x48x128xf32> to vector<48x128xf32>
    %c0_2 = arith.constant 0 : index
    %c0_3 = arith.constant 0 : index
    %c0_4 = arith.constant 0 : index
    %2 = vector.load %arg2[%c0_2, %c0_3, %c0_4] : memref<1x128x128xf32, #tpu.memory_space<vmem>>, vector<1x128x128xf32>
    %3 = vector.shape_cast %2 : vector<1x128x128xf32> to vector<128x128xf32>
    %cst = arith.constant dense<0.000000e+00> : vector<48x128xf32>
    %4 = tpu.matmul %1, %3, %cst {dimension_numbers = #tpu.dot_dimension_numbers<[1], [1], [0], [0], [0, 0, 1, 0], [], []>} : vector<48x128xf32>, vector<128x128xf32>, vector<48x128xf32> -> vector<48x128xf32>
    %c0_5 = arith.constant 0 : index
    %c0_6 = arith.constant 0 : index
    %c0_7 = arith.constant 0 : index
    %5 = vector.load %arg3[%c0_5, %c0_6, %c0_7] : memref<1x48x128xf32, #tpu.memory_space<vmem>>, vector<1x48x128xf32>
    %6 = vector.shape_cast %5 : vector<1x48x128xf32> to vector<48x128xf32>
    %7 = vector.shape_cast %4 : vector<48x128xf32> to vector<1x48x128xf32>
    tpu.vector_store %arg3[%c0_5, %c0_6, %c0_7], %7 {strides = array<i32>} : memref<1x48x128xf32, #tpu.memory_space<vmem>>, vector<1x48x128xf32>,
    return
  }
  func.func @transform_0(%arg0: i32) -> (i32, i32, i32) {
    %c0_i32 = arith.constant 0 : i32
    %c0_i32_0 = arith.constant 0 : i32
    %c0_i32_1 = arith.constant 0 : i32
    return %arg0, %c0_i32, %c0_i32_0 : i32, i32, i32
  }
  func.func @transform_1(%arg0: i32) -> (i32, i32, i32) {
    %c0_i32 = arith.constant 0 : i32
    %c0_i32_0 = arith.constant 0 : i32
    %c0_i32_1 = arith.constant 0 : i32
    return %arg0, %c0_i32, %c0_i32_0 : i32, i32, i32
  }
  func.func @transform_2(%arg0: i32) -> (i32, i32, i32) {
    %c0_i32 = arith.constant 0 : i32
    %c0_i32_0 = arith.constant 0 : i32
    %c0_i32_1 = arith.constant 0 : i32
    return %arg0, %c0_i32, %c0_i32_0 : i32, i32, i32
  }
}

</mosaic_0001>

<llo_original>
// kernel: futoshiki_forward.7
$region0: #{futoshiki_forward.7}
  #allocation0 [shape = 'u32[]', space=smem, size = 0x4, offset = 0x4, fixed_abs, tag = 'smem constant byte address 0x4 - core index']
  #allocation1 [shape = 'u32[72,128]{1,0:T(1,128)}', space=vmem, size = 0x9000, scoped, tag = 'internal scratch']
  %s0 = inlined_call_operand.vmem [shape: f32[2,48,128], index: 0, kind: input, shape index: {}]
  %s1 = inlined_call_operand.vmem [shape: f32[2,128,128], index: 1, kind: input, shape index: {}]
  %s2 = inlined_call_operand.vmem [shape: f32[2,48,128], index: 2, kind: output, shape index: {}]
  %s3 = sld [smem:[#allocation0]]
  $region41: #{futoshiki_forward.7} parent=0
    _
  %s5 = ssub.s32 1, %s3
  %s6 = scalar_select 0, %s5, %s3
  loop: start=0, step=1, limit=4
  $region2: #{futoshiki_forward.7} parent=0 // loop_pre_header
    _
  $region3: #{futoshiki_forward.7} parent=0 // loop_header
    %s8 = sphi 0, %s12
    %p9 = scmp.ge.s32.totalorder %s8, 4
    %s18 = sphi 0, %s20
    %s21 = sphi 0, %s18
    %s22 = sphi 0, %s21
    %s38 = sphi 0, %s22
    %s44 = sphi 0, %s46
    %s47 = sphi 0, %s44
    %s48 = sphi 0, %s47
    %s64 = sphi 0, %s48
    %s70 = sphi 0, %s72
    %s73 = sphi 0, %s70
    %s74 = sphi 0, %s73
    %s90 = sphi 0, %s74
  $region4: #{futoshiki_forward.7} parent=0 // loop_header_branch
    %11 = sbr.rel (%p9) target = $region8
  $region5: #{futoshiki_forward.7} parent=0 // loop_body
    %s13 = ssub.s32 %s8, 1
    %s14 = ssub.s32 %s8, 2
    %s15 = sadd.s32 %s8, 1
    %s16 = ssub.s32 %s8, %s15
    %p17 = scmp.eq.s32.totalorder %s16, 0
    %s19 = sadd.s32 %s18, 1
    %s20 = scalar_select %p17, %s18, %s19
    %p23 = pneg %p17
    %p24 = scmp.eq.s32.totalorder %s8, 1
    %p25 = por %p23, %p24
    %p26 = scmp.ne.s32.totalorder %s18, %s21
    %p27 = scmp.eq.s32.totalorder %s8, 0
    %p28 = por %p26, %p27
    %p29 = scmp.ne.s32.totalorder %s18, %s21
    %p30 = scmp.eq.s32.totalorder %s13, 1
    %p31 = por %p29, %p30
    %p32 = scmp.ne.s32.totalorder %s21, %s22
    %p33 = scmp.eq.s32.totalorder %s13, 0
    %p34 = por %p32, %p33
    %p35 = scmp.ne.s32.totalorder %s21, %s22
    %p36 = scmp.eq.s32.totalorder %s14, 1
    %p37 = por %p35, %p36
    %p39 = scmp.ne.s32.totalorder %s22, %s38
    %p40 = scmp.eq.s32.totalorder %s14, 0
    %p41 = por %p39, %p40
    %s42 = ssub.s32 %s8, %s15
    %p43 = scmp.eq.s32.totalorder %s42, 0
    %s45 = sadd.s32 %s44, 1
    %s46 = scalar_select %p43, %s44, %s45
    %p49 = pneg %p43
    %p50 = scmp.eq.s32.totalorder %s8, 1
    %p51 = por %p49, %p50
    %p52 = scmp.ne.s32.totalorder %s44, %s47
    %p53 = scmp.eq.s32.totalorder %s8, 0
    %p54 = por %p52, %p53
    %p55 = scmp.ne.s32.totalorder %s44, %s47
    %p56 = scmp.eq.s32.totalorder %s13, 1
    %p57 = por %p55, %p56
    %p58 = scmp.ne.s32.totalorder %s47, %s48
    %p59 = scmp.eq.s32.totalorder %s13, 0
    %p60 = por %p58, %p59
    %p61 = scmp.ne.s32.totalorder %s47, %s48
    %p62 = scmp.eq.s32.totalorder %s14, 1
    %p63 = por %p61, %p62
    %p65 = scmp.ne.s32.totalorder %s48, %s64
    %p66 = scmp.eq.s32.totalorder %s14, 0
    %p67 = por %p65, %p66
    %s68 = ssub.s32 %s8, %s15
    %p69 = scmp.eq.s32.totalorder %s68, 0
    %s71 = sadd.s32 %s70, 1
    %s72 = scalar_select %p69, %s70, %s71
    %p75 = pneg %p69
    %p76 = scmp.eq.s32.totalorder %s8, 1
    %p77 = por %p75, %p76
    %p78 = scmp.ne.s32.totalorder %s70, %s73
    %p79 = scmp.eq.s32.totalorder %s8, 0
    %p80 = por %p78, %p79
    %p81 = scmp.ne.s32.totalorder %s70, %s73
    %p82 = scmp.eq.s32.totalorder %s13, 1
    %p83 = por %p81, %p82
    %p84 = scmp.ne.s32.totalorder %s73, %s74
    %p85 = scmp.eq.s32.totalorder %s13, 0
    %p86 = por %p84, %p85
    %p87 = scmp.ne.s32.totalorder %s73, %s74
    %p88 = scmp.eq.s32.totalorder %s14, 1
    %p89 = por %p87, %p88
    %p91 = scmp.ne.s32.totalorder %s74, %s90
    %p92 = scmp.eq.s32.totalorder %s14, 0
    %p93 = por %p91, %p92
    %p94 = scmp.le.s32.totalorder 1, %s8
    %p95 = scmp.lt.s32.totalorder %s8, 3
    %p96 = pnand %p94, %p95
    %p97 = pneg %p96
    // Predicated region
    $region9: #{futoshiki_forward.7} parent=5 // pred_check
      _
    $region10: #{futoshiki_forward.7} parent=5 // pred_check_branch
      %99 = sbr.rel (%p96) target = $region12
    $region11: #{futoshiki_forward.7} parent=5 // pred_region
      %s100 = ssub.s32 %s8, 1
    $region12: #{futoshiki_forward.7} parent=5 // pred_fallthru
      _
    %p101 = scmp.lt.s32.totalorder %s8, 2
    // Predicated region
    $region13: #{futoshiki_forward.7} parent=5 // pred_check
      %p102 = pneg %p101
    $region14: #{futoshiki_forward.7} parent=5 // pred_check_branch
      %104 = sbr.rel (%p102) target = $region16
    $region15: #{futoshiki_forward.7} parent=5 // pred_region
      // Predicated region
      $region17: #{futoshiki_forward.7} parent=15 // pred_check
        %p105 = pneg %p28
      $region18: #{futoshiki_forward.7} parent=15 // pred_check_branch
        %107 = sbr.rel (%p105) target = $region20
      $region19: #{futoshiki_forward.7} parent=15 // pred_region
        %p108 = scmp.lt.s32.totalorder %s8, 1
        %s109 = scalar_select %p108, %s8, 1
        %s110 = smul.addr %s109, 6
        %s111 = smul.addr %s110, 8
        %s112 = scalar_lea.vmem %s0, %s111
      $region20: #{futoshiki_forward.7} parent=15 // pred_fallthru
        _
      // Predicated region
      $region21: #{futoshiki_forward.7} parent=15 // pred_check
        %p113 = pneg %p54
      $region22: #{futoshiki_forward.7} parent=15 // pred_check_branch
        %115 = sbr.rel (%p113) target = $region24
      $region23: #{futoshiki_forward.7} parent=15 // pred_region
        %p116 = scmp.lt.s32.totalorder %s8, 1
        %s117 = scalar_select %p116, %s8, 1
        %s118 = smul.addr %s117, 16
        %s119 = smul.addr %s118, 8
        %s120 = scalar_lea.vmem %s1, %s119
      $region24: #{futoshiki_forward.7} parent=15 // pred_fallthru
        _
    $region16: #{futoshiki_forward.7} parent=5 // pred_fallthru
      _
    %p121 = scmp.le.s32.totalorder 1, %s8
    %p122 = scmp.lt.s32.totalorder %s8, 3
    %p123 = pnand %p121, %p122
    %p124 = pneg %p123
    // Predicated region
    $region25: #{futoshiki_forward.7} parent=5 // pred_check
      _
    $region26: #{futoshiki_forward.7} parent=5 // pred_check_branch
      %126 = sbr.rel (%p123) target = $region28
    $region27: #{futoshiki_forward.7} parent=5 // pred_region
      %s127 = ssub.s32 %s8, 1
      %p128 = scmp.lt.s32.totalorder %s13, 1
      %s129 = scalar_select %p128, %s13, 1
      %s130 = smul.addr %s129, 6
      %s131 = smul.addr %s130, 8
      %s132 = scalar_lea.vmem %s0, %s131
      %p133 = pneg %p34
      %p134 = pneg %p31
      %p135 = scmp.lt.s32.totalorder %s13, 1
      %s136 = scalar_select %p135, %s13, 1
      %s137 = smul.addr %s136, 16
      %s138 = smul.addr %s137, 8
      %s139 = scalar_lea.vmem %s1, %s138
      %p140 = pneg %p60
      %p141 = pneg %p57
      %p142 = pneg %p86
      %p143 = pneg %p83
      %p144 = scmp.lt.s32.totalorder %s13, 1
      %s145 = scalar_select %p144, %s13, 1
      %s146 = smul.addr %s145, 6
      %s147 = smul.addr %s146, 8
      %s148 = scalar_lea.vmem %s2, %s147
      %p149 = scmp.lt.s32.totalorder %s13, 1
      %s150 = scalar_select %p149, %s13, 1
      %s151 = smul.addr %s150, 6
      %s152 = smul.addr %s151, 8
      %s153 = scalar_lea.vmem %s0, %s152
      %p154 = scmp.lt.s32.totalorder %s13, 1
      %s155 = scalar_select %p154, %s13, 1
      %s156 = smul.addr %s155, 16
      %s157 = smul.addr %s156, 8
      %s158 = scalar_lea.vmem %s1, %s157
      %p159 = scmp.lt.s32.totalorder %s13, 1
      %s160 = scalar_select %p159, %s13, 1
      %s161 = smul.addr %s160, 6
      %s162 = smul.addr %s161, 8
      %s163 = scalar_lea.vmem %s2, %s162
      %v164 = vld [vmem:[%s153] sm:$0xff]
      %v165 = vld [vmem:[%s153 + $0x8] sm:$0xff]
      %v166 = vld [vmem:[%s153 + $0x10] sm:$0xff]
      %v167 = vld [vmem:[%s153 + $0x18] sm:$0xff]
      %v168 = vld [vmem:[%s153 + $0x20] sm:$0xff]
      %v169 = vld [vmem:[%s153 + $0x28] sm:$0xff]
      %v170 = vld [vmem:[%s158] sm:$0xff]
      %v171 = vld [vmem:[%s158 + $0x8] sm:$0xff]
      %v172 = vld [vmem:[%s158 + $0x10] sm:$0xff]
      %v173 = vld [vmem:[%s158 + $0x18] sm:$0xff]
      %v174 = vld [vmem:[%s158 + $0x20] sm:$0xff]
      %v175 = vld [vmem:[%s158 + $0x28] sm:$0xff]
      %v176 = vld [vmem:[%s158 + $0x30] sm:$0xff]
      %v177 = vld [vmem:[%s158 + $0x38] sm:$0xff]
      %v178 = vld [vmem:[%s158 + $0x40] sm:$0xff]
      %v179 = vld [vmem:[%s158 + $0x48] sm:$0xff]
      %v180 = vld [vmem:[%s158 + $0x50] sm:$0xff]
      %v181 = vld [vmem:[%s158 + $0x58] sm:$0xff]
      %v182 = vld [vmem:[%s158 + $0x60] sm:$0xff]
      %v183 = vld [vmem:[%s158 + $0x68] sm:$0xff]
      %v184 = vld [vmem:[%s158 + $0x70] sm:$0xff]
      %v185 = vld [vmem:[%s158 + $0x78] sm:$0xff]
      %186 = vmatpush.xpose.msra.mxu0 %v185
      %187 = vmatpush.xpose.msra.mxu0 %v184
      %188 = vmatpush.xpose.msra.mxu0 %v183
      %189 = vmatpush.xpose.msra.mxu0 %v182
      %190 = vmatpush.xpose.msra.mxu0 %v181
      %191 = vmatpush.xpose.msra.mxu0 %v180
      %192 = vmatpush.xpose.msra.mxu0 %v179
      %193 = vmatpush.xpose.msra.mxu0 %v178
      %194 = vmatpush.xpose.msra.mxu0 %v177
      %195 = vmatpush.xpose.msra.mxu0 %v176
      %196 = vmatpush.xpose.msra.mxu0 %v175
      %197 = vmatpush.xpose.msra.mxu0 %v174
      %198 = vmatpush.xpose.msra.mxu0 %v173
      %199 = vmatpush.xpose.msra.mxu0 %v172
      %200 = vmatpush.xpose.msra.mxu0 %v171
      %201 = vmatpush.xpose.msra.mxu0 %v170
      %202 = vmatmul.f32.gmra.mxu0 %v164
      %v203 = vpop.f32.mrf.mxu0
      %v204 = vadd.f32 0.0, %v203
      %205 = vmatmul.f32.gmra.mxu0 %v165
      %v206 = vpop.f32.mrf.mxu0
      %v207 = vadd.f32 0.0, %v206
      %208 = vmatmul.f32.gmra.mxu0 %v166
      %v209 = vpop.f32.mrf.mxu0
      %v210 = vadd.f32 0.0, %v209
      %211 = vmatmul.f32.gmra.mxu0 %v167
      %v212 = vpop.f32.mrf.mxu0
      %v213 = vadd.f32 0.0, %v212
      %214 = vmatmul.f32.gmra.mxu0 %v168
      %v215 = vpop.f32.mrf.mxu0
      %v216 = vadd.f32 0.0, %v215
      %217 = vmatmul.f32.gmra.mxu0 %v169
      %v218 = vpop.f32.mrf.mxu0
      %v219 = vadd.f32 0.0, %v218
      %220 = vdwg.mxu0
      %221 = vst [vmem:[%s163] sm:$0xff] %v204
      %222 = vst [vmem:[%s163 + $0x8] sm:$0xff] %v207
      %223 = vst [vmem:[%s163 + $0x10] sm:$0xff] %v210
      %224 = vst [vmem:[%s163 + $0x18] sm:$0xff] %v213
      %225 = vst [vmem:[%s163 + $0x20] sm:$0xff] %v216
      %226 = vst [vmem:[%s163 + $0x28] sm:$0xff] %v219
      %p227 = scmp.lt.s32.totalorder %s13, 1
      %s228 = scalar_select %p227, %s13, 1
      %s229 = smul.addr %s228, 6
      %s230 = smul.addr %s229, 8
      %s231 = scalar_lea.vmem %s2, %s230
      // Predicated region
      $region29: #{futoshiki_forward.7} parent=27 // pred_check
        %p232 = pneg %p83
      $region30: #{futoshiki_forward.7} parent=27 // pred_check_branch
        %234 = sbr.rel (%p232) target = $region32
      $region31: #{futoshiki_forward.7} parent=27 // pred_region
        _
      $region32: #{futoshiki_forward.7} parent=27 // pred_fallthru
        _
    $region28: #{futoshiki_forward.7} parent=5 // pred_fallthru
      _
    %p235 = scmp.le.s32.totalorder 2, %s8
    // Predicated region
    $region33: #{futoshiki_forward.7} parent=5 // pred_check
      %p236 = pneg %p235
    $region34: #{futoshiki_forward.7} parent=5 // pred_check_branch
      %238 = sbr.rel (%p236) target = $region36
    $region35: #{futoshiki_forward.7} parent=5 // pred_region
      %s239 = ssub.s32 %s8, 2
      // Predicated region
      $region37: #{futoshiki_forward.7} parent=35 // pred_check
        %p240 = pneg %p89
      $region38: #{futoshiki_forward.7} parent=35 // pred_check_branch
        %242 = sbr.rel (%p240) target = $region40
      $region39: #{futoshiki_forward.7} parent=35 // pred_region
        %p243 = scmp.lt.s32.totalorder %s14, 1
        %s244 = scalar_select %p243, %s14, 1
        %s245 = smul.addr %s244, 6
        %s246 = smul.addr %s245, 8
        %s247 = scalar_lea.vmem %s2, %s246
      $region40: #{futoshiki_forward.7} parent=35 // pred_fallthru
        _
    $region36: #{futoshiki_forward.7} parent=5 // pred_fallthru
      _
  $region6: #{futoshiki_forward.7} parent=0 // loop_footer
    %s12 = sadd.s32 1, %s8
  $region7: #{futoshiki_forward.7} parent=0 // loop_footer_branch
    %7 = sbr.rel target = $region3
  $region8: #{futoshiki_forward.7} parent=0 // loop_exit
    _

// kernel: futoshiki_forward.4
$region0: #{futoshiki_forward.4}
  #allocation0 [shape = 'u32[]', space=smem, size = 0x4, offset = 0x4, fixed_abs, tag = 'smem constant byte address 0x4 - core index']
  #allocation1 [shape = 'u32[72,128]{1,0:T(1,128)}', space=vmem, size = 0x9000, scoped, tag = 'internal scratch']
  #allocation2 [shape = 'f32[32,512]{1,0:T(8,128)}', space=vmem, size = 0x10000, scoped, tag = 'scratch operand']
  %s0 = inlined_call_operand.vmem [shape: f32[5,192,128], index: 0, kind: input, shape index: {}]
  %s1 = inlined_call_operand.vmem [shape: f32[5,192,128], index: 1, kind: input, shape index: {}]
  %s2 = inlined_call_operand.vmem [shape: f32[5,32,192], index: 2, kind: input, shape index: {}]
  %s3 = inlined_call_operand.vmem [shape: f32[5,128,128], index: 3, kind: input, shape index: {}]
  %s4 = inlined_call_operand.vmem [shape: f32[5,128,128], index: 4, kind: input, shape index: {}]
  %s5 = inlined_call_operand.vmem [shape: f32[5,1,128], index: 5, kind: input, shape index: {}]
  %s6 = inlined_call_operand.vmem [shape: f32[5,128,128], index: 6, kind: input, shape index: {}]
  %s7 = inlined_call_operand.vmem [shape: f32[5,1,128], index: 7, kind: input, shape index: {}]
  %s8 = inlined_call_operand.vmem [shape: f32[5,128,128], index: 8, kind: input, shape index: {}]
  %s9 = inlined_call_operand.vmem [shape: f32[5,1,128], index: 9, kind: input, shape index: {}]
  %s10 = inlined_call_operand.vmem [shape: f32[5,128,128], index: 10, kind: input, shape index: {}]
  %s11 = inlined_call_operand.vmem [shape: f32[5,1,128], index: 11, kind: input, shape index: {}]
  %s12 = inlined_call_operand.vmem [shape: f32[5,128,512], index: 12, kind: input, shape index: {}]
  %s13 = inlined_call_operand.vmem [shape: f32[32,512], index: 13, kind: input, shape index: {}]
  %s14 = inlined_call_operand.vmem [shape: f32[32,128], index: 14, kind: input, shape index: {}, may-alias: {14,15}]
  %s15 = inlined_call_operand.vmem [shape: f32[32,128], index: 15, kind: input, shape index: {}, may-alias: {14,15}]
  %s16 = inlined_call_operand.vmem [shape: f32[128,512], index: 16, kind: input, shape index: {}]
  %s17 = inlined_call_operand.vmem [shape: f32[32,128], index: 17, kind: output, shape index: {0}]
  %s18 = inlined_call_operand.vmem [shape: f32[32,128], index: 18, kind: output, shape index: {1}]
  %19 = xla_tuple %s17, %s18
  %s20 = sld [smem:[#allocation0]]
  $region117: #{futoshiki_forward.4} parent=0
    _
  %s22 = ssub.s32 1, %s20
  %s23 = scalar_select 0, %s22, %s20
  loop: start=0, step=1, limit=7
  $region2: #{futoshiki_forward.4} parent=0 // loop_pre_header
    _
  $region3: #{futoshiki_forward.4} parent=0 // loop_header
    %s25 = sphi 0, %s29
    %p26 = scmp.ge.s32.totalorder %s25, 7
    %s35 = sphi 0, %s37
    %s38 = sphi 0, %s35
    %s39 = sphi 0, %s38
    %s55 = sphi 0, %s39
    %s61 = sphi 0, %s63
    %s64 = sphi 0, %s61
    %s65 = sphi 0, %s64
    %s81 = sphi 0, %s65
    %s87 = sphi 0, %s89
    %s90 = sphi 0, %s87
    %s91 = sphi 0, %s90
    %s107 = sphi 0, %s91
    %s113 = sphi 0, %s115
    %s116 = sphi 0, %s113
    %s117 = sphi 0, %s116
    %s133 = sphi 0, %s117
    %s139 = sphi 0, %s141
    %s142 = sphi 0, %s139
    %s143 = sphi 0, %s142
    %s159 = sphi 0, %s143
    %s165 = sphi 0, %s167
    %s168 = sphi 0, %s165
    %s169 = sphi 0, %s168
    %s185 = sphi 0, %s169
    %s191 = sphi 0, %s193
    %s194 = sphi 0, %s191
    %s195 = sphi 0, %s194
    %s211 = sphi 0, %s195
    %s217 = sphi 0, %s219
    %s220 = sphi 0, %s217
    %s221 = sphi 0, %s220
    %s237 = sphi 0, %s221
    %s243 = sphi 0, %s245
    %s246 = sphi 0, %s243
    %s247 = sphi 0, %s246
    %s263 = sphi 0, %s247
    %s269 = sphi 0, %s271
    %s272 = sphi 0, %s269
    %s273 = sphi 0, %s272
    %s289 = sphi 0, %s273
    %s295 = sphi 0, %s297
    %s298 = sphi 0, %s295
    %s299 = sphi 0, %s298
    %s315 = sphi 0, %s299
    %s321 = sphi 0, %s323
    %s324 = sphi 0, %s321
    %s325 = sphi 0, %s324
    %s341 = sphi 0, %s325
    %s347 = sphi 0, %s349
    %s350 = sphi 0, %s347
    %s351 = sphi 0, %s350
    %s367 = sphi 0, %s351
    %s371 = sphi 0, %s371
    %s373 = sphi 0, %s371
    %s374 = sphi 0, %s373
    %s388 = sphi 0, %s374
    %s392 = sphi 0, %s392
    %s394 = sphi 0, %s392
    %s395 = sphi 0, %s394
    %s409 = sphi 0, %s395
    %s413 = sphi 0, %s413
    %s415 = sphi 0, %s413
    %s416 = sphi 0, %s415
    %s430 = sphi 0, %s416
    %s434 = sphi 0, %s434
    %s436 = sphi 0, %s434
    %s437 = sphi 0, %s436
    %s451 = sphi 0, %s437
    %s455 = sphi 0, %s455
    %s457 = sphi 0, %s455
    %s458 = sphi 0, %s457
    %s472 = sphi 0, %s458
    %s476 = sphi 0, %s476
    %s478 = sphi 0, %s476
    %s479 = sphi 0, %s478
    %s493 = sphi 0, %s479
  $region4: #{futoshiki_forward.4} parent=0 // loop_header_branch
    %28 = sbr.rel (%p26) target = $region8
  $region5: #{futoshiki_forward.4} parent=0 // loop_body
    %s30 = ssub.s32 %s25, 1
    %s31 = ssub.s32 %s25, 2
    %s32 = sadd.s32 %s25, 1
    %s33 = ssub.s32 %s25, %s32
    %p34 = scmp.eq.s32.totalorder %s33, 0
    %s36 = sadd.s32 %s35, 1
    %s37 = scalar_select %p34, %s35, %s36
    %p40 = pneg %p34
    %p41 = scmp.eq.s32.totalorder %s25, 4
    %p42 = por %p40, %p41
    %p43 = scmp.ne.s32.totalorder %s35, %s38
    %p44 = scmp.eq.s32.totalorder %s25, 0
    %p45 = por %p43, %p44
    %p46 = scmp.ne.s32.totalorder %s35, %s38
    %p47 = scmp.eq.s32.totalorder %s30, 4
    %p48 = por %p46, %p47
    %p49 = scmp.ne.s32.totalorder %s38, %s39
    %p50 = scmp.eq.s32.totalorder %s30, 0
    %p51 = por %p49, %p50
    %p52 = scmp.ne.s32.totalorder %s38, %s39
    %p53 = scmp.eq.s32.totalorder %s31, 4
    %p54 = por %p52, %p53
    %p56 = scmp.ne.s32.totalorder %s39, %s55
    %p57 = scmp.eq.s32.totalorder %s31, 0
    %p58 = por %p56, %p57
    %s59 = ssub.s32 %s25, %s32
    %p60 = scmp.eq.s32.totalorder %s59, 0
    %s62 = sadd.s32 %s61, 1
    %s63 = scalar_select %p60, %s61, %s62
    %p66 = pneg %p60
    %p67 = scmp.eq.s32.totalorder %s25, 4
    %p68 = por %p66, %p67
    %p69 = scmp.ne.s32.totalorder %s61, %s64
    %p70 = scmp.eq.s32.totalorder %s25, 0
    %p71 = por %p69, %p70
    %p72 = scmp.ne.s32.totalorder %s61, %s64
    %p73 = scmp.eq.s32.totalorder %s30, 4
    %p74 = por %p72, %p73
    %p75 = scmp.ne.s32.totalorder %s64, %s65
    %p76 = scmp.eq.s32.totalorder %s30, 0
    %p77 = por %p75, %p76
    %p78 = scmp.ne.s32.totalorder %s64, %s65
    %p79 = scmp.eq.s32.totalorder %s31, 4
    %p80 = por %p78, %p79
    %p82 = scmp.ne.s32.totalorder %s65, %s81
    %p83 = scmp.eq.s32.totalorder %s31, 0
    %p84 = por %p82, %p83
    %s85 = ssub.s32 %s25, %s32
    %p86 = scmp.eq.s32.totalorder %s85, 0
    %s88 = sadd.s32 %s87, 1
    %s89 = scalar_select %p86, %s87, %s88
    %p92 = pneg %p86
    %p93 = scmp.eq.s32.totalorder %s25, 4
    %p94 = por %p92, %p93
    %p95 = scmp.ne.s32.totalorder %s87, %s90
    %p96 = scmp.eq.s32.totalorder %s25, 0
    %p97 = por %p95, %p96
    %p98 = scmp.ne.s32.totalorder %s87, %s90
    %p99 = scmp.eq.s32.totalorder %s30, 4
    %p100 = por %p98, %p99
    %p101 = scmp.ne.s32.totalorder %s90, %s91
    %p102 = scmp.eq.s32.totalorder %s30, 0
    %p103 = por %p101, %p102
    %p104 = scmp.ne.s32.totalorder %s90, %s91
    %p105 = scmp.eq.s32.totalorder %s31, 4
    %p106 = por %p104, %p105
    %p108 = scmp.ne.s32.totalorder %s91, %s107
    %p109 = scmp.eq.s32.totalorder %s31, 0
    %p110 = por %p108, %p109
    %s111 = ssub.s32 %s25, %s32
    %p112 = scmp.eq.s32.totalorder %s111, 0
    %s114 = sadd.s32 %s113, 1
    %s115 = scalar_select %p112, %s113, %s114
    %p118 = pneg %p112
    %p119 = scmp.eq.s32.totalorder %s25, 4
    %p120 = por %p118, %p119
    %p121 = scmp.ne.s32.totalorder %s113, %s116
    %p122 = scmp.eq.s32.totalorder %s25, 0
    %p123 = por %p121, %p122
    %p124 = scmp.ne.s32.totalorder %s113, %s116
    %p125 = scmp.eq.s32.totalorder %s30, 4
    %p126 = por %p124, %p125
    %p127 = scmp.ne.s32.totalorder %s116, %s117
    %p128 = scmp.eq.s32.totalorder %s30, 0
    %p129 = por %p127, %p128
    %p130 = scmp.ne.s32.totalorder %s116, %s117
    %p131 = scmp.eq.s32.totalorder %s31, 4
    %p132 = por %p130, %p131
    %p134 = scmp.ne.s32.totalorder %s117, %s133
    %p135 = scmp.eq.s32.totalorder %s31, 0
    %p136 = por %p134, %p135
    %s137 = ssub.s32 %s25, %s32
    %p138 = scmp.eq.s32.totalorder %s137, 0
    %s140 = sadd.s32 %s139, 1
    %s141 = scalar_select %p138, %s139, %s140
    %p144 = pneg %p138
    %p145 = scmp.eq.s32.totalorder %s25, 4
    %p146 = por %p144, %p145
    %p147 = scmp.ne.s32.totalorder %s139, %s142
    %p148 = scmp.eq.s32.totalorder %s25, 0
    %p149 = por %p147, %p148
    %p150 = scmp.ne.s32.totalorder %s139, %s142
    %p151 = scmp.eq.s32.totalorder %s30, 4
    %p152 = por %p150, %p151
    %p153 = scmp.ne.s32.totalorder %s142, %s143
    %p154 = scmp.eq.s32.totalorder %s30, 0
    %p155 = por %p153, %p154
    %p156 = scmp.ne.s32.totalorder %s142, %s143
    %p157 = scmp.eq.s32.totalorder %s31, 4
    %p158 = por %p156, %p157
    %p160 = scmp.ne.s32.totalorder %s143, %s159
    %p161 = scmp.eq.s32.totalorder %s31, 0
    %p162 = por %p160, %p161
    %s163 = ssub.s32 %s25, %s32
    %p164 = scmp.eq.s32.totalorder %s163, 0
    %s166 = sadd.s32 %s165, 1
    %s167 = scalar_select %p164, %s165, %s166
    %p170 = pneg %p164
    %p171 = scmp.eq.s32.totalorder %s25, 4
    %p172 = por %p170, %p171
    %p173 = scmp.ne.s32.totalorder %s165, %s168
    %p174 = scmp.eq.s32.totalorder %s25, 0
    %p175 = por %p173, %p174
    %p176 = scmp.ne.s32.totalorder %s165, %s168
    %p177 = scmp.eq.s32.totalorder %s30, 4
    %p178 = por %p176, %p177
    %p179 = scmp.ne.s32.totalorder %s168, %s169
    %p180 = scmp.eq.s32.totalorder %s30, 0
    %p181 = por %p179, %p180
    %p182 = scmp.ne.s32.totalorder %s168, %s169
    %p183 = scmp.eq.s32.totalorder %s31, 4
    %p184 = por %p182, %p183
    %p186 = scmp.ne.s32.totalorder %s169, %s185
    %p187 = scmp.eq.s32.totalorder %s31, 0
    %p188 = por %p186, %p187
    %s189 = ssub.s32 %s25, %s32
    %p190 = scmp.eq.s32.totalorder %s189, 0
    %s192 = sadd.s32 %s191, 1
    %s193 = scalar_select %p190, %s191, %s192
    %p196 = pneg %p190
    %p197 = scmp.eq.s32.totalorder %s25, 4
    %p198 = por %p196, %p197
    %p199 = scmp.ne.s32.totalorder %s191, %s194
    %p200 = scmp.eq.s32.totalorder %s25, 0
    %p201 = por %p199, %p200
    %p202 = scmp.ne.s32.totalorder %s191, %s194
    %p203 = scmp.eq.s32.totalorder %s30, 4
    %p204 = por %p202, %p203
    %p205 = scmp.ne.s32.totalorder %s194, %s195
    %p206 = scmp.eq.s32.totalorder %s30, 0
    %p207 = por %p205, %p206
    %p208 = scmp.ne.s32.totalorder %s194, %s195
    %p209 = scmp.eq.s32.totalorder %s31, 4
    %p210 = por %p208, %p209
    %p212 = scmp.ne.s32.totalorder %s195, %s211
    %p213 = scmp.eq.s32.totalorder %s31, 0
    %p214 = por %p212, %p213
    %s215 = ssub.s32 %s25, %s32
    %p216 = scmp.eq.s32.totalorder %s215, 0
    %s218 = sadd.s32 %s217, 1
    %s219 = scalar_select %p216, %s217, %s218
    %p222 = pneg %p216
    %p223 = scmp.eq.s32.totalorder %s25, 4
    %p224 = por %p222, %p223
    %p225 = scmp.ne.s32.totalorder %s217, %s220
    %p226 = scmp.eq.s32.totalorder %s25, 0
    %p227 = por %p225, %p226
    %p228 = scmp.ne.s32.totalorder %s217, %s220
    %p229 = scmp.eq.s32.totalorder %s30, 4
    %p230 = por %p228, %p229
    %p231 = scmp.ne.s32.totalorder %s220, %s221
    %p232 = scmp.eq.s32.totalorder %s30, 0
    %p233 = por %p231, %p232
    %p234 = scmp.ne.s32.totalorder %s220, %s221
    %p235 = scmp.eq.s32.totalorder %s31, 4
    %p236 = por %p234, %p235
    %p238 = scmp.ne.s32.totalorder %s221, %s237
    %p239 = scmp.eq.s32.totalorder %s31, 0
    %p240 = por %p238, %p239
    %s241 = ssub.s32 %s25, %s32
    %p242 = scmp.eq.s32.totalorder %s241, 0
    %s244 = sadd.s32 %s243, 1
    %s245 = scalar_select %p242, %s243, %s244
    %p248 = pneg %p242
    %p249 = scmp.eq.s32.totalorder %s25, 4
    %p250 = por %p248, %p249
    %p251 = scmp.ne.s32.totalorder %s243, %s246
    %p252 = scmp.eq.s32.totalorder %s25, 0
    %p253 = por %p251, %p252
    %p254 = scmp.ne.s32.totalorder %s243, %s246
    %p255 = scmp.eq.s32.totalorder %s30, 4
    %p256 = por %p254, %p255
    %p257 = scmp.ne.s32.totalorder %s246, %s247
    %p258 = scmp.eq.s32.totalorder %s30, 0
    %p259 = por %p257, %p258
    %p260 = scmp.ne.s32.totalorder %s246, %s247
    %p261 = scmp.eq.s32.totalorder %s31, 4
    %p262 = por %p260, %p261
    %p264 = scmp.ne.s32.totalorder %s247, %s263
    %p265 = scmp.eq.s32.totalorder %s31, 0
    %p266 = por %p264, %p265
    %s267 = ssub.s32 %s25, %s32
    %p268 = scmp.eq.s32.totalorder %s267, 0
    %s270 = sadd.s32 %s269, 1
    %s271 = scalar_select %p268, %s269, %s270
    %p274 = pneg %p268
    %p275 = scmp.eq.s32.totalorder %s25, 4
    %p276 = por %p274, %p275
    %p277 = scmp.ne.s32.totalorder %s269, %s272
    %p278 = scmp.eq.s32.totalorder %s25, 0
    %p279 = por %p277, %p278
    %p280 = scmp.ne.s32.totalorder %s269, %s272
    %p281 = scmp.eq.s32.totalorder %s30, 4
    %p282 = por %p280, %p281
    %p283 = scmp.ne.s32.totalorder %s272, %s273
    %p284 = scmp.eq.s32.totalorder %s30, 0
    %p285 = por %p283, %p284
    %p286 = scmp.ne.s32.totalorder %s272, %s273
    %p287 = scmp.eq.s32.totalorder %s31, 4
    %p288 = por %p286, %p287
    %p290 = scmp.ne.s32.totalorder %s273, %s289
    %p291 = scmp.eq.s32.totalorder %s31, 0
    %p292 = por %p290, %p291
    %s293 = ssub.s32 %s25, %s32
    %p294 = scmp.eq.s32.totalorder %s293, 0
    %s296 = sadd.s32 %s295, 1
    %s297 = scalar_select %p294, %s295, %s296
    %p300 = pneg %p294
    %p301 = scmp.eq.s32.totalorder %s25, 4
    %p302 = por %p300, %p301
    %p303 = scmp.ne.s32.totalorder %s295, %s298
    %p304 = scmp.eq.s32.totalorder %s25, 0
    %p305 = por %p303, %p304
    %p306 = scmp.ne.s32.totalorder %s295, %s298
    %p307 = scmp.eq.s32.totalorder %s30, 4
    %p308 = por %p306, %p307
    %p309 = scmp.ne.s32.totalorder %s298, %s299
    %p310 = scmp.eq.s32.totalorder %s30, 0
    %p311 = por %p309, %p310
    %p312 = scmp.ne.s32.totalorder %s298, %s299
    %p313 = scmp.eq.s32.totalorder %s31, 4
    %p314 = por %p312, %p313
    %p316 = scmp.ne.s32.totalorder %s299, %s315
    %p317 = scmp.eq.s32.totalorder %s31, 0
    %p318 = por %p316, %p317
    %s319 = ssub.s32 %s25, %s32
    %p320 = scmp.eq.s32.totalorder %s319, 0
    %s322 = sadd.s32 %s321, 1
    %s323 = scalar_select %p320, %s321, %s322
    %p326 = pneg %p320
    %p327 = scmp.eq.s32.totalorder %s25, 4
    %p328 = por %p326, %p327
    %p329 = scmp.ne.s32.totalorder %s321, %s324
    %p330 = scmp.eq.s32.totalorder %s25, 0
    %p331 = por %p329, %p330
    %p332 = scmp.ne.s32.totalorder %s321, %s324
    %p333 = scmp.eq.s32.totalorder %s30, 4
    %p334 = por %p332, %p333
    %p335 = scmp.ne.s32.totalorder %s324, %s325
    %p336 = scmp.eq.s32.totalorder %s30, 0
    %p337 = por %p335, %p336
    %p338 = scmp.ne.s32.totalorder %s324, %s325
    %p339 = scmp.eq.s32.totalorder %s31, 4
    %p340 = por %p338, %p339
    %p342 = scmp.ne.s32.totalorder %s325, %s341
    %p343 = scmp.eq.s32.totalorder %s31, 0
    %p344 = por %p342, %p343
    %s345 = ssub.s32 %s25, %s32
    %p346 = scmp.eq.s32.totalorder %s345, 0
    %s348 = sadd.s32 %s347, 1
    %s349 = scalar_select %p346, %s347, %s348
    %p352 = pneg %p346
    %p353 = scmp.eq.s32.totalorder %s25, 4
    %p354 = por %p352, %p353
    %p355 = scmp.ne.s32.totalorder %s347, %s350
    %p356 = scmp.eq.s32.totalorder %s25, 0
    %p357 = por %p355, %p356
    %p358 = scmp.ne.s32.totalorder %s347, %s350
    %p359 = scmp.eq.s32.totalorder %s30, 4
    %p360 = por %p358, %p359
    %p361 = scmp.ne.s32.totalorder %s350, %s351
    %p362 = scmp.eq.s32.totalorder %s30, 0
    %p363 = por %p361, %p362
    %p364 = scmp.ne.s32.totalorder %s350, %s351
    %p365 = scmp.eq.s32.totalorder %s31, 4
    %p366 = por %p364, %p365
    %p368 = scmp.ne.s32.totalorder %s351, %s367
    %p369 = scmp.eq.s32.totalorder %s31, 0
    %p370 = por %p368, %p369
    %s372 = sadd.s32 %s371, 1
    %p375 = scmp.eq.s32.totalorder %s25, 4
    %p376 = scmp.ne.s32.totalorder %s371, %s373
    %p377 = scmp.eq.s32.totalorder %s25, 0
    %p378 = por %p376, %p377
    %p379 = scmp.ne.s32.totalorder %s371, %s373
    %p380 = scmp.eq.s32.totalorder %s30, 4
    %p381 = por %p379, %p380
    %p382 = scmp.ne.s32.totalorder %s373, %s374
    %p383 = scmp.eq.s32.totalorder %s30, 0
    %p384 = por %p382, %p383
    %p385 = scmp.ne.s32.totalorder %s373, %s374
    %p386 = scmp.eq.s32.totalorder %s31, 4
    %p387 = por %p385, %p386
    %p389 = scmp.ne.s32.totalorder %s374, %s388
    %p390 = scmp.eq.s32.totalorder %s31, 0
    %p391 = por %p389, %p390
    %s393 = sadd.s32 %s392, 1
    %p396 = scmp.eq.s32.totalorder %s25, 4
    %p397 = scmp.ne.s32.totalorder %s392, %s394
    %p398 = scmp.eq.s32.totalorder %s25, 0
    %p399 = por %p397, %p398
    %p400 = scmp.ne.s32.totalorder %s392, %s394
    %p401 = scmp.eq.s32.totalorder %s30, 4
    %p402 = por %p400, %p401
    %p403 = scmp.ne.s32.totalorder %s394, %s395
    %p404 = scmp.eq.s32.totalorder %s30, 0
    %p405 = por %p403, %p404
    %p406 = scmp.ne.s32.totalorder %s394, %s395
    %p407 = scmp.eq.s32.totalorder %s31, 4
    %p408 = por %p406, %p407
    %p410 = scmp.ne.s32.totalorder %s395, %s409
    %p411 = scmp.eq.s32.totalorder %s31, 0
    %p412 = por %p410, %p411
    %s414 = sadd.s32 %s413, 1
    %p417 = scmp.eq.s32.totalorder %s25, 4
    %p418 = scmp.ne.s32.totalorder %s413, %s415
    %p419 = scmp.eq.s32.totalorder %s25, 0
    %p420 = por %p418, %p419
    %p421 = scmp.ne.s32.totalorder %s413, %s415
    %p422 = scmp.eq.s32.totalorder %s30, 4
    %p423 = por %p421, %p422
    %p424 = scmp.ne.s32.totalorder %s415, %s416
    %p425 = scmp.eq.s32.totalorder %s30, 0
    %p426 = por %p424, %p425
    %p427 = scmp.ne.s32.totalorder %s415, %s416
    %p428 = scmp.eq.s32.totalorder %s31, 4
    %p429 = por %p427, %p428
    %p431 = scmp.ne.s32.totalorder %s416, %s430
    %p432 = scmp.eq.s32.totalorder %s31, 0
    %p433 = por %p431, %p432
    %s435 = sadd.s32 %s434, 1
    %p438 = scmp.eq.s32.totalorder %s25, 4
    %p439 = scmp.ne.s32.totalorder %s434, %s436
    %p440 = scmp.eq.s32.totalorder %s25, 0
    %p441 = por %p439, %p440
    %p442 = scmp.ne.s32.totalorder %s434, %s436
    %p443 = scmp.eq.s32.totalorder %s30, 4
    %p444 = por %p442, %p443
    %p445 = scmp.ne.s32.totalorder %s436, %s437
    %p446 = scmp.eq.s32.totalorder %s30, 0
    %p447 = por %p445, %p446
    %p448 = scmp.ne.s32.totalorder %s436, %s437
    %p449 = scmp.eq.s32.totalorder %s31, 4
    %p450 = por %p448, %p449
    %p452 = scmp.ne.s32.totalorder %s437, %s451
    %p453 = scmp.eq.s32.totalorder %s31, 0
    %p454 = por %p452, %p453
    %s456 = sadd.s32 %s455, 1
    %p459 = scmp.eq.s32.totalorder %s25, 4
    %p460 = scmp.ne.s32.totalorder %s455, %s457
    %p461 = scmp.eq.s32.totalorder %s25, 0
    %p462 = por %p460, %p461
    %p463 = scmp.ne.s32.totalorder %s455, %s457
    %p464 = scmp.eq.s32.totalorder %s30, 4
    %p465 = por %p463, %p464
    %p466 = scmp.ne.s32.totalorder %s457, %s458
    %p467 = scmp.eq.s32.totalorder %s30, 0
    %p468 = por %p466, %p467
    %p469 = scmp.ne.s32.totalorder %s457, %s458
    %p470 = scmp.eq.s32.totalorder %s31, 4
    %p471 = por %p469, %p470
    %p473 = scmp.ne.s32.totalorder %s458, %s472
    %p474 = scmp.eq.s32.totalorder %s31, 0
    %p475 = por %p473, %p474
    %s477 = sadd.s32 %s476, 1
    %p480 = scmp.eq.s32.totalorder %s25, 4
    %p481 = scmp.ne.s32.totalorder %s476, %s478
    %p482 = scmp.eq.s32.totalorder %s25, 0
    %p483 = por %p481, %p482
    %p484 = scmp.ne.s32.totalorder %s476, %s478
    %p485 = scmp.eq.s32.totalorder %s30, 4
    %p486 = por %p484, %p485
    %p487 = scmp.ne.s32.totalorder %s478, %s479
    %p488 = scmp.eq.s32.totalorder %s30, 0
    %p489 = por %p487, %p488
    %p490 = scmp.ne.s32.totalorder %s478, %s479
    %p491 = scmp.eq.s32.totalorder %s31, 4
    %p492 = por %p490, %p491
    %p494 = scmp.ne.s32.totalorder %s479, %s493
    %p495 = scmp.eq.s32.totalorder %s31, 0
    %p496 = por %p494, %p495
    %p497 = scmp.le.s32.totalorder 1, %s25
    %p498 = scmp.lt.s32.totalorder %s25, 6
    %p499 = pnand %p497, %p498
    %p500 = pneg %p499
    // Predicated region
    $region9: #{futoshiki_forward.4} parent=5 // pred_check
      _
    $region10: #{futoshiki_forward.4} parent=5 // pred_check_branch
      %502 = sbr.rel (%p499) target = $region12
    $region11: #{futoshiki_forward.4} parent=5 // pred_region
      %s503 = ssub.s32 %s25, 1
      // Predicated region
      $region13: #{futoshiki_forward.4} parent=11 // pred_check
        %p504 = pneg %p384
      $region14: #{futoshiki_forward.4} parent=11 // pred_check_branch
        %506 = sbr.rel (%p504) target = $region16
      $region15: #{futoshiki_forward.4} parent=11 // pred_region
        _
      $region16: #{futoshiki_forward.4} parent=11 // pred_fallthru
        _
      // Predicated region
      $region17: #{futoshiki_forward.4} parent=11 // pred_check
        %p507 = pneg %p405
      $region18: #{futoshiki_forward.4} parent=11 // pred_check_branch
        %509 = sbr.rel (%p507) target = $region20
      $region19: #{futoshiki_forward.4} parent=11 // pred_region
        _
      $region20: #{futoshiki_forward.4} parent=11 // pred_fallthru
        _
      // Predicated region
      $region21: #{futoshiki_forward.4} parent=11 // pred_check
        %p510 = pneg %p426
      $region22: #{futoshiki_forward.4} parent=11 // pred_check_branch
        %512 = sbr.rel (%p510) target = $region24
      $region23: #{futoshiki_forward.4} parent=11 // pred_region
        _
      $region24: #{futoshiki_forward.4} parent=11 // pred_fallthru
        _
      // Predicated region
      $region25: #{futoshiki_forward.4} parent=11 // pred_check
        %p513 = pneg %p447
      $region26: #{futoshiki_forward.4} parent=11 // pred_check_branch
        %515 = sbr.rel (%p513) target = $region28
      $region27: #{futoshiki_forward.4} parent=11 // pred_region
        _
      $region28: #{futoshiki_forward.4} parent=11 // pred_fallthru
        _
    $region12: #{futoshiki_forward.4} parent=5 // pred_fallthru
      _
    %p516 = scmp.lt.s32.totalorder %s25, 5
    // Predicated region
    $region29: #{futoshiki_forward.4} parent=5 // pred_check
      %p517 = pneg %p516
    $region30: #{futoshiki_forward.4} parent=5 // pred_check_branch
      %519 = sbr.rel (%p517) target = $region32
    $region31: #{futoshiki_forward.4} parent=5 // pred_region
      // Predicated region
      $region33: #{futoshiki_forward.4} parent=31 // pred_check
        %p520 = pneg %p45
      $region34: #{futoshiki_forward.4} parent=31 // pred_check_branch
        %522 = sbr.rel (%p520) target = $region36
      $region35: #{futoshiki_forward.4} parent=31 // pred_region
        %p523 = scmp.lt.s32.totalorder %s25, 4
        %s524 = scalar_select %p523, %s25, 4
        %s525 = smul.addr %s524, 24
        %s526 = smul.addr %s525, 8
        %s527 = scalar_lea.vmem %s0, %s526
      $region36: #{futoshiki_forward.4} parent=31 // pred_fallthru
        _
      // Predicated region
      $region37: #{futoshiki_forward.4} parent=31 // pred_check
        %p528 = pneg %p71
      $region38: #{futoshiki_forward.4} parent=31 // pred_check_branch
        %530 = sbr.rel (%p528) target = $region40
      $region39: #{futoshiki_forward.4} parent=31 // pred_region
        %p531 = scmp.lt.s32.totalorder %s25, 4
        %s532 = scalar_select %p531, %s25, 4
        %s533 = smul.addr %s532, 24
        %s534 = smul.addr %s533, 8
        %s535 = scalar_lea.vmem %s1, %s534
      $region40: #{futoshiki_forward.4} parent=31 // pred_fallthru
        _
      // Predicated region
      $region41: #{futoshiki_forward.4} parent=31 // pred_check
        %p536 = pneg %p97
      $region42: #{futoshiki_forward.4} parent=31 // pred_check_branch
        %538 = sbr.rel (%p536) target = $region44
      $region43: #{futoshiki_forward.4} parent=31 // pred_region
        %p539 = scmp.lt.s32.totalorder %s25, 4
        %s540 = scalar_select %p539, %s25, 4
        %s541 = smul.addr %s540, 8
        %s542 = smul.addr %s541, 8
        %s543 = scalar_lea.vmem %s2, %s542
      $region44: #{futoshiki_forward.4} parent=31 // pred_fallthru
        _
      // Predicated region
      $region45: #{futoshiki_forward.4} parent=31 // pred_check
        %p544 = pneg %p123
      $region46: #{futoshiki_forward.4} parent=31 // pred_check_branch
        %546 = sbr.rel (%p544) target = $region48
      $region47: #{futoshiki_forward.4} parent=31 // pred_region
        %p547 = scmp.lt.s32.totalorder %s25, 4
        %s548 = scalar_select %p547, %s25, 4
        %s549 = smul.addr %s548, 16
        %s550 = smul.addr %s549, 8
        %s551 = scalar_lea.vmem %s3, %s550
      $region48: #{futoshiki_forward.4} parent=31 // pred_fallthru
        _
      // Predicated region
      $region49: #{futoshiki_forward.4} parent=31 // pred_check
        %p552 = pneg %p149
      $region50: #{futoshiki_forward.4} parent=31 // pred_check_branch
        %554 = sbr.rel (%p552) target = $region52
      $region51: #{futoshiki_forward.4} parent=31 // pred_region
        %p555 = scmp.lt.s32.totalorder %s25, 4
        %s556 = scalar_select %p555, %s25, 4
        %s557 = smul.addr %s556, 16
        %s558 = smul.addr %s557, 8
        %s559 = scalar_lea.vmem %s4, %s558
      $region52: #{futoshiki_forward.4} parent=31 // pred_fallthru
        _
      // Predicated region
      $region53: #{futoshiki_forward.4} parent=31 // pred_check
        %p560 = pneg %p175
      $region54: #{futoshiki_forward.4} parent=31 // pred_check_branch
        %562 = sbr.rel (%p560) target = $region56
      $region55: #{futoshiki_forward.4} parent=31 // pred_region
        %p563 = scmp.lt.s32.totalorder %s25, 4
        %s564 = scalar_select %p563, %s25, 4
        %s565 = scalar_lea.vmem %s5, %s564
      $region56: #{futoshiki_forward.4} parent=31 // pred_fallthru
        _
      // Predicated region
      $region57: #{futoshiki_forward.4} parent=31 // pred_check
        %p566 = pneg %p201
      $region58: #{futoshiki_forward.4} parent=31 // pred_check_branch
        %568 = sbr.rel (%p566) target = $region60
      $region59: #{futoshiki_forward.4} parent=31 // pred_region
        %p569 = scmp.lt.s32.totalorder %s25, 4
        %s570 = scalar_select %p569, %s25, 4
        %s571 = smul.addr %s570, 16
        %s572 = smul.addr %s571, 8
        %s573 = scalar_lea.vmem %s6, %s572
      $region60: #{futoshiki_forward.4} parent=31 // pred_fallthru
        _
      // Predicated region
      $region61: #{futoshiki_forward.4} parent=31 // pred_check
        %p574 = pneg %p227
      $region62: #{futoshiki_forward.4} parent=31 // pred_check_branch
        %576 = sbr.rel (%p574) target = $region64
      $region63: #{futoshiki_forward.4} parent=31 // pred_region
        %p577 = scmp.lt.s32.totalorder %s25, 4
        %s578 = scalar_select %p577, %s25, 4
        %s579 = scalar_lea.vmem %s7, %s578
      $region64: #{futoshiki_forward.4} parent=31 // pred_fallthru
        _
      // Predicated region
      $region65: #{futoshiki_forward.4} parent=31 // pred_check
        %p580 = pneg %p253
      $region66: #{futoshiki_forward.4} parent=31 // pred_check_branch
        %582 = sbr.rel (%p580) target = $region68
      $region67: #{futoshiki_forward.4} parent=31 // pred_region
        %p583 = scmp.lt.s32.totalorder %s25, 4
        %s584 = scalar_select %p583, %s25, 4
        %s585 = smul.addr %s584, 16
        %s586 = smul.addr %s585, 8
        %s587 = scalar_lea.vmem %s8, %s586
      $region68: #{futoshiki_forward.4} parent=31 // pred_fallthru
        _
      // Predicated region
      $region69: #{futoshiki_forward.4} parent=31 // pred_check
        %p588 = pneg %p279
      $region70: #{futoshiki_forward.4} parent=31 // pred_check_branch
        %590 = sbr.rel (%p588) target = $region72
      $region71: #{futoshiki_forward.4} parent=31 // pred_region
        %p591 = scmp.lt.s32.totalorder %s25, 4
        %s592 = scalar_select %p591, %s25, 4
        %s593 = scalar_lea.vmem %s9, %s592
      $region72: #{futoshiki_forward.4} parent=31 // pred_fallthru
        _
      // Predicated region
      $region73: #{futoshiki_forward.4} parent=31 // pred_check
        %p594 = pneg %p305
      $region74: #{futoshiki_forward.4} parent=31 // pred_check_branch
        %596 = sbr.rel (%p594) target = $region76
      $region75: #{futoshiki_forward.4} parent=31 // pred_region
        %p597 = scmp.lt.s32.totalorder %s25, 4
        %s598 = scalar_select %p597, %s25, 4
        %s599 = smul.addr %s598, 16
        %s600 = smul.addr %s599, 8
        %s601 = scalar_lea.vmem %s10, %s600
      $region76: #{futoshiki_forward.4} parent=31 // pred_fallthru
        _
      // Predicated region
      $region77: #{futoshiki_forward.4} parent=31 // pred_check
        %p602 = pneg %p331
      $region78: #{futoshiki_forward.4} parent=31 // pred_check_branch
        %604 = sbr.rel (%p602) target = $region80
      $region79: #{futoshiki_forward.4} parent=31 // pred_region
        %p605 = scmp.lt.s32.totalorder %s25, 4
        %s606 = scalar_select %p605, %s25, 4
        %s607 = scalar_lea.vmem %s11, %s606
      $region80: #{futoshiki_forward.4} parent=31 // pred_fallthru
        _
      // Predicated region
      $region81: #{futoshiki_forward.4} parent=31 // pred_check
        %p608 = pneg %p357
      $region82: #{futoshiki_forward.4} parent=31 // pred_check_branch
        %610 = sbr.rel (%p608) target = $region84
      $region83: #{futoshiki_forward.4} parent=31 // pred_region
        %p611 = scmp.lt.s32.totalorder %s25, 4
        %s612 = scalar_select %p611, %s25, 4
        %s613 = smul.addr %s612, 64
        %s614 = smul.addr %s613, 8
        %s615 = scalar_lea.vmem %s12, %s614
      $region84: #{futoshiki_forward.4} parent=31 // pred_fallthru
        _
    $region32: #{futoshiki_forward.4} parent=5 // pred_fallthru
      _
    %p616 = scmp.le.s32.totalorder 1, %s25
    %p617 = scmp.lt.s32.totalorder %s25, 6
    %p618 = pnand %p616, %p617
    %p619 = pneg %p618
    // Predicated region
    $region85: #{futoshiki_forward.4} parent=5 // pred_check
      _
    $region86: #{futoshiki_forward.4} parent=5 // pred_check_branch
      %621 = sbr.rel (%p618) target = $region88
    $region87: #{futoshiki_forward.4} parent=5 // pred_region
      %s622 = ssub.s32 %s25, 1
      %p623 = scmp.lt.s32.totalorder %s30, 4
      %s624 = scalar_select %p623, %s30, 4
      %s625 = smul.addr %s624, 24
      %s626 = smul.addr %s625, 8
      %s627 = scalar_lea.vmem %s0, %s626
      %p628 = pneg %p51
      %p629 = pneg %p48
      %p630 = scmp.lt.s32.totalorder %s30, 4
      %s631 = scalar_select %p630, %s30, 4
      %s632 = smul.addr %s631, 24
      %s633 = smul.addr %s632, 8
      %s634 = scalar_lea.vmem %s1, %s633
      %p635 = pneg %p77
      %p636 = pneg %p74
      %p637 = scmp.lt.s32.totalorder %s30, 4
      %s638 = scalar_select %p637, %s30, 4
      %s639 = smul.addr %s638, 8
      %s640 = smul.addr %s639, 8
      %s641 = scalar_lea.vmem %s2, %s640
      %p642 = pneg %p103
      %p643 = pneg %p100
      %p644 = scmp.lt.s32.totalorder %s30, 4
      %s645 = scalar_select %p644, %s30, 4
      %s646 = smul.addr %s645, 16
      %s647 = smul.addr %s646, 8
      %s648 = scalar_lea.vmem %s3, %s647
      %p649 = pneg %p129
      %p650 = pneg %p126
      %p651 = scmp.lt.s32.totalorder %s30, 4
      %s652 = scalar_select %p651, %s30, 4
      %s653 = smul.addr %s652, 16
      %s654 = smul.addr %s653, 8
      %s655 = scalar_lea.vmem %s4, %s654
      %p656 = pneg %p155
      %p657 = pneg %p152
      %p658 = scmp.lt.s32.totalorder %s30, 4
      %s659 = scalar_select %p658, %s30, 4
      %s660 = scalar_lea.vmem %s5, %s659
      %p661 = pneg %p181
      %p662 = pneg %p178
      %p663 = scmp.lt.s32.totalorder %s30, 4
      %s664 = scalar_select %p663, %s30, 4
      %s665 = smul.addr %s664, 16
      %s666 = smul.addr %s665, 8
      %s667 = scalar_lea.vmem %s6, %s666
      %p668 = pneg %p207
      %p669 = pneg %p204
      %p670 = scmp.lt.s32.totalorder %s30, 4
      %s671 = scalar_select %p670, %s30, 4
      %s672 = scalar_lea.vmem %s7, %s671
      %p673 = pneg %p233
      %p674 = pneg %p230
      %p675 = scmp.lt.s32.totalorder %s30, 4
      %s676 = scalar_select %p675, %s30, 4
      %s677 = smul.addr %s676, 16
      %s678 = smul.addr %s677, 8
      %s679 = scalar_lea.vmem %s8, %s678
      %p680 = pneg %p259
      %p681 = pneg %p256
      %p682 = scmp.lt.s32.totalorder %s30, 4
      %s683 = scalar_select %p682, %s30, 4
      %s684 = scalar_lea.vmem %s9, %s683
      %p685 = pneg %p285
      %p686 = pneg %p282
      %p687 = scmp.lt.s32.totalorder %s30, 4
      %s688 = scalar_select %p687, %s30, 4
      %s689 = smul.addr %s688, 16
      %s690 = smul.addr %s689, 8
      %s691 = scalar_lea.vmem %s10, %s690
      %p692 = pneg %p311
      %p693 = pneg %p308
      %p694 = scmp.lt.s32.totalorder %s30, 4
      %s695 = scalar_select %p694, %s30, 4
      %s696 = scalar_lea.vmem %s11, %s695
      %p697 = pneg %p337
      %p698 = pneg %p334
      %p699 = scmp.lt.s32.totalorder %s30, 4
      %s700 = scalar_select %p699, %s30, 4
      %s701 = smul.addr %s700, 64
      %s702 = smul.addr %s701, 8
      %s703 = scalar_lea.vmem %s12, %s702
      %p704 = pneg %p363
      %p705 = pneg %p360
      %p706 = pneg %p384
      %p707 = pneg %p381
      %p708 = pneg %p405
      %p709 = pneg %p402
      %p710 = pneg %p426
      %p711 = pneg %p423
      %p712 = pneg %p447
      %p713 = pneg %p444
      %p714 = pneg %p468
      %p715 = pneg %p465
      %p716 = pneg %p489
      %p717 = pneg %p486
      %p718 = scmp.lt.s32.totalorder %s30, 4
      %s719 = scalar_select %p718, %s30, 4
      %s720 = smul.addr %s719, 24
      %s721 = smul.addr %s720, 8
      %s722 = scalar_lea.vmem %s0, %s721
      %p723 = scmp.lt.s32.totalorder %s30, 4
      %s724 = scalar_select %p723, %s30, 4
      %s725 = smul.addr %s724, 24
      %s726 = smul.addr %s725, 8
      %s727 = scalar_lea.vmem %s1, %s726
      %p728 = scmp.lt.s32.totalorder %s30, 4
      %s729 = scalar_select %p728, %s30, 4
      %s730 = smul.addr %s729, 8
      %s731 = smul.addr %s730, 8
      %s732 = scalar_lea.vmem %s2, %s731
      %p733 = scmp.lt.s32.totalorder %s30, 4
      %s734 = scalar_select %p733, %s30, 4
      %s735 = smul.addr %s734, 16
      %s736 = smul.addr %s735, 8
      %s737 = scalar_lea.vmem %s3, %s736
      %p738 = scmp.lt.s32.totalorder %s30, 4
      %s739 = scalar_select %p738, %s30, 4
      %s740 = smul.addr %s739, 16
      %s741 = smul.addr %s740, 8
      %s742 = scalar_lea.vmem %s4, %s741
      %p743 = scmp.lt.s32.totalorder %s30, 4
      %s744 = scalar_select %p743, %s30, 4
      %s745 = scalar_lea.vmem %s5, %s744
      %p746 = scmp.lt.s32.totalorder %s30, 4
      %s747 = scalar_select %p746, %s30, 4
      %s748 = smul.addr %s747, 16
      %s749 = smul.addr %s748, 8
      %s750 = scalar_lea.vmem %s6, %s749
      %p751 = scmp.lt.s32.totalorder %s30, 4
      %s752 = scalar_select %p751, %s30, 4
      %s753 = scalar_lea.vmem %s7, %s752
      %p754 = scmp.lt.s32.totalorder %s30, 4
      %s755 = scalar_select %p754, %s30, 4
      %s756 = smul.addr %s755, 16
      %s757 = smul.addr %s756, 8
      %s758 = scalar_lea.vmem %s8, %s757
      %p759 = scmp.lt.s32.totalorder %s30, 4
      %s760 = scalar_select %p759, %s30, 4
      %s761 = scalar_lea.vmem %s9, %s760
      %p762 = scmp.lt.s32.totalorder %s30, 4
      %s763 = scalar_select %p762, %s30, 4
      %s764 = smul.addr %s763, 16
      %s765 = smul.addr %s764, 8
      %s766 = scalar_lea.vmem %s10, %s765
      %p767 = scmp.lt.s32.totalorder %s30, 4
      %s768 = scalar_select %p767, %s30, 4
      %s769 = scalar_lea.vmem %s11, %s768
      %p770 = scmp.lt.s32.totalorder %s30, 4
      %s771 = scalar_select %p770, %s30, 4
      %s772 = smul.addr %s771, 64
      %s773 = smul.addr %s772, 8
      %s774 = scalar_lea.vmem %s12, %s773
      %v775 = vld [vmem:[%s14] sm:$0xff]
      %v776 = vld [vmem:[%s14 + $0x8] sm:$0xff]
      %v777 = vld [vmem:[%s14 + $0x10] sm:$0xff]
      %v778 = vld [vmem:[%s14 + $0x18] sm:$0xff]
      %v779 = vld [vmem:[%s16] sm:$0xff]
      %v780 = vld [vmem:[%s16 + $0x8] sm:$0xff]
      %v781 = vld [vmem:[%s16 + $0x10] sm:$0xff]
      %v782 = vld [vmem:[%s16 + $0x18] sm:$0xff]
      %v783 = vld [vmem:[%s16 + $0x20] sm:$0xff]
      %v784 = vld [vmem:[%s16 + $0x28] sm:$0xff]
      %v785 = vld [vmem:[%s16 + $0x30] sm:$0xff]
      %v786 = vld [vmem:[%s16 + $0x38] sm:$0xff]
      %v787 = vld [vmem:[%s16 + $0x40] sm:$0xff]
      %v788 = vld [vmem:[%s16 + $0x48] sm:$0xff]
      %v789 = vld [vmem:[%s16 + $0x50] sm:$0xff]
      %v790 = vld [vmem:[%s16 + $0x58] sm:$0xff]
      %v791 = vld [vmem:[%s16 + $0x60] sm:$0xff]
      %v792 = vld [vmem:[%s16 + $0x68] sm:$0xff]
      %v793 = vld [vmem:[%s16 + $0x70] sm:$0xff]
      %v794 = vld [vmem:[%s16 + $0x78] sm:$0xff]
      %v795 = vld [vmem:[%s16 + $0x80] sm:$0xff]
      %v796 = vld [vmem:[%s16 + $0x88] sm:$0xff]
      %v797 = vld [vmem:[%s16 + $0x90] sm:$0xff]
      %v798 = vld [vmem:[%s16 + $0x98] sm:$0xff]
      %v799 = vld [vmem:[%s16 + $0xa0] sm:$0xff]
      %v800 = vld [vmem:[%s16 + $0xa8] sm:$0xff]
      %v801 = vld [vmem:[%s16 + $0xb0] sm:$0xff]
      %v802 = vld [vmem:[%s16 + $0xb8] sm:$0xff]
      %v803 = vld [vmem:[%s16 + $0xc0] sm:$0xff]
      %v804 = vld [vmem:[%s16 + $0xc8] sm:$0xff]
      %v805 = vld [vmem:[%s16 + $0xd0] sm:$0xff]
      %v806 = vld [vmem:[%s16 + $0xd8] sm:$0xff]
      %v807 = vld [vmem:[%s16 + $0xe0] sm:$0xff]
      %v808 = vld [vmem:[%s16 + $0xe8] sm:$0xff]
      %v809 = vld [vmem:[%s16 + $0xf0] sm:$0xff]
      %v810 = vld [vmem:[%s16 + $0xf8] sm:$0xff]
      %v811 = vld [vmem:[%s16 + $0x100] sm:$0xff]
      %v812 = vld [vmem:[%s16 + $0x108] sm:$0xff]
      %v813 = vld [vmem:[%s16 + $0x110] sm:$0xff]
      %v814 = vld [vmem:[%s16 + $0x118] sm:$0xff]
      %v815 = vld [vmem:[%s16 + $0x120] sm:$0xff]
      %v816 = vld [vmem:[%s16 + $0x128] sm:$0xff]
      %v817 = vld [vmem:[%s16 + $0x130] sm:$0xff]
      %v818 = vld [vmem:[%s16 + $0x138] sm:$0xff]
      %v819 = vld [vmem:[%s16 + $0x140] sm:$0xff]
      %v820 = vld [vmem:[%s16 + $0x148] sm:$0xff]
      %v821 = vld [vmem:[%s16 + $0x150] sm:$0xff]
      %v822 = vld [vmem:[%s16 + $0x158] sm:$0xff]
      %v823 = vld [vmem:[%s16 + $0x160] sm:$0xff]
      %v824 = vld [vmem:[%s16 + $0x168] sm:$0xff]
      %v825 = vld [vmem:[%s16 + $0x170] sm:$0xff]
      %v826 = vld [vmem:[%s16 + $0x178] sm:$0xff]
      %v827 = vld [vmem:[%s16 + $0x180] sm:$0xff]
      %v828 = vld [vmem:[%s16 + $0x188] sm:$0xff]
      %v829 = vld [vmem:[%s16 + $0x190] sm:$0xff]
      %v830 = vld [vmem:[%s16 + $0x198] sm:$0xff]
      %v831 = vld [vmem:[%s16 + $0x1a0] sm:$0xff]
      %v832 = vld [vmem:[%s16 + $0x1a8] sm:$0xff]
      %v833 = vld [vmem:[%s16 + $0x1b0] sm:$0xff]
      %v834 = vld [vmem:[%s16 + $0x1b8] sm:$0xff]
      %v835 = vld [vmem:[%s16 + $0x1c0] sm:$0xff]
      %v836 = vld [vmem:[%s16 + $0x1c8] sm:$0xff]
      %v837 = vld [vmem:[%s16 + $0x1d0] sm:$0xff]
      %v838 = vld [vmem:[%s16 + $0x1d8] sm:$0xff]
      %v839 = vld [vmem:[%s16 + $0x1e0] sm:$0xff]
      %v840 = vld [vmem:[%s16 + $0x1e8] sm:$0xff]
      %v841 = vld [vmem:[%s16 + $0x1f0] sm:$0xff]
      %v842 = vld [vmem:[%s16 + $0x1f8] sm:$0xff]
      %843 = vmatpush.msra.mxu0 %v839
      %844 = vmatpush.msra.mxu0 %v835
      %845 = vmatpush.msra.mxu0 %v831
      %846 = vmatpush.msra.mxu0 %v827
      %847 = vmatpush.msra.mxu0 %v823
      %848 = vmatpush.msra.mxu0 %v819
      %849 = vmatpush.msra.mxu0 %v815
      %850 = vmatpush.msra.mxu0 %v811
      %851 = vmatpush.msra.mxu0 %v807
      %852 = vmatpush.msra.mxu0 %v803
      %853 = vmatpush.msra.mxu0 %v799
      %854 = vmatpush.msra.mxu0 %v795
      %855 = vmatpush.msra.mxu0 %v791
      %856 = vmatpush.msra.mxu0 %v787
      %857 = vmatpush.msra.mxu0 %v783
      %858 = vmatpush.msra.mxu0 %v779
      %859 = vmatmul.f32.gmra.mxu0 %v775
      %v860 = vpop.f32.mrf.mxu0
      %v861 = vadd.f32 0.0, %v860
      %862 = vmatmul.f32.gmra.mxu0 %v776
      %v863 = vpop.f32.mrf.mxu0
      %v864 = vadd.f32 0.0, %v863
      %865 = vmatmul.f32.gmra.mxu0 %v777
      %v866 = vpop.f32.mrf.mxu0
      %v867 = vadd.f32 0.0, %v866
      %868 = vmatmul.f32.gmra.mxu0 %v778
      %v869 = vpop.f32.mrf.mxu0
      %v870 = vadd.f32 0.0, %v869
      %871 = vdwg.mxu0
      %872 = vmatpush.msra.mxu0 %v840
      %873 = vmatpush.msra.mxu0 %v836
      %874 = vmatpush.msra.mxu0 %v832
      %875 = vmatpush.msra.mxu0 %v828
      %876 = vmatpush.msra.mxu0 %v824
      %877 = vmatpush.msra.mxu0 %v820
      %878 = vmatpush.msra.mxu0 %v816
      %879 = vmatpush.msra.mxu0 %v812
      %880 = vmatpush.msra.mxu0 %v808
      %881 = vmatpush.msra.mxu0 %v804
      %882 = vmatpush.msra.mxu0 %v800
      %883 = vmatpush.msra.mxu0 %v796
      %884 = vmatpush.msra.mxu0 %v792
      %885 = vmatpush.msra.mxu0 %v788
      %886 = vmatpush.msra.mxu0 %v784
      %887 = vmatpush.msra.mxu0 %v780
      %888 = vmatmul.f32.gmra.mxu0 %v775
      %v889 = vpop.f32.mrf.mxu0
      %v890 = vadd.f32 0.0, %v889
      %891 = vmatmul.f32.gmra.mxu0 %v776
      %v892 = vpop.f32.mrf.mxu0
      %v893 = vadd.f32 0.0, %v892
      %894 = vmatmul.f32.gmra.mxu0 %v777
      %v895 = vpop.f32.mrf.mxu0
      %v896 = vadd.f32 0.0, %v895
      %897 = vmatmul.f32.gmra.mxu0 %v778
      %v898 = vpop.f32.mrf.mxu0
      %v899 = vadd.f32 0.0, %v898
      %900 = vdwg.mxu0
      %901 = vmatpush.msra.mxu0 %v841
      %902 = vmatpush.msra.mxu0 %v837
      %903 = vmatpush.msra.mxu0 %v833
      %904 = vmatpush.msra.mxu0 %v829
      %905 = vmatpush.msra.mxu0 %v825
      %906 = vmatpush.msra.mxu0 %v821
      %907 = vmatpush.msra.mxu0 %v817
      %908 = vmatpush.msra.mxu0 %v813
      %909 = vmatpush.msra.mxu0 %v809
      %910 = vmatpush.msra.mxu0 %v805
      %911 = vmatpush.msra.mxu0 %v801
      %912 = vmatpush.msra.mxu0 %v797
      %913 = vmatpush.msra.mxu0 %v793
      %914 = vmatpush.msra.mxu0 %v789
      %915 = vmatpush.msra.mxu0 %v785
      %916 = vmatpush.msra.mxu0 %v781
      %917 = vmatmul.f32.gmra.mxu0 %v775
      %v918 = vpop.f32.mrf.mxu0
      %v919 = vadd.f32 0.0, %v918
      %920 = vmatmul.f32.gmra.mxu0 %v776
      %v921 = vpop.f32.mrf.mxu0
      %v922 = vadd.f32 0.0, %v921
      %923 = vmatmul.f32.gmra.mxu0 %v777
      %v924 = vpop.f32.mrf.mxu0
      %v925 = vadd.f32 0.0, %v924
      %926 = vmatmul.f32.gmra.mxu0 %v778
      %v927 = vpop.f32.mrf.mxu0
      %v928 = vadd.f32 0.0, %v927
      %929 = vdwg.mxu0
      %930 = vmatpush.msra.mxu0 %v842
      %931 = vmatpush.msra.mxu0 %v838
      %932 = vmatpush.msra.mxu0 %v834
      %933 = vmatpush.msra.mxu0 %v830
      %934 = vmatpush.msra.mxu0 %v826
      %935 = vmatpush.msra.mxu0 %v822
      %936 = vmatpush.msra.mxu0 %v818
      %937 = vmatpush.msra.mxu0 %v814
      %938 = vmatpush.msra.mxu0 %v810
      %939 = vmatpush.msra.mxu0 %v806
      %940 = vmatpush.msra.mxu0 %v802
      %941 = vmatpush.msra.mxu0 %v798
      %942 = vmatpush.msra.mxu0 %v794
      %943 = vmatpush.msra.mxu0 %v790
      %944 = vmatpush.msra.mxu0 %v786
      %945 = vmatpush.msra.mxu0 %v782
      %946 = vmatmul.f32.gmra.mxu0 %v775
      %v947 = vpop.f32.mrf.mxu0
      %v948 = vadd.f32 0.0, %v947
      %949 = vmatmul.f32.gmra.mxu0 %v776
      %v950 = vpop.f32.mrf.mxu0
      %v951 = vadd.f32 0.0, %v950
      %952 = vmatmul.f32.gmra.mxu0 %v777
      %v953 = vpop.f32.mrf.mxu0
      %v954 = vadd.f32 0.0, %v953
      %955 = vmatmul.f32.gmra.mxu0 %v778
      %v956 = vpop.f32.mrf.mxu0
      %v957 = vadd.f32 0.0, %v956
      %958 = vdwg.mxu0
      %p959 = scmp.eq.s32.totalorder %s30, 0
      // Predicated region
      $region89: #{futoshiki_forward.4} parent=87 // pred_check
        %p960 = pneg %p959
      $region90: #{futoshiki_forward.4} parent=87 // pred_check_branch
        %962 = sbr.rel (%p960) target = $region92
      $region91: #{futoshiki_forward.4} parent=87 // pred_region
        %v963 = vld [vmem:[%s13] sm:$0xff]
        %v964 = vld [vmem:[%s13 + $0x8] sm:$0xff]
        %v965 = vld [vmem:[%s13 + $0x10] sm:$0xff]
        %v966 = vld [vmem:[%s13 + $0x18] sm:$0xff]
        %v967 = vld [vmem:[%s13 + $0x20] sm:$0xff]
        %v968 = vld [vmem:[%s13 + $0x28] sm:$0xff]
        %v969 = vld [vmem:[%s13 + $0x30] sm:$0xff]
        %v970 = vld [vmem:[%s13 + $0x38] sm:$0xff]
        %v971 = vld [vmem:[%s13 + $0x40] sm:$0xff]
        %v972 = vld [vmem:[%s13 + $0x48] sm:$0xff]
        %v973 = vld [vmem:[%s13 + $0x50] sm:$0xff]
        %v974 = vld [vmem:[%s13 + $0x58] sm:$0xff]
        %v975 = vld [vmem:[%s13 + $0x60] sm:$0xff]
        %v976 = vld [vmem:[%s13 + $0x68] sm:$0xff]
        %v977 = vld [vmem:[%s13 + $0x70] sm:$0xff]
        %v978 = vld [vmem:[%s13 + $0x78] sm:$0xff]
        %v979 = vadd.f32 %v963, %v861
        %v980 = vadd.f32 %v964, %v890
        %v981 = vadd.f32 %v965, %v919
        %v982 = vadd.f32 %v966, %v948
        %v983 = vadd.f32 %v967, %v864
        %v984 = vadd.f32 %v968, %v893
        %v985 = vadd.f32 %v969, %v922
        %v986 = vadd.f32 %v970, %v951
        %v987 = vadd.f32 %v971, %v867
        %v988 = vadd.f32 %v972, %v896
        %v989 = vadd.f32 %v973, %v925
        %v990 = vadd.f32 %v974, %v954
        %v991 = vadd.f32 %v975, %v870
        %v992 = vadd.f32 %v976, %v899
        %v993 = vadd.f32 %v977, %v928
        %v994 = vadd.f32 %v978, %v957
        %995 = vst [vmem:[#allocation2] sm:$0xff] %v979
        %996 = vst [vmem:[#allocation2 + $0x8] sm:$0xff] %v980
        %997 = vst [vmem:[#allocation2 + $0x10] sm:$0xff] %v981
        %998 = vst [vmem:[#allocation2 + $0x18] sm:$0xff] %v982
        %999 = vst [vmem:[#allocation2 + $0x20] sm:$0xff] %v983
        %1000 = vst [vmem:[#allocation2 + $0x28] sm:$0xff] %v984
        %1001 = vst [vmem:[#allocation2 + $0x30] sm:$0xff] %v985
        %1002 = vst [vmem:[#allocation2 + $0x38] sm:$0xff] %v986
        %1003 = vst [vmem:[#allocation2 + $0x40] sm:$0xff] %v987
        %1004 = vst [vmem:[#allocation2 + $0x48] sm:$0xff] %v988
        %1005 = vst [vmem:[#allocation2 + $0x50] sm:$0xff] %v989
        %1006 = vst [vmem:[#allocation2 + $0x58] sm:$0xff] %v990
        %1007 = vst [vmem:[#allocation2 + $0x60] sm:$0xff] %v991
        %1008 = vst [vmem:[#allocation2 + $0x68] sm:$0xff] %v992
        %1009 = vst [vmem:[#allocation2 + $0x70] sm:$0xff] %v993
        %1010 = vst [vmem:[#allocation2 + $0x78] sm:$0xff] %v994
      $region92: #{futoshiki_forward.4} parent=87 // pred_fallthru
        _
      %v1011 = vld [vmem:[%s722] sm:$0xff]
      %v1012 = vld [vmem:[%s722 + $0x8] sm:$0xff]
      %v1013 = vld [vmem:[%s722 + $0x10] sm:$0xff]
      %v1014 = vld [vmem:[%s722 + $0x18] sm:$0xff]
      %v1015 = vld [vmem:[%s722 + $0x20] sm:$0xff]
      %v1016 = vld [vmem:[%s722 + $0x28] sm:$0xff]
      %v1017 = vld [vmem:[%s722 + $0x30] sm:$0xff]
      %v1018 = vld [vmem:[%s722 + $0x38] sm:$0xff]
      %v1019 = vld [vmem:[%s722 + $0x40] sm:$0xff]
      %v1020 = vld [vmem:[%s722 + $0x48] sm:$0xff]
      %v1021 = vld [vmem:[%s722 + $0x50] sm:$0xff]
      %v1022 = vld [vmem:[%s722 + $0x58] sm:$0xff]
      %v1023 = vld [vmem:[%s722 + $0x60] sm:$0xff]
      %v1024 = vld [vmem:[%s722 + $0x68] sm:$0xff]
      %v1025 = vld [vmem:[%s722 + $0x70] sm:$0xff]
      %v1026 = vld [vmem:[%s722 + $0x78] sm:$0xff]
      %v1027 = vld [vmem:[%s722 + $0x80] sm:$0xff]
      %v1028 = vld [vmem:[%s722 + $0x88] sm:$0xff]
      %v1029 = vld [vmem:[%s722 + $0x90] sm:$0xff]
      %v1030 = vld [vmem:[%s722 + $0x98] sm:$0xff]
      %v1031 = vld [vmem:[%s722 + $0xa0] sm:$0xff]
      %v1032 = vld [vmem:[%s722 + $0xa8] sm:$0xff]
      %v1033 = vld [vmem:[%s722 + $0xb0] sm:$0xff]
      %v1034 = vld [vmem:[%s722 + $0xb8] sm:$0xff]
      %v1035 = vld [vmem:[%s727] sm:$0xff]
      %v1036 = vld [vmem:[%s727 + $0x8] sm:$0xff]
      %v1037 = vld [vmem:[%s727 + $0x10] sm:$0xff]
      %v1038 = vld [vmem:[%s727 + $0x18] sm:$0xff]
      %v1039 = vld [vmem:[%s727 + $0x20] sm:$0xff]
      %v1040 = vld [vmem:[%s727 + $0x28] sm:$0xff]
      %v1041 = vld [vmem:[%s727 + $0x30] sm:$0xff]
      %v1042 = vld [vmem:[%s727 + $0x38] sm:$0xff]
      %v1043 = vld [vmem:[%s727 + $0x40] sm:$0xff]
      %v1044 = vld [vmem:[%s727 + $0x48] sm:$0xff]
      %v1045 = vld [vmem:[%s727 + $0x50] sm:$0xff]
      %v1046 = vld [vmem:[%s727 + $0x58] sm:$0xff]
      %v1047 = vld [vmem:[%s727 + $0x60] sm:$0xff]
      %v1048 = vld [vmem:[%s727 + $0x68] sm:$0xff]
      %v1049 = vld [vmem:[%s727 + $0x70] sm:$0xff]
      %v1050 = vld [vmem:[%s727 + $0x78] sm:$0xff]
      %v1051 = vld [vmem:[%s727 + $0x80] sm:$0xff]
      %v1052 = vld [vmem:[%s727 + $0x88] sm:$0xff]
      %v1053 = vld [vmem:[%s727 + $0x90] sm:$0xff]
      %v1054 = vld [vmem:[%s727 + $0x98] sm:$0xff]
      %v1055 = vld [vmem:[%s727 + $0xa0] sm:$0xff]
      %v1056 = vld [vmem:[%s727 + $0xa8] sm:$0xff]
      %v1057 = vld [vmem:[%s727 + $0xb0] sm:$0xff]
      %v1058 = vld [vmem:[%s727 + $0xb8] sm:$0xff]
      %v1059 = vld [vmem:[%s737] sm:$0xff]
      %v1060 = vld [vmem:[%s737 + $0x8] sm:$0xff]
      %v1061 = vld [vmem:[%s737 + $0x10] sm:$0xff]
      %v1062 = vld [vmem:[%s737 + $0x18] sm:$0xff]
      %v1063 = vld [vmem:[%s737 + $0x20] sm:$0xff]
      %v1064 = vld [vmem:[%s737 + $0x28] sm:$0xff]
      %v1065 = vld [vmem:[%s737 + $0x30] sm:$0xff]
      %v1066 = vld [vmem:[%s737 + $0x38] sm:$0xff]
      %v1067 = vld [vmem:[%s737 + $0x40] sm:$0xff]
      %v1068 = vld [vmem:[%s737 + $0x48] sm:$0xff]
      %v1069 = vld [vmem:[%s737 + $0x50] sm:$0xff]
      %v1070 = vld [vmem:[%s737 + $0x58] sm:$0xff]
      %v1071 = vld [vmem:[%s737 + $0x60] sm:$0xff]
      %v1072 = vld [vmem:[%s737 + $0x68] sm:$0xff]
      %v1073 = vld [vmem:[%s737 + $0x70] sm:$0xff]
      %v1074 = vld [vmem:[%s737 + $0x78] sm:$0xff]
      %v1075 = vld [vmem:[%s742] sm:$0xff]
      %v1076 = vld [vmem:[%s742 + $0x8] sm:$0xff]
      %v1077 = vld [vmem:[%s742 + $0x10] sm:$0xff]
      %v1078 = vld [vmem:[%s742 + $0x18] sm:$0xff]
      %v1079 = vld [vmem:[%s742 + $0x20] sm:$0xff]
      %v1080 = vld [vmem:[%s742 + $0x28] sm:$0xff]
      %v1081 = vld [vmem:[%s742 + $0x30] sm:$0xff]
      %v1082 = vld [vmem:[%s742 + $0x38] sm:$0xff]
      %v1083 = vld [vmem:[%s742 + $0x40] sm:$0xff]
      %v1084 = vld [vmem:[%s742 + $0x48] sm:$0xff]
      %v1085 = vld [vmem:[%s742 + $0x50] sm:$0xff]
      %v1086 = vld [vmem:[%s742 + $0x58] sm:$0xff]
      %v1087 = vld [vmem:[%s742 + $0x60] sm:$0xff]
      %v1088 = vld [vmem:[%s742 + $0x68] sm:$0xff]
      %v1089 = vld [vmem:[%s742 + $0x70] sm:$0xff]
      %v1090 = vld [vmem:[%s742 + $0x78] sm:$0xff]
      %1091 = vmatpush.msra.mxu0 %v1090
      %1092 = vmatpush.msra.mxu0 %v1089
      %1093 = vmatpush.msra.mxu0 %v1088
      %1094 = vmatpush.msra.mxu0 %v1087
      %1095 = vmatpush.msra.mxu0 %v1086
      %1096 = vmatpush.msra.mxu0 %v1085
      %1097 = vmatpush.msra.mxu0 %v1084
      %1098 = vmatpush.msra.mxu0 %v1083
      %1099 = vmatpush.msra.mxu0 %v1082
      %1100 = vmatpush.msra.mxu0 %v1081
      %1101 = vmatpush.msra.mxu0 %v1080
      %1102 = vmatpush.msra.mxu0 %v1079
      %1103 = vmatpush.msra.mxu0 %v1078
      %1104 = vmatpush.msra.mxu0 %v1077
      %1105 = vmatpush.msra.mxu0 %v1076
      %1106 = vmatpush.msra.mxu0 %v1075
      %1107 = vmatmul.f32.gmra.mxu0 %v1035
      %v1108 = vpop.f32.mrf.mxu0
      %v1109 = vadd.f32 0.0, %v1108
      %1110 = vmatmul.f32.gmra.mxu0 %v1036
      %v1111 = vpop.f32.mrf.mxu0
      %v1112 = vadd.f32 0.0, %v1111
      %1113 = vmatmul.f32.gmra.mxu0 %v1037
      %v1114 = vpop.f32.mrf.mxu0
      %v1115 = vadd.f32 0.0, %v1114
      %1116 = vmatmul.f32.gmra.mxu0 %v1038
      %v1117 = vpop.f32.mrf.mxu0
      %v1118 = vadd.f32 0.0, %v1117
      %1119 = vmatmul.f32.gmra.mxu0 %v1039
      %v1120 = vpop.f32.mrf.mxu0
      %v1121 = vadd.f32 0.0, %v1120
      %1122 = vmatmul.f32.gmra.mxu0 %v1040
      %v1123 = vpop.f32.mrf.mxu0
      %v1124 = vadd.f32 0.0, %v1123
      %1125 = vmatmul.f32.gmra.mxu0 %v1041
      %v1126 = vpop.f32.mrf.mxu0
      %v1127 = vadd.f32 0.0, %v1126
      %1128 = vmatmul.f32.gmra.mxu0 %v1042
      %v1129 = vpop.f32.mrf.mxu0
      %v1130 = vadd.f32 0.0, %v1129
      %1131 = vmatmul.f32.gmra.mxu0 %v1043
      %v1132 = vpop.f32.mrf.mxu0
      %v1133 = vadd.f32 0.0, %v1132
      %1134 = vmatmul.f32.gmra.mxu0 %v1044
      %v1135 = vpop.f32.mrf.mxu0
      %v1136 = vadd.f32 0.0, %v1135
      %1137 = vmatmul.f32.gmra.mxu0 %v1045
      %v1138 = vpop.f32.mrf.mxu0
      %v1139 = vadd.f32 0.0, %v1138
      %1140 = vmatmul.f32.gmra.mxu0 %v1046
      %v1141 = vpop.f32.mrf.mxu0
      %v1142 = vadd.f32 0.0, %v1141
      %1143 = vmatmul.f32.gmra.mxu0 %v1047
      %v1144 = vpop.f32.mrf.mxu0
      %v1145 = vadd.f32 0.0, %v1144
      %1146 = vmatmul.f32.gmra.mxu0 %v1048
      %v1147 = vpop.f32.mrf.mxu0
      %v1148 = vadd.f32 0.0, %v1147
      %1149 = vmatmul.f32.gmra.mxu0 %v1049
      %v1150 = vpop.f32.mrf.mxu0
      %v1151 = vadd.f32 0.0, %v1150
      %1152 = vmatmul.f32.gmra.mxu0 %v1050
      %v1153 = vpop.f32.mrf.mxu0
      %v1154 = vadd.f32 0.0, %v1153
      %1155 = vmatmul.f32.gmra.mxu0 %v1051
      %v1156 = vpop.f32.mrf.mxu0
      %v1157 = vadd.f32 0.0, %v1156
      %1158 = vmatmul.f32.gmra.mxu0 %v1052
      %v1159 = vpop.f32.mrf.mxu0
      %v1160 = vadd.f32 0.0, %v1159
      %1161 = vmatmul.f32.gmra.mxu0 %v1053
      %v1162 = vpop.f32.mrf.mxu0
      %v1163 = vadd.f32 0.0, %v1162
      %1164 = vmatmul.f32.gmra.mxu0 %v1054
      %v1165 = vpop.f32.mrf.mxu0
      %v1166 = vadd.f32 0.0, %v1165
      %1167 = vmatmul.f32.gmra.mxu0 %v1055
      %v1168 = vpop.f32.mrf.mxu0
      %v1169 = vadd.f32 0.0, %v1168
      %1170 = vmatmul.f32.gmra.mxu0 %v1056
      %v1171 = vpop.f32.mrf.mxu0
      %v1172 = vadd.f32 0.0, %v1171
      %1173 = vmatmul.f32.gmra.mxu0 %v1057
      %v1174 = vpop.f32.mrf.mxu0
      %v1175 = vadd.f32 0.0, %v1174
      %1176 = vmatmul.f32.gmra.mxu0 %v1058
      %v1177 = vpop.f32.mrf.mxu0
      %v1178 = vadd.f32 0.0, %v1177
      %1179 = vdwg.mxu0
      %1180 = vmatpush.msra.mxu0 %v1074
      %1181 = vmatpush.msra.mxu0 %v1073
      %1182 = vmatpush.msra.mxu0 %v1072
      %1183 = vmatpush.msra.mxu0 %v1071
      %1184 = vmatpush.msra.mxu0 %v1070
      %1185 = vmatpush.msra.mxu0 %v1069
      %1186 = vmatpush.msra.mxu0 %v1068
      %1187 = vmatpush.msra.mxu0 %v1067
      %1188 = vmatpush.msra.mxu0 %v1066
      %1189 = vmatpush.msra.mxu0 %v1065
      %1190 = vmatpush.msra.mxu0 %v1064
      %1191 = vmatpush.msra.mxu0 %v1063
      %1192 = vmatpush.msra.mxu0 %v1062
      %1193 = vmatpush.msra.mxu0 %v1061
      %1194 = vmatpush.msra.mxu0 %v1060
      %1195 = vmatpush.msra.mxu0 %v1059
      %1196 = vmatmul.f32.gmra.mxu0 %v1011
      %v1197 = vpop.f32.mrf.mxu0
      %v1198 = vadd.f32 %v1109, %v1197
      %1199 = vmatmul.f32.gmra.mxu0 %v1012
      %v1200 = vpop.f32.mrf.mxu0
      %v1201 = vadd.f32 %v1112, %v1200
      %1202 = vmatmul.f32.gmra.mxu0 %v1013
      %v1203 = vpop.f32.mrf.mxu0
      %v1204 = vadd.f32 %v1115, %v1203
      %1205 = vmatmul.f32.gmra.mxu0 %v1014
      %v1206 = vpop.f32.mrf.mxu0
      %v1207 = vadd.f32 %v1118, %v1206
      %1208 = vmatmul.f32.gmra.mxu0 %v1015
      %v1209 = vpop.f32.mrf.mxu0
      %v1210 = vadd.f32 %v1121, %v1209
      %1211 = vmatmul.f32.gmra.mxu0 %v1016
      %v1212 = vpop.f32.mrf.mxu0
      %v1213 = vadd.f32 %v1124, %v1212
      %1214 = vmatmul.f32.gmra.mxu0 %v1017
      %v1215 = vpop.f32.mrf.mxu0
      %v1216 = vadd.f32 %v1127, %v1215
      %1217 = vmatmul.f32.gmra.mxu0 %v1018
      %v1218 = vpop.f32.mrf.mxu0
      %v1219 = vadd.f32 %v1130, %v1218
      %1220 = vmatmul.f32.gmra.mxu0 %v1019
      %v1221 = vpop.f32.mrf.mxu0
      %v1222 = vadd.f32 %v1133, %v1221
      %1223 = vmatmul.f32.gmra.mxu0 %v1020
      %v1224 = vpop.f32.mrf.mxu0
      %v1225 = vadd.f32 %v1136, %v1224
      %1226 = vmatmul.f32.gmra.mxu0 %v1021
      %v1227 = vpop.f32.mrf.mxu0
      %v1228 = vadd.f32 %v1139, %v1227
      %1229 = vmatmul.f32.gmra.mxu0 %v1022
      %v1230 = vpop.f32.mrf.mxu0
      %v1231 = vadd.f32 %v1142, %v1230
      %1232 = vmatmul.f32.gmra.mxu0 %v1023
      %v1233 = vpop.f32.mrf.mxu0
      %v1234 = vadd.f32 %v1145, %v1233
      %1235 = vmatmul.f32.gmra.mxu0 %v1024
      %v1236 = vpop.f32.mrf.mxu0
      %v1237 = vadd.f32 %v1148, %v1236
      %1238 = vmatmul.f32.gmra.mxu0 %v1025
      %v1239 = vpop.f32.mrf.mxu0
      %v1240 = vadd.f32 %v1151, %v1239
      %1241 = vmatmul.f32.gmra.mxu0 %v1026
      %v1242 = vpop.f32.mrf.mxu0
      %v1243 = vadd.f32 %v1154, %v1242
      %1244 = vmatmul.f32.gmra.mxu0 %v1027
      %v1245 = vpop.f32.mrf.mxu0
      %v1246 = vadd.f32 %v1157, %v1245
      %1247 = vmatmul.f32.gmra.mxu0 %v1028
      %v1248 = vpop.f32.mrf.mxu0
      %v1249 = vadd.f32 %v1160, %v1248
      %1250 = vmatmul.f32.gmra.mxu0 %v1029
      %v1251 = vpop.f32.mrf.mxu0
      %v1252 = vadd.f32 %v1163, %v1251
      %1253 = vmatmul.f32.gmra.mxu0 %v1030
      %v1254 = vpop.f32.mrf.mxu0
      %v1255 = vadd.f32 %v1166, %v1254
      %1256 = vmatmul.f32.gmra.mxu0 %v1031
      %v1257 = vpop.f32.mrf.mxu0
      %v1258 = vadd.f32 %v1169, %v1257
      %1259 = vmatmul.f32.gmra.mxu0 %v1032
      %v1260 = vpop.f32.mrf.mxu0
      %v1261 = vadd.f32 %v1172, %v1260
      %1262 = vmatmul.f32.gmra.mxu0 %v1033
      %v1263 = vpop.f32.mrf.mxu0
      %v1264 = vadd.f32 %v1175, %v1263
      %1265 = vmatmul.f32.gmra.mxu0 %v1034
      %v1266 = vpop.f32.mrf.mxu0
      %v1267 = vadd.f32 %v1178, %v1266
      %1268 = vdwg.mxu0
      %v1269 = vld [vmem:[%s745] sm:$0x1]
      %v1271 = vperm.slane %v1269, 0
      %v1273 = vadd.f32 %v1198, %v1271
      %v1274 = vadd.f32 %v1201, %v1271
      %v1275 = vadd.f32 %v1204, %v1271
      %v1276 = vadd.f32 %v1207, %v1271
      %v1277 = vadd.f32 %v1210, %v1271
      %v1278 = vadd.f32 %v1213, %v1271
      %v1279 = vadd.f32 %v1216, %v1271
      %v1280 = vadd.f32 %v1219, %v1271
      %v1281 = vadd.f32 %v1222, %v1271
      %v1282 = vadd.f32 %v1225, %v1271
      %v1283 = vadd.f32 %v1228, %v1271
      %v1284 = vadd.f32 %v1231, %v1271
      %v1285 = vadd.f32 %v1234, %v1271
      %v1286 = vadd.f32 %v1237, %v1271
      %v1287 = vadd.f32 %v1240, %v1271
      %v1288 = vadd.f32 %v1243, %v1271
      %v1289 = vadd.f32 %v1246, %v1271
      %v1290 = vadd.f32 %v1249, %v1271
      %v1291 = vadd.f32 %v1252, %v1271
      %v1292 = vadd.f32 %v1255, %v1271
      %v1293 = vadd.f32 %v1258, %v1271
      %v1294 = vadd.f32 %v1261, %v1271
      %v1295 = vadd.f32 %v1264, %v1271
      %v1296 = vadd.f32 %v1267, %v1271
      %v1297 = vmax.f32 %v1273, 0.0
      %v1298 = vmax.f32 %v1274, 0.0
      %v1299 = vmax.f32 %v1275, 0.0
      %v1300 = vmax.f32 %v1276, 0.0
      %v1301 = vmax.f32 %v1277, 0.0
      %v1302 = vmax.f32 %v1278, 0.0
      %v1303 = vmax.f32 %v1279, 0.0
      %v1304 = vmax.f32 %v1280, 0.0
      %v1305 = vmax.f32 %v1281, 0.0
      %v1306 = vmax.f32 %v1282, 0.0
      %v1307 = vmax.f32 %v1283, 0.0
      %v1308 = vmax.f32 %v1284, 0.0
      %v1309 = vmax.f32 %v1285, 0.0
      %v1310 = vmax.f32 %v1286, 0.0
      %v1311 = vmax.f32 %v1287, 0.0
      %v1312 = vmax.f32 %v1288, 0.0
      %v1313 = vmax.f32 %v1289, 0.0
      %v1314 = vmax.f32 %v1290, 0.0
      %v1315 = vmax.f32 %v1291, 0.0
      %v1316 = vmax.f32 %v1292, 0.0
      %v1317 = vmax.f32 %v1293, 0.0
      %v1318 = vmax.f32 %v1294, 0.0
      %v1319 = vmax.f32 %v1295, 0.0
      %v1320 = vmax.f32 %v1296, 0.0
      %v1321 = vld [vmem:[%s750] sm:$0xff]
      %v1322 = vld [vmem:[%s750 + $0x8] sm:$0xff]
      %v1323 = vld [vmem:[%s750 + $0x10] sm:$0xff]
      %v1324 = vld [vmem:[%s750 + $0x18] sm:$0xff]
      %v1325 = vld [vmem:[%s750 + $0x20] sm:$0xff]
      %v1326 = vld [vmem:[%s750 + $0x28] sm:$0xff]
      %v1327 = vld [vmem:[%s750 + $0x30] sm:$0xff]
      %v1328 = vld [vmem:[%s750 + $0x38] sm:$0xff]
      %v1329 = vld [vmem:[%s750 + $0x40] sm:$0xff]
      %v1330 = vld [vmem:[%s750 + $0x48] sm:$0xff]
      %v1331 = vld [vmem:[%s750 + $0x50] sm:$0xff]
      %v1332 = vld [vmem:[%s750 + $0x58] sm:$0xff]
      %v1333 = vld [vmem:[%s750 + $0x60] sm:$0xff]
      %v1334 = vld [vmem:[%s750 + $0x68] sm:$0xff]
      %v1335 = vld [vmem:[%s750 + $0x70] sm:$0xff]
      %v1336 = vld [vmem:[%s750 + $0x78] sm:$0xff]
      %v1337 = vld [vmem:[%s753] sm:$0x1]
      %v1339 = vperm.slane %v1337, 0
      %1341 = vmatpush.msra.mxu0 %v1336
      %1342 = vmatpush.msra.mxu0 %v1335
      %1343 = vmatpush.msra.mxu0 %v1334
      %1344 = vmatpush.msra.mxu0 %v1333
      %1345 = vmatpush.msra.mxu0 %v1332
      %1346 = vmatpush.msra.mxu0 %v1331
      %1347 = vmatpush.msra.mxu0 %v1330
      %1348 = vmatpush.msra.mxu0 %v1329
      %1349 = vmatpush.msra.mxu0 %v1328
      %1350 = vmatpush.msra.mxu0 %v1327
      %1351 = vmatpush.msra.mxu0 %v1326
      %1352 = vmatpush.msra.mxu0 %v1325
      %1353 = vmatpush.msra.mxu0 %v1324
      %1354 = vmatpush.msra.mxu0 %v1323
      %1355 = vmatpush.msra.mxu0 %v1322
      %1356 = vmatpush.msra.mxu0 %v1321
      %1357 = vmatmul.f32.gmra.mxu0 %v1297
      %v1358 = vpop.f32.mrf.mxu0
      %v1359 = vadd.f32 %v1339, %v1358
      %1360 = vmatmul.f32.gmra.mxu0 %v1298
      %v1361 = vpop.f32.mrf.mxu0
      %v1362 = vadd.f32 %v1339, %v1361
      %1363 = vmatmul.f32.gmra.mxu0 %v1299
      %v1364 = vpop.f32.mrf.mxu0
      %v1365 = vadd.f32 %v1339, %v1364
      %1366 = vmatmul.f32.gmra.mxu0 %v1300
      %v1367 = vpop.f32.mrf.mxu0
      %v1368 = vadd.f32 %v1339, %v1367
      %1369 = vmatmul.f32.gmra.mxu0 %v1301
      %v1370 = vpop.f32.mrf.mxu0
      %v1371 = vadd.f32 %v1339, %v1370
      %1372 = vmatmul.f32.gmra.mxu0 %v1302
      %v1373 = vpop.f32.mrf.mxu0
      %v1374 = vadd.f32 %v1339, %v1373
      %1375 = vmatmul.f32.gmra.mxu0 %v1303
      %v1376 = vpop.f32.mrf.mxu0
      %v1377 = vadd.f32 %v1339, %v1376
      %1378 = vmatmul.f32.gmra.mxu0 %v1304
      %v1379 = vpop.f32.mrf.mxu0
      %v1380 = vadd.f32 %v1339, %v1379
      %1381 = vmatmul.f32.gmra.mxu0 %v1305
      %v1382 = vpop.f32.mrf.mxu0
      %v1383 = vadd.f32 %v1339, %v1382
      %1384 = vmatmul.f32.gmra.mxu0 %v1306
      %v1385 = vpop.f32.mrf.mxu0
      %v1386 = vadd.f32 %v1339, %v1385
      %1387 = vmatmul.f32.gmra.mxu0 %v1307
      %v1388 = vpop.f32.mrf.mxu0
      %v1389 = vadd.f32 %v1339, %v1388
      %1390 = vmatmul.f32.gmra.mxu0 %v1308
      %v1391 = vpop.f32.mrf.mxu0
      %v1392 = vadd.f32 %v1339, %v1391
      %1393 = vmatmul.f32.gmra.mxu0 %v1309
      %v1394 = vpop.f32.mrf.mxu0
      %v1395 = vadd.f32 %v1339, %v1394
      %1396 = vmatmul.f32.gmra.mxu0 %v1310
      %v1397 = vpop.f32.mrf.mxu0
      %v1398 = vadd.f32 %v1339, %v1397
      %1399 = vmatmul.f32.gmra.mxu0 %v1311
      %v1400 = vpop.f32.mrf.mxu0
      %v1401 = vadd.f32 %v1339, %v1400
      %1402 = vmatmul.f32.gmra.mxu0 %v1312
      %v1403 = vpop.f32.mrf.mxu0
      %v1404 = vadd.f32 %v1339, %v1403
      %1405 = vmatmul.f32.gmra.mxu0 %v1313
      %v1406 = vpop.f32.mrf.mxu0
      %v1407 = vadd.f32 %v1339, %v1406
      %1408 = vmatmul.f32.gmra.mxu0 %v1314
      %v1409 = vpop.f32.mrf.mxu0
      %v1410 = vadd.f32 %v1339, %v1409
      %1411 = vmatmul.f32.gmra.mxu0 %v1315
      %v1412 = vpop.f32.mrf.mxu0
      %v1413 = vadd.f32 %v1339, %v1412
      %1414 = vmatmul.f32.gmra.mxu0 %v1316
      %v1415 = vpop.f32.mrf.mxu0
      %v1416 = vadd.f32 %v1339, %v1415
      %1417 = vmatmul.f32.gmra.mxu0 %v1317
      %v1418 = vpop.f32.mrf.mxu0
      %v1419 = vadd.f32 %v1339, %v1418
      %1420 = vmatmul.f32.gmra.mxu0 %v1318
      %v1421 = vpop.f32.mrf.mxu0
      %v1422 = vadd.f32 %v1339, %v1421
      %1423 = vmatmul.f32.gmra.mxu0 %v1319
      %v1424 = vpop.f32.mrf.mxu0
      %v1425 = vadd.f32 %v1339, %v1424
      %1426 = vmatmul.f32.gmra.mxu0 %v1320
      %v1427 = vpop.f32.mrf.mxu0
      %v1428 = vadd.f32 %v1339, %v1427
      %1429 = vdwg.mxu0
      %v1430 = vmax.f32 %v1359, 0.0
      %v1431 = vmax.f32 %v1362, 0.0
      %v1432 = vmax.f32 %v1365, 0.0
      %v1433 = vmax.f32 %v1368, 0.0
      %v1434 = vmax.f32 %v1371, 0.0
      %v1435 = vmax.f32 %v1374, 0.0
      %v1436 = vmax.f32 %v1377, 0.0
      %v1437 = vmax.f32 %v1380, 0.0
      %v1438 = vmax.f32 %v1383, 0.0
      %v1439 = vmax.f32 %v1386, 0.0
      %v1440 = vmax.f32 %v1389, 0.0
      %v1441 = vmax.f32 %v1392, 0.0
      %v1442 = vmax.f32 %v1395, 0.0
      %v1443 = vmax.f32 %v1398, 0.0
      %v1444 = vmax.f32 %v1401, 0.0
      %v1445 = vmax.f32 %v1404, 0.0
      %v1446 = vmax.f32 %v1407, 0.0
      %v1447 = vmax.f32 %v1410, 0.0
      %v1448 = vmax.f32 %v1413, 0.0
      %v1449 = vmax.f32 %v1416, 0.0
      %v1450 = vmax.f32 %v1419, 0.0
      %v1451 = vmax.f32 %v1422, 0.0
      %v1452 = vmax.f32 %v1425, 0.0
      %v1453 = vmax.f32 %v1428, 0.0
      %v1454 = vld [vmem:[%s758] sm:$0xff]
      %v1455 = vld [vmem:[%s758 + $0x8] sm:$0xff]
      %v1456 = vld [vmem:[%s758 + $0x10] sm:$0xff]
      %v1457 = vld [vmem:[%s758 + $0x18] sm:$0xff]
      %v1458 = vld [vmem:[%s758 + $0x20] sm:$0xff]
      %v1459 = vld [vmem:[%s758 + $0x28] sm:$0xff]
      %v1460 = vld [vmem:[%s758 + $0x30] sm:$0xff]
      %v1461 = vld [vmem:[%s758 + $0x38] sm:$0xff]
      %v1462 = vld [vmem:[%s758 + $0x40] sm:$0xff]
      %v1463 = vld [vmem:[%s758 + $0x48] sm:$0xff]
      %v1464 = vld [vmem:[%s758 + $0x50] sm:$0xff]
      %v1465 = vld [vmem:[%s758 + $0x58] sm:$0xff]
      %v1466 = vld [vmem:[%s758 + $0x60] sm:$0xff]
      %v1467 = vld [vmem:[%s758 + $0x68] sm:$0xff]
      %v1468 = vld [vmem:[%s758 + $0x70] sm:$0xff]
      %v1469 = vld [vmem:[%s758 + $0x78] sm:$0xff]
      %v1470 = vld [vmem:[%s761] sm:$0x1]
      %v1472 = vperm.slane %v1470, 0
      %1474 = vmatpush.msra.mxu0 %v1469
      %1475 = vmatpush.msra.mxu0 %v1468
      %1476 = vmatpush.msra.mxu0 %v1467
      %1477 = vmatpush.msra.mxu0 %v1466
      %1478 = vmatpush.msra.mxu0 %v1465
      %1479 = vmatpush.msra.mxu0 %v1464
      %1480 = vmatpush.msra.mxu0 %v1463
      %1481 = vmatpush.msra.mxu0 %v1462
      %1482 = vmatpush.msra.mxu0 %v1461
      %1483 = vmatpush.msra.mxu0 %v1460
      %1484 = vmatpush.msra.mxu0 %v1459
      %1485 = vmatpush.msra.mxu0 %v1458
      %1486 = vmatpush.msra.mxu0 %v1457
      %1487 = vmatpush.msra.mxu0 %v1456
      %1488 = vmatpush.msra.mxu0 %v1455
      %1489 = vmatpush.msra.mxu0 %v1454
      %1490 = vmatmul.f32.gmra.mxu0 %v1430
      %v1491 = vpop.f32.mrf.mxu0
      %v1492 = vadd.f32 %v1472, %v1491
      %1493 = vmatmul.f32.gmra.mxu0 %v1431
      %v1494 = vpop.f32.mrf.mxu0
      %v1495 = vadd.f32 %v1472, %v1494
      %1496 = vmatmul.f32.gmra.mxu0 %v1432
      %v1497 = vpop.f32.mrf.mxu0
      %v1498 = vadd.f32 %v1472, %v1497
      %1499 = vmatmul.f32.gmra.mxu0 %v1433
      %v1500 = vpop.f32.mrf.mxu0
      %v1501 = vadd.f32 %v1472, %v1500
      %1502 = vmatmul.f32.gmra.mxu0 %v1434
      %v1503 = vpop.f32.mrf.mxu0
      %v1504 = vadd.f32 %v1472, %v1503
      %1505 = vmatmul.f32.gmra.mxu0 %v1435
      %v1506 = vpop.f32.mrf.mxu0
      %v1507 = vadd.f32 %v1472, %v1506
      %1508 = vmatmul.f32.gmra.mxu0 %v1436
      %v1509 = vpop.f32.mrf.mxu0
      %v1510 = vadd.f32 %v1472, %v1509
      %1511 = vmatmul.f32.gmra.mxu0 %v1437
      %v1512 = vpop.f32.mrf.mxu0
      %v1513 = vadd.f32 %v1472, %v1512
      %1514 = vmatmul.f32.gmra.mxu0 %v1438
      %v1515 = vpop.f32.mrf.mxu0
      %v1516 = vadd.f32 %v1472, %v1515
      %1517 = vmatmul.f32.gmra.mxu0 %v1439
      %v1518 = vpop.f32.mrf.mxu0
      %v1519 = vadd.f32 %v1472, %v1518
      %1520 = vmatmul.f32.gmra.mxu0 %v1440
      %v1521 = vpop.f32.mrf.mxu0
      %v1522 = vadd.f32 %v1472, %v1521
      %1523 = vmatmul.f32.gmra.mxu0 %v1441
      %v1524 = vpop.f32.mrf.mxu0
      %v1525 = vadd.f32 %v1472, %v1524
      %1526 = vmatmul.f32.gmra.mxu0 %v1442
      %v1527 = vpop.f32.mrf.mxu0
      %v1528 = vadd.f32 %v1472, %v1527
      %1529 = vmatmul.f32.gmra.mxu0 %v1443
      %v1530 = vpop.f32.mrf.mxu0
      %v1531 = vadd.f32 %v1472, %v1530
      %1532 = vmatmul.f32.gmra.mxu0 %v1444
      %v1533 = vpop.f32.mrf.mxu0
      %v1534 = vadd.f32 %v1472, %v1533
      %1535 = vmatmul.f32.gmra.mxu0 %v1445
      %v1536 = vpop.f32.mrf.mxu0
      %v1537 = vadd.f32 %v1472, %v1536
      %1538 = vmatmul.f32.gmra.mxu0 %v1446
      %v1539 = vpop.f32.mrf.mxu0
      %v1540 = vadd.f32 %v1472, %v1539
      %1541 = vmatmul.f32.gmra.mxu0 %v1447
      %v1542 = vpop.f32.mrf.mxu0
      %v1543 = vadd.f32 %v1472, %v1542
      %1544 = vmatmul.f32.gmra.mxu0 %v1448
      %v1545 = vpop.f32.mrf.mxu0
      %v1546 = vadd.f32 %v1472, %v1545
      %1547 = vmatmul.f32.gmra.mxu0 %v1449
      %v1548 = vpop.f32.mrf.mxu0
      %v1549 = vadd.f32 %v1472, %v1548
      %1550 = vmatmul.f32.gmra.mxu0 %v1450
      %v1551 = vpop.f32.mrf.mxu0
      %v1552 = vadd.f32 %v1472, %v1551
      %1553 = vmatmul.f32.gmra.mxu0 %v1451
      %v1554 = vpop.f32.mrf.mxu0
      %v1555 = vadd.f32 %v1472, %v1554
      %1556 = vmatmul.f32.gmra.mxu0 %v1452
      %v1557 = vpop.f32.mrf.mxu0
      %v1558 = vadd.f32 %v1472, %v1557
      %1559 = vmatmul.f32.gmra.mxu0 %v1453
      %v1560 = vpop.f32.mrf.mxu0
      %v1561 = vadd.f32 %v1472, %v1560
      %1562 = vdwg.mxu0
      %v1563 = vmax.f32 %v1492, 0.0
      %v1564 = vmax.f32 %v1495, 0.0
      %v1565 = vmax.f32 %v1498, 0.0
      %v1566 = vmax.f32 %v1501, 0.0
      %v1567 = vmax.f32 %v1504, 0.0
      %v1568 = vmax.f32 %v1507, 0.0
      %v1569 = vmax.f32 %v1510, 0.0
      %v1570 = vmax.f32 %v1513, 0.0
      %v1571 = vmax.f32 %v1516, 0.0
      %v1572 = vmax.f32 %v1519, 0.0
      %v1573 = vmax.f32 %v1522, 0.0
      %v1574 = vmax.f32 %v1525, 0.0
      %v1575 = vmax.f32 %v1528, 0.0
      %v1576 = vmax.f32 %v1531, 0.0
      %v1577 = vmax.f32 %v1534, 0.0
      %v1578 = vmax.f32 %v1537, 0.0
      %v1579 = vmax.f32 %v1540, 0.0
      %v1580 = vmax.f32 %v1543, 0.0
      %v1581 = vmax.f32 %v1546, 0.0
      %v1582 = vmax.f32 %v1549, 0.0
      %v1583 = vmax.f32 %v1552, 0.0
      %v1584 = vmax.f32 %v1555, 0.0
      %v1585 = vmax.f32 %v1558, 0.0
      %v1586 = vmax.f32 %v1561, 0.0
      %v1587 = vld [vmem:[%s766] sm:$0xff]
      %v1588 = vld [vmem:[%s766 + $0x8] sm:$0xff]
      %v1589 = vld [vmem:[%s766 + $0x10] sm:$0xff]
      %v1590 = vld [vmem:[%s766 + $0x18] sm:$0xff]
      %v1591 = vld [vmem:[%s766 + $0x20] sm:$0xff]
      %v1592 = vld [vmem:[%s766 + $0x28] sm:$0xff]
      %v1593 = vld [vmem:[%s766 + $0x30] sm:$0xff]
      %v1594 = vld [vmem:[%s766 + $0x38] sm:$0xff]
      %v1595 = vld [vmem:[%s766 + $0x40] sm:$0xff]
      %v1596 = vld [vmem:[%s766 + $0x48] sm:$0xff]
      %v1597 = vld [vmem:[%s766 + $0x50] sm:$0xff]
      %v1598 = vld [vmem:[%s766 + $0x58] sm:$0xff]
      %v1599 = vld [vmem:[%s766 + $0x60] sm:$0xff]
      %v1600 = vld [vmem:[%s766 + $0x68] sm:$0xff]
      %v1601 = vld [vmem:[%s766 + $0x70] sm:$0xff]
      %v1602 = vld [vmem:[%s766 + $0x78] sm:$0xff]
      %v1603 = vld [vmem:[%s769] sm:$0x1]
      %v1605 = vperm.slane %v1603, 0
      %1607 = vmatpush.msra.mxu0 %v1602
      %1608 = vmatpush.msra.mxu0 %v1601
      %1609 = vmatpush.msra.mxu0 %v1600
      %1610 = vmatpush.msra.mxu0 %v1599
      %1611 = vmatpush.msra.mxu0 %v1598
      %1612 = vmatpush.msra.mxu0 %v1597
      %1613 = vmatpush.msra.mxu0 %v1596
      %1614 = vmatpush.msra.mxu0 %v1595
      %1615 = vmatpush.msra.mxu0 %v1594
      %1616 = vmatpush.msra.mxu0 %v1593
      %1617 = vmatpush.msra.mxu0 %v1592
      %1618 = vmatpush.msra.mxu0 %v1591
      %1619 = vmatpush.msra.mxu0 %v1590
      %1620 = vmatpush.msra.mxu0 %v1589
      %1621 = vmatpush.msra.mxu0 %v1588
      %1622 = vmatpush.msra.mxu0 %v1587
      %1623 = vmatmul.f32.gmra.mxu0 %v1563
      %v1624 = vpop.f32.mrf.mxu0
      %v1625 = vadd.f32 %v1605, %v1624
      %1626 = vmatmul.f32.gmra.mxu0 %v1564
      %v1627 = vpop.f32.mrf.mxu0
      %v1628 = vadd.f32 %v1605, %v1627
      %1629 = vmatmul.f32.gmra.mxu0 %v1565
      %v1630 = vpop.f32.mrf.mxu0
      %v1631 = vadd.f32 %v1605, %v1630
      %1632 = vmatmul.f32.gmra.mxu0 %v1566
      %v1633 = vpop.f32.mrf.mxu0
      %v1634 = vadd.f32 %v1605, %v1633
      %1635 = vmatmul.f32.gmra.mxu0 %v1567
      %v1636 = vpop.f32.mrf.mxu0
      %v1637 = vadd.f32 %v1605, %v1636
      %1638 = vmatmul.f32.gmra.mxu0 %v1568
      %v1639 = vpop.f32.mrf.mxu0
      %v1640 = vadd.f32 %v1605, %v1639
      %1641 = vmatmul.f32.gmra.mxu0 %v1569
      %v1642 = vpop.f32.mrf.mxu0
      %v1643 = vadd.f32 %v1605, %v1642
      %1644 = vmatmul.f32.gmra.mxu0 %v1570
      %v1645 = vpop.f32.mrf.mxu0
      %v1646 = vadd.f32 %v1605, %v1645
      %1647 = vmatmul.f32.gmra.mxu0 %v1571
      %v1648 = vpop.f32.mrf.mxu0
      %v1649 = vadd.f32 %v1605, %v1648
      %1650 = vmatmul.f32.gmra.mxu0 %v1572
      %v1651 = vpop.f32.mrf.mxu0
      %v1652 = vadd.f32 %v1605, %v1651
      %1653 = vmatmul.f32.gmra.mxu0 %v1573
      %v1654 = vpop.f32.mrf.mxu0
      %v1655 = vadd.f32 %v1605, %v1654
      %1656 = vmatmul.f32.gmra.mxu0 %v1574
      %v1657 = vpop.f32.mrf.mxu0
      %v1658 = vadd.f32 %v1605, %v1657
      %1659 = vmatmul.f32.gmra.mxu0 %v1575
      %v1660 = vpop.f32.mrf.mxu0
      %v1661 = vadd.f32 %v1605, %v1660
      %1662 = vmatmul.f32.gmra.mxu0 %v1576
      %v1663 = vpop.f32.mrf.mxu0
      %v1664 = vadd.f32 %v1605, %v1663
      %1665 = vmatmul.f32.gmra.mxu0 %v1577
      %v1666 = vpop.f32.mrf.mxu0
      %v1667 = vadd.f32 %v1605, %v1666
      %1668 = vmatmul.f32.gmra.mxu0 %v1578
      %v1669 = vpop.f32.mrf.mxu0
      %v1670 = vadd.f32 %v1605, %v1669
      %1671 = vmatmul.f32.gmra.mxu0 %v1579
      %v1672 = vpop.f32.mrf.mxu0
      %v1673 = vadd.f32 %v1605, %v1672
      %1674 = vmatmul.f32.gmra.mxu0 %v1580
      %v1675 = vpop.f32.mrf.mxu0
      %v1676 = vadd.f32 %v1605, %v1675
      %1677 = vmatmul.f32.gmra.mxu0 %v1581
      %v1678 = vpop.f32.mrf.mxu0
      %v1679 = vadd.f32 %v1605, %v1678
      %1680 = vmatmul.f32.gmra.mxu0 %v1582
      %v1681 = vpop.f32.mrf.mxu0
      %v1682 = vadd.f32 %v1605, %v1681
      %1683 = vmatmul.f32.gmra.mxu0 %v1583
      %v1684 = vpop.f32.mrf.mxu0
      %v1685 = vadd.f32 %v1605, %v1684
      %1686 = vmatmul.f32.gmra.mxu0 %v1584
      %v1687 = vpop.f32.mrf.mxu0
      %v1688 = vadd.f32 %v1605, %v1687
      %1689 = vmatmul.f32.gmra.mxu0 %v1585
      %v1690 = vpop.f32.mrf.mxu0
      %v1691 = vadd.f32 %v1605, %v1690
      %1692 = vmatmul.f32.gmra.mxu0 %v1586
      %v1693 = vpop.f32.mrf.mxu0
      %v1694 = vadd.f32 %v1605, %v1693
      %1695 = vdwg.mxu0
      %v1696 = vld [vmem:[%s732] sm:$0xff]
      %v1697 = vld [vmem:[%s732 + $0x8] sm:$0xff]
      %v1698 = vld [vmem:[%s732 + $0x10] sm:$0xff]
      %v1699 = vld [vmem:[%s732 + $0x18] sm:$0xff]
      %v1700 = vld [vmem:[%s732 + $0x20] sm:$0xff]
      %v1701 = vld [vmem:[%s732 + $0x28] sm:$0xff]
      %v1702 = vld [vmem:[%s732 + $0x30] sm:$0xff]
      %v1703 = vld [vmem:[%s732 + $0x38] sm:$0xff]
      %vm1704 = vcmask 523264
      %v1706 = vsel %vm1704, %v1697, 0
      %v1709 = vsel %vm1704, %v1699, 0
      %v1712 = vsel %vm1704, %v1701, 0
      %v1715 = vsel %vm1704, %v1703, 0
      %1717 = vmatpush.msra.mxu0 %v1670
      %1718 = vmatpush.msra.mxu0 %v1667
      %1719 = vmatpush.msra.mxu0 %v1664
      %1720 = vmatpush.msra.mxu0 %v1661
      %1721 = vmatpush.msra.mxu0 %v1658
      %1722 = vmatpush.msra.mxu0 %v1655
      %1723 = vmatpush.msra.mxu0 %v1652
      %1724 = vmatpush.msra.mxu0 %v1649
      %1725 = vmatpush.msra.mxu0 %v1646
      %1726 = vmatpush.msra.mxu0 %v1643
      %1727 = vmatpush.msra.mxu0 %v1640
      %1728 = vmatpush.msra.mxu0 %v1637
      %1729 = vmatpush.msra.mxu0 %v1634
      %1730 = vmatpush.msra.mxu0 %v1631
      %1731 = vmatpush.msra.mxu0 %v1628
      %1732 = vmatpush.msra.mxu0 %v1625
      %1733 = vmatmul.f32.gmra.mxu0 %v1696
      %v1734 = vpop.f32.mrf.mxu0
      %v1735 = vadd.f32 0.0, %v1734
      %1736 = vmatmul.f32.gmra.mxu0 %v1698
      %v1737 = vpop.f32.mrf.mxu0
      %v1738 = vadd.f32 0.0, %v1737
      %1739 = vmatmul.f32.gmra.mxu0 %v1700
      %v1740 = vpop.f32.mrf.mxu0
      %v1741 = vadd.f32 0.0, %v1740
      %1742 = vmatmul.f32.gmra.mxu0 %v1702
      %v1743 = vpop.f32.mrf.mxu0
      %v1744 = vadd.f32 0.0, %v1743
      %1745 = vdwg.mxu0
      %1746 = vmatpush.msra.mxu0 0.0
      %1747 = vmatpush.msra.mxu0 0.0
      %1748 = vmatpush.msra.mxu0 0.0
      %1749 = vmatpush.msra.mxu0 0.0
      %1750 = vmatpush.msra.mxu0 0.0
      %1751 = vmatpush.msra.mxu0 0.0
      %1752 = vmatpush.msra.mxu0 0.0
      %1753 = vmatpush.msra.mxu0 0.0
      %1754 = vmatpush.msra.mxu0 %v1694
      %1755 = vmatpush.msra.mxu0 %v1691
      %1756 = vmatpush.msra.mxu0 %v1688
      %1757 = vmatpush.msra.mxu0 %v1685
      %1758 = vmatpush.msra.mxu0 %v1682
      %1759 = vmatpush.msra.mxu0 %v1679
      %1760 = vmatpush.msra.mxu0 %v1676
      %1761 = vmatpush.msra.mxu0 %v1673
      %1762 = vmatmul.f32.gmra.mxu0 %v1706
      %v1763 = vpop.f32.mrf.mxu0
      %v1764 = vadd.f32 %v1735, %v1763
      %1765 = vmatmul.f32.gmra.mxu0 %v1709
      %v1766 = vpop.f32.mrf.mxu0
      %v1767 = vadd.f32 %v1738, %v1766
      %1768 = vmatmul.f32.gmra.mxu0 %v1712
      %v1769 = vpop.f32.mrf.mxu0
      %v1770 = vadd.f32 %v1741, %v1769
      %1771 = vmatmul.f32.gmra.mxu0 %v1715
      %v1772 = vpop.f32.mrf.mxu0
      %v1773 = vadd.f32 %v1744, %v1772
      %1774 = vdwg.mxu0
      %v1775 = vld [vmem:[#allocation2] sm:$0xff]
      %v1776 = vld [vmem:[#allocation2 + $0x8] sm:$0xff]
      %v1777 = vld [vmem:[#allocation2 + $0x10] sm:$0xff]
      %v1778 = vld [vmem:[#allocation2 + $0x18] sm:$0xff]
      %v1779 = vld [vmem:[#allocation2 + $0x20] sm:$0xff]
      %v1780 = vld [vmem:[#allocation2 + $0x28] sm:$0xff]
      %v1781 = vld [vmem:[#allocation2 + $0x30] sm:$0xff]
      %v1782 = vld [vmem:[#allocation2 + $0x38] sm:$0xff]
      %v1783 = vld [vmem:[#allocation2 + $0x40] sm:$0xff]
      %v1784 = vld [vmem:[#allocation2 + $0x48] sm:$0xff]
      %v1785 = vld [vmem:[#allocation2 + $0x50] sm:$0xff]
      %v1786 = vld [vmem:[#allocation2 + $0x58] sm:$0xff]
      %v1787 = vld [vmem:[#allocation2 + $0x60] sm:$0xff]
      %v1788 = vld [vmem:[#allocation2 + $0x68] sm:$0xff]
      %v1789 = vld [vmem:[#allocation2 + $0x70] sm:$0xff]
      %v1790 = vld [vmem:[#allocation2 + $0x78] sm:$0xff]
      %v1791 = vld [vmem:[%s774] sm:$0xff]
      %v1792 = vld [vmem:[%s774 + $0x8] sm:$0xff]
      %v1793 = vld [vmem:[%s774 + $0x10] sm:$0xff]
      %v1794 = vld [vmem:[%s774 + $0x18] sm:$0xff]
      %v1795 = vld [vmem:[%s774 + $0x20] sm:$0xff]
      %v1796 = vld [vmem:[%s774 + $0x28] sm:$0xff]
      %v1797 = vld [vmem:[%s774 + $0x30] sm:$0xff]
      %v1798 = vld [vmem:[%s774 + $0x38] sm:$0xff]
      %v1799 = vld [vmem:[%s774 + $0x40] sm:$0xff]
      %v1800 = vld [vmem:[%s774 + $0x48] sm:$0xff]
      %v1801 = vld [vmem:[%s774 + $0x50] sm:$0xff]
      %v1802 = vld [vmem:[%s774 + $0x58] sm:$0xff]
      %v1803 = vld [vmem:[%s774 + $0x60] sm:$0xff]
      %v1804 = vld [vmem:[%s774 + $0x68] sm:$0xff]
      %v1805 = vld [vmem:[%s774 + $0x70] sm:$0xff]
      %v1806 = vld [vmem:[%s774 + $0x78] sm:$0xff]
      %v1807 = vld [vmem:[%s774 + $0x80] sm:$0xff]
      %v1808 = vld [vmem:[%s774 + $0x88] sm:$0xff]
      %v1809 = vld [vmem:[%s774 + $0x90] sm:$0xff]
      %v1810 = vld [vmem:[%s774 + $0x98] sm:$0xff]
      %v1811 = vld [vmem:[%s774 + $0xa0] sm:$0xff]
      %v1812 = vld [vmem:[%s774 + $0xa8] sm:$0xff]
      %v1813 = vld [vmem:[%s774 + $0xb0] sm:$0xff]
      %v1814 = vld [vmem:[%s774 + $0xb8] sm:$0xff]
      %v1815 = vld [vmem:[%s774 + $0xc0] sm:$0xff]
      %v1816 = vld [vmem:[%s774 + $0xc8] sm:$0xff]
      %v1817 = vld [vmem:[%s774 + $0xd0] sm:$0xff]
      %v1818 = vld [vmem:[%s774 + $0xd8] sm:$0xff]
      %v1819 = vld [vmem:[%s774 + $0xe0] sm:$0xff]
      %v1820 = vld [vmem:[%s774 + $0xe8] sm:$0xff]
      %v1821 = vld [vmem:[%s774 + $0xf0] sm:$0xff]
      %v1822 = vld [vmem:[%s774 + $0xf8] sm:$0xff]
      %v1823 = vld [vmem:[%s774 + $0x100] sm:$0xff]
      %v1824 = vld [vmem:[%s774 + $0x108] sm:$0xff]
      %v1825 = vld [vmem:[%s774 + $0x110] sm:$0xff]
      %v1826 = vld [vmem:[%s774 + $0x118] sm:$0xff]
      %v1827 = vld [vmem:[%s774 + $0x120] sm:$0xff]
      %v1828 = vld [vmem:[%s774 + $0x128] sm:$0xff]
      %v1829 = vld [vmem:[%s774 + $0x130] sm:$0xff]
      %v1830 = vld [vmem:[%s774 + $0x138] sm:$0xff]
      %v1831 = vld [vmem:[%s774 + $0x140] sm:$0xff]
      %v1832 = vld [vmem:[%s774 + $0x148] sm:$0xff]
      %v1833 = vld [vmem:[%s774 + $0x150] sm:$0xff]
      %v1834 = vld [vmem:[%s774 + $0x158] sm:$0xff]
      %v1835 = vld [vmem:[%s774 + $0x160] sm:$0xff]
      %v1836 = vld [vmem:[%s774 + $0x168] sm:$0xff]
      %v1837 = vld [vmem:[%s774 + $0x170] sm:$0xff]
      %v1838 = vld [vmem:[%s774 + $0x178] sm:$0xff]
      %v1839 = vld [vmem:[%s774 + $0x180] sm:$0xff]
      %v1840 = vld [vmem:[%s774 + $0x188] sm:$0xff]
      %v1841 = vld [vmem:[%s774 + $0x190] sm:$0xff]
      %v1842 = vld [vmem:[%s774 + $0x198] sm:$0xff]
      %v1843 = vld [vmem:[%s774 + $0x1a0] sm:$0xff]
      %v1844 = vld [vmem:[%s774 + $0x1a8] sm:$0xff]
      %v1845 = vld [vmem:[%s774 + $0x1b0] sm:$0xff]
      %v1846 = vld [vmem:[%s774 + $0x1b8] sm:$0xff]
      %v1847 = vld [vmem:[%s774 + $0x1c0] sm:$0xff]
      %v1848 = vld [vmem:[%s774 + $0x1c8] sm:$0xff]
      %v1849 = vld [vmem:[%s774 + $0x1d0] sm:$0xff]
      %v1850 = vld [vmem:[%s774 + $0x1d8] sm:$0xff]
      %v1851 = vld [vmem:[%s774 + $0x1e0] sm:$0xff]
      %v1852 = vld [vmem:[%s774 + $0x1e8] sm:$0xff]
      %v1853 = vld [vmem:[%s774 + $0x1f0] sm:$0xff]
      %v1854 = vld [vmem:[%s774 + $0x1f8] sm:$0xff]
      %1855 = vmatpush.msra.mxu0 %v1851
      %1856 = vmatpush.msra.mxu0 %v1847
      %1857 = vmatpush.msra.mxu0 %v1843
      %1858 = vmatpush.msra.mxu0 %v1839
      %1859 = vmatpush.msra.mxu0 %v1835
      %1860 = vmatpush.msra.mxu0 %v1831
      %1861 = vmatpush.msra.mxu0 %v1827
      %1862 = vmatpush.msra.mxu0 %v1823
      %1863 = vmatpush.msra.mxu0 %v1819
      %1864 = vmatpush.msra.mxu0 %v1815
      %1865 = vmatpush.msra.mxu0 %v1811
      %1866 = vmatpush.msra.mxu0 %v1807
      %1867 = vmatpush.msra.mxu0 %v1803
      %1868 = vmatpush.msra.mxu0 %v1799
      %1869 = vmatpush.msra.mxu0 %v1795
      %1870 = vmatpush.msra.mxu0 %v1791
      %1871 = vmatmul.f32.gmra.mxu0 %v1764
      %v1872 = vpop.f32.mrf.mxu0
      %v1873 = vadd.f32 0.0, %v1872
      %1874 = vmatmul.f32.gmra.mxu0 %v1767
      %v1875 = vpop.f32.mrf.mxu0
      %v1876 = vadd.f32 0.0, %v1875
      %1877 = vmatmul.f32.gmra.mxu0 %v1770
      %v1878 = vpop.f32.mrf.mxu0
      %v1879 = vadd.f32 0.0, %v1878
      %1880 = vmatmul.f32.gmra.mxu0 %v1773
      %v1881 = vpop.f32.mrf.mxu0
      %v1882 = vadd.f32 0.0, %v1881
      %1883 = vdwg.mxu0
      %1884 = vmatpush.msra.mxu0 %v1852
      %1885 = vmatpush.msra.mxu0 %v1848
      %1886 = vmatpush.msra.mxu0 %v1844
      %1887 = vmatpush.msra.mxu0 %v1840
      %1888 = vmatpush.msra.mxu0 %v1836
      %1889 = vmatpush.msra.mxu0 %v1832
      %1890 = vmatpush.msra.mxu0 %v1828
      %1891 = vmatpush.msra.mxu0 %v1824
      %1892 = vmatpush.msra.mxu0 %v1820
      %1893 = vmatpush.msra.mxu0 %v1816
      %1894 = vmatpush.msra.mxu0 %v1812
      %1895 = vmatpush.msra.mxu0 %v1808
      %1896 = vmatpush.msra.mxu0 %v1804
      %1897 = vmatpush.msra.mxu0 %v1800
      %1898 = vmatpush.msra.mxu0 %v1796
      %1899 = vmatpush.msra.mxu0 %v1792
      %1900 = vmatmul.f32.gmra.mxu0 %v1764
      %v1901 = vpop.f32.mrf.mxu0
      %v1902 = vadd.f32 0.0, %v1901
      %1903 = vmatmul.f32.gmra.mxu0 %v1767
      %v1904 = vpop.f32.mrf.mxu0
      %v1905 = vadd.f32 0.0, %v1904
      %1906 = vmatmul.f32.gmra.mxu0 %v1770
      %v1907 = vpop.f32.mrf.mxu0
      %v1908 = vadd.f32 0.0, %v1907
      %1909 = vmatmul.f32.gmra.mxu0 %v1773
      %v1910 = vpop.f32.mrf.mxu0
      %v1911 = vadd.f32 0.0, %v1910
      %1912 = vdwg.mxu0
      %1913 = vmatpush.msra.mxu0 %v1853
      %1914 = vmatpush.msra.mxu0 %v1849
      %1915 = vmatpush.msra.mxu0 %v1845
      %1916 = vmatpush.msra.mxu0 %v1841
      %1917 = vmatpush.msra.mxu0 %v1837
      %1918 = vmatpush.msra.mxu0 %v1833
      %1919 = vmatpush.msra.mxu0 %v1829
      %1920 = vmatpush.msra.mxu0 %v1825
      %1921 = vmatpush.msra.mxu0 %v1821
      %1922 = vmatpush.msra.mxu0 %v1817
      %1923 = vmatpush.msra.mxu0 %v1813
      %1924 = vmatpush.msra.mxu0 %v1809
      %1925 = vmatpush.msra.mxu0 %v1805
      %1926 = vmatpush.msra.mxu0 %v1801
      %1927 = vmatpush.msra.mxu0 %v1797
      %1928 = vmatpush.msra.mxu0 %v1793
      %1929 = vmatmul.f32.gmra.mxu0 %v1764
      %v1930 = vpop.f32.mrf.mxu0
      %v1931 = vadd.f32 0.0, %v1930
      %1932 = vmatmul.f32.gmra.mxu0 %v1767
      %v1933 = vpop.f32.mrf.mxu0
      %v1934 = vadd.f32 0.0, %v1933
      %1935 = vmatmul.f32.gmra.mxu0 %v1770
      %v1936 = vpop.f32.mrf.mxu0
      %v1937 = vadd.f32 0.0, %v1936
      %1938 = vmatmul.f32.gmra.mxu0 %v1773
      %v1939 = vpop.f32.mrf.mxu0
      %v1940 = vadd.f32 0.0, %v1939
      %1941 = vdwg.mxu0
      %1942 = vmatpush.msra.mxu0 %v1854
      %1943 = vmatpush.msra.mxu0 %v1850
      %1944 = vmatpush.msra.mxu0 %v1846
      %1945 = vmatpush.msra.mxu0 %v1842
      %1946 = vmatpush.msra.mxu0 %v1838
      %1947 = vmatpush.msra.mxu0 %v1834
      %1948 = vmatpush.msra.mxu0 %v1830
      %1949 = vmatpush.msra.mxu0 %v1826
      %1950 = vmatpush.msra.mxu0 %v1822
      %1951 = vmatpush.msra.mxu0 %v1818
      %1952 = vmatpush.msra.mxu0 %v1814
      %1953 = vmatpush.msra.mxu0 %v1810
      %1954 = vmatpush.msra.mxu0 %v1806
      %1955 = vmatpush.msra.mxu0 %v1802
      %1956 = vmatpush.msra.mxu0 %v1798
      %1957 = vmatpush.msra.mxu0 %v1794
      %1958 = vmatmul.f32.gmra.mxu0 %v1764
      %v1959 = vpop.f32.mrf.mxu0
      %v1960 = vadd.f32 0.0, %v1959
      %1961 = vmatmul.f32.gmra.mxu0 %v1767
      %v1962 = vpop.f32.mrf.mxu0
      %v1963 = vadd.f32 0.0, %v1962
      %1964 = vmatmul.f32.gmra.mxu0 %v1770
      %v1965 = vpop.f32.mrf.mxu0
      %v1966 = vadd.f32 0.0, %v1965
      %1967 = vmatmul.f32.gmra.mxu0 %v1773
      %v1968 = vpop.f32.mrf.mxu0
      %v1969 = vadd.f32 0.0, %v1968
      %1970 = vdwg.mxu0
      %v1971 = vadd.f32 %v1775, %v1873
      %v1972 = vadd.f32 %v1776, %v1902
      %v1973 = vadd.f32 %v1777, %v1931
      %v1974 = vadd.f32 %v1778, %v1960
      %v1975 = vadd.f32 %v1779, %v1876
      %v1976 = vadd.f32 %v1780, %v1905
      %v1977 = vadd.f32 %v1781, %v1934
      %v1978 = vadd.f32 %v1782, %v1963
      %v1979 = vadd.f32 %v1783, %v1879
      %v1980 = vadd.f32 %v1784, %v1908
      %v1981 = vadd.f32 %v1785, %v1937
      %v1982 = vadd.f32 %v1786, %v1966
      %v1983 = vadd.f32 %v1787, %v1882
      %v1984 = vadd.f32 %v1788, %v1911
      %v1985 = vadd.f32 %v1789, %v1940
      %v1986 = vadd.f32 %v1790, %v1969
      %1987 = vst [vmem:[#allocation2] sm:$0xff] %v1971
      %1988 = vst [vmem:[#allocation2 + $0x8] sm:$0xff] %v1972
      %1989 = vst [vmem:[#allocation2 + $0x10] sm:$0xff] %v1973
      %1990 = vst [vmem:[#allocation2 + $0x18] sm:$0xff] %v1974
      %1991 = vst [vmem:[#allocation2 + $0x20] sm:$0xff] %v1975
      %1992 = vst [vmem:[#allocation2 + $0x28] sm:$0xff] %v1976
      %1993 = vst [vmem:[#allocation2 + $0x30] sm:$0xff] %v1977
      %1994 = vst [vmem:[#allocation2 + $0x38] sm:$0xff] %v1978
      %1995 = vst [vmem:[#allocation2 + $0x40] sm:$0xff] %v1979
      %1996 = vst [vmem:[#allocation2 + $0x48] sm:$0xff] %v1980
      %1997 = vst [vmem:[#allocation2 + $0x50] sm:$0xff] %v1981
      %1998 = vst [vmem:[#allocation2 + $0x58] sm:$0xff] %v1982
      %1999 = vst [vmem:[#allocation2 + $0x60] sm:$0xff] %v1983
      %2000 = vst [vmem:[#allocation2 + $0x68] sm:$0xff] %v1984
      %2001 = vst [vmem:[#allocation2 + $0x70] sm:$0xff] %v1985
      %2002 = vst [vmem:[#allocation2 + $0x78] sm:$0xff] %v1986
      %p2003 = scmp.eq.s32.totalorder %s30, 4
      // Predicated region
      $region93: #{futoshiki_forward.4} parent=87 // pred_check
        %p2004 = pneg %p2003
      $region94: #{futoshiki_forward.4} parent=87 // pred_check_branch
        %2006 = sbr.rel (%p2004) target = $region96
      $region95: #{futoshiki_forward.4} parent=87 // pred_region
        %v2007 = vld [vmem:[#allocation2] sm:$0xff]
        %v2008 = vld [vmem:[#allocation2 + $0x8] sm:$0xff]
        %v2009 = vld [vmem:[#allocation2 + $0x10] sm:$0xff]
        %v2010 = vld [vmem:[#allocation2 + $0x18] sm:$0xff]
        %v2011 = vld [vmem:[#allocation2 + $0x20] sm:$0xff]
        %v2012 = vld [vmem:[#allocation2 + $0x28] sm:$0xff]
        %v2013 = vld [vmem:[#allocation2 + $0x30] sm:$0xff]
        %v2014 = vld [vmem:[#allocation2 + $0x38] sm:$0xff]
        %v2015 = vld [vmem:[#allocation2 + $0x40] sm:$0xff]
        %v2016 = vld [vmem:[#allocation2 + $0x48] sm:$0xff]
        %v2017 = vld [vmem:[#allocation2 + $0x50] sm:$0xff]
        %v2018 = vld [vmem:[#allocation2 + $0x58] sm:$0xff]
        %v2019 = vld [vmem:[#allocation2 + $0x60] sm:$0xff]
        %v2020 = vld [vmem:[#allocation2 + $0x68] sm:$0xff]
        %v2021 = vld [vmem:[#allocation2 + $0x70] sm:$0xff]
        %v2022 = vld [vmem:[#allocation2 + $0x78] sm:$0xff]
        %v2023 = vxor.u32 %v2007, 2147483648
        %v2024 = vxor.u32 %v2011, 2147483648
        %v2025 = vxor.u32 %v2015, 2147483648
        %v2026 = vxor.u32 %v2019, 2147483648
        %v2027 = vmul.f32 %v2023, 1.442695
        %v2028 = vpow.pop %v2027
        %v2029 = vmul.f32 %v2024, 1.442695
        %v2030 = vpow.pop %v2029
        %v2031 = vmul.f32 %v2025, 1.442695
        %v2032 = vpow.pop %v2031
        %v2033 = vmul.f32 %v2026, 1.442695
        %v2034 = vpow.pop %v2033
        %v2035 = vadd.f32 %v2028, 1.0
        %v2036 = vadd.f32 %v2030, 1.0
        %v2037 = vadd.f32 %v2032, 1.0
        %v2038 = vadd.f32 %v2034, 1.0
        %v2039 = vrcp.pop %v2035
        %v2040 = vmul.f32 %v2035, %v2039
        %v2041 = vsub.f32 1.0, %v2040
        %v2042 = vmul.f32 %v2039, %v2041
        %v2043 = vadd.f32 %v2039, %v2042
        %vm2044 = vweird.f32 %v2035
        %vm2045 = vweird.f32 %v2039
        %vm2046 = vmor %vm2044, %vm2045
        %v2047 = vsel %vm2046, %v2039, %v2043
        %v2048 = vand.u32 2147483647, %v2035
        %vm2049 = vcmp.eq.f32.partialorder %v2048, 8.507059e+37
        %v2050 = vand.u32 %v2035, 2147483648
        %v2051 = vor.u32 1.1754944e-38, %v2050
        %v2052 = vsel %vm2049, %v2051, %v2047
        %v2053 = vmul.f32 1.0, %v2052
        %v2054 = vrcp.pop %v2036
        %v2055 = vmul.f32 %v2036, %v2054
        %v2056 = vsub.f32 1.0, %v2055
        %v2057 = vmul.f32 %v2054, %v2056
        %v2058 = vadd.f32 %v2054, %v2057
        %vm2059 = vweird.f32 %v2036
        %vm2060 = vweird.f32 %v2054
        %vm2061 = vmor %vm2059, %vm2060
        %v2062 = vsel %vm2061, %v2054, %v2058
        %v2063 = vand.u32 2147483647, %v2036
        %vm2064 = vcmp.eq.f32.partialorder %v2063, 8.507059e+37
        %v2065 = vand.u32 %v2036, 2147483648
        %v2066 = vor.u32 1.1754944e-38, %v2065
        %v2067 = vsel %vm2064, %v2066, %v2062
        %v2068 = vmul.f32 1.0, %v2067
        %v2069 = vrcp.pop %v2037
        %v2070 = vmul.f32 %v2037, %v2069
        %v2071 = vsub.f32 1.0, %v2070
        %v2072 = vmul.f32 %v2069, %v2071
        %v2073 = vadd.f32 %v2069, %v2072
        %vm2074 = vweird.f32 %v2037
        %vm2075 = vweird.f32 %v2069
        %vm2076 = vmor %vm2074, %vm2075
        %v2077 = vsel %vm2076, %v2069, %v2073
        %v2078 = vand.u32 2147483647, %v2037
        %vm2079 = vcmp.eq.f32.partialorder %v2078, 8.507059e+37
        %v2080 = vand.u32 %v2037, 2147483648
        %v2081 = vor.u32 1.1754944e-38, %v2080
        %v2082 = vsel %vm2079, %v2081, %v2077
        %v2083 = vmul.f32 1.0, %v2082
        %v2084 = vrcp.pop %v2038
        %v2085 = vmul.f32 %v2038, %v2084
        %v2086 = vsub.f32 1.0, %v2085
        %v2087 = vmul.f32 %v2084, %v2086
        %v2088 = vadd.f32 %v2084, %v2087
        %vm2089 = vweird.f32 %v2038
        %vm2090 = vweird.f32 %v2084
        %vm2091 = vmor %vm2089, %vm2090
        %v2092 = vsel %vm2091, %v2084, %v2088
        %v2093 = vand.u32 2147483647, %v2038
        %vm2094 = vcmp.eq.f32.partialorder %v2093, 8.507059e+37
        %v2095 = vand.u32 %v2038, 2147483648
        %v2096 = vor.u32 1.1754944e-38, %v2095
        %v2097 = vsel %vm2094, %v2096, %v2092
        %v2098 = vmul.f32 1.0, %v2097
        %v2099 = vxor.u32 %v2008, 2147483648
        %v2100 = vxor.u32 %v2012, 2147483648
        %v2101 = vxor.u32 %v2016, 2147483648
        %v2102 = vxor.u32 %v2020, 2147483648
        %v2103 = vmul.f32 %v2099, 1.442695
        %v2104 = vpow.pop %v2103
        %v2105 = vmul.f32 %v2100, 1.442695
        %v2106 = vpow.pop %v2105
        %v2107 = vmul.f32 %v2101, 1.442695
        %v2108 = vpow.pop %v2107
        %v2109 = vmul.f32 %v2102, 1.442695
        %v2110 = vpow.pop %v2109
        %v2111 = vadd.f32 %v2104, 1.0
        %v2112 = vadd.f32 %v2106, 1.0
        %v2113 = vadd.f32 %v2108, 1.0
        %v2114 = vadd.f32 %v2110, 1.0
        %v2115 = vrcp.pop %v2111
        %v2116 = vmul.f32 %v2111, %v2115
        %v2117 = vsub.f32 1.0, %v2116
        %v2118 = vmul.f32 %v2115, %v2117
        %v2119 = vadd.f32 %v2115, %v2118
        %vm2120 = vweird.f32 %v2111
        %vm2121 = vweird.f32 %v2115
        %vm2122 = vmor %vm2120, %vm2121
        %v2123 = vsel %vm2122, %v2115, %v2119
        %v2124 = vand.u32 2147483647, %v2111
        %vm2125 = vcmp.eq.f32.partialorder %v2124, 8.507059e+37
        %v2126 = vand.u32 %v2111, 2147483648
        %v2127 = vor.u32 1.1754944e-38, %v2126
        %v2128 = vsel %vm2125, %v2127, %v2123
        %v2129 = vmul.f32 1.0, %v2128
        %v2130 = vrcp.pop %v2112
        %v2131 = vmul.f32 %v2112, %v2130
        %v2132 = vsub.f32 1.0, %v2131
        %v2133 = vmul.f32 %v2130, %v2132
        %v2134 = vadd.f32 %v2130, %v2133
        %vm2135 = vweird.f32 %v2112
        %vm2136 = vweird.f32 %v2130
        %vm2137 = vmor %vm2135, %vm2136
        %v2138 = vsel %vm2137, %v2130, %v2134
        %v2139 = vand.u32 2147483647, %v2112
        %vm2140 = vcmp.eq.f32.partialorder %v2139, 8.507059e+37
        %v2141 = vand.u32 %v2112, 2147483648
        %v2142 = vor.u32 1.1754944e-38, %v2141
        %v2143 = vsel %vm2140, %v2142, %v2138
        %v2144 = vmul.f32 1.0, %v2143
        %v2145 = vrcp.pop %v2113
        %v2146 = vmul.f32 %v2113, %v2145
        %v2147 = vsub.f32 1.0, %v2146
        %v2148 = vmul.f32 %v2145, %v2147
        %v2149 = vadd.f32 %v2145, %v2148
        %vm2150 = vweird.f32 %v2113
        %vm2151 = vweird.f32 %v2145
        %vm2152 = vmor %vm2150, %vm2151
        %v2153 = vsel %vm2152, %v2145, %v2149
        %v2154 = vand.u32 2147483647, %v2113
        %vm2155 = vcmp.eq.f32.partialorder %v2154, 8.507059e+37
        %v2156 = vand.u32 %v2113, 2147483648
        %v2157 = vor.u32 1.1754944e-38, %v2156
        %v2158 = vsel %vm2155, %v2157, %v2153
        %v2159 = vmul.f32 1.0, %v2158
        %v2160 = vrcp.pop %v2114
        %v2161 = vmul.f32 %v2114, %v2160
        %v2162 = vsub.f32 1.0, %v2161
        %v2163 = vmul.f32 %v2160, %v2162
        %v2164 = vadd.f32 %v2160, %v2163
        %vm2165 = vweird.f32 %v2114
        %vm2166 = vweird.f32 %v2160
        %vm2167 = vmor %vm2165, %vm2166
        %v2168 = vsel %vm2167, %v2160, %v2164
        %v2169 = vand.u32 2147483647, %v2114
        %vm2170 = vcmp.eq.f32.partialorder %v2169, 8.507059e+37
        %v2171 = vand.u32 %v2114, 2147483648
        %v2172 = vor.u32 1.1754944e-38, %v2171
        %v2173 = vsel %vm2170, %v2172, %v2168
        %v2174 = vmul.f32 1.0, %v2173
        %v2175 = vtanh.pop %v2009
        %v2176 = vtanh.pop %v2013
        %v2177 = vtanh.pop %v2017
        %v2178 = vtanh.pop %v2021
        %v2179 = vxor.u32 %v2010, 2147483648
        %v2180 = vxor.u32 %v2014, 2147483648
        %v2181 = vxor.u32 %v2018, 2147483648
        %v2182 = vxor.u32 %v2022, 2147483648
        %v2183 = vmul.f32 %v2179, 1.442695
        %v2184 = vpow.pop %v2183
        %v2185 = vmul.f32 %v2180, 1.442695
        %v2186 = vpow.pop %v2185
        %v2187 = vmul.f32 %v2181, 1.442695
        %v2188 = vpow.pop %v2187
        %v2189 = vmul.f32 %v2182, 1.442695
        %v2190 = vpow.pop %v2189
        %v2191 = vadd.f32 %v2184, 1.0
        %v2192 = vadd.f32 %v2186, 1.0
        %v2193 = vadd.f32 %v2188, 1.0
        %v2194 = vadd.f32 %v2190, 1.0
        %v2195 = vrcp.pop %v2191
        %v2196 = vmul.f32 %v2191, %v2195
        %v2197 = vsub.f32 1.0, %v2196
        %v2198 = vmul.f32 %v2195, %v2197
        %v2199 = vadd.f32 %v2195, %v2198
        %vm2200 = vweird.f32 %v2191
        %vm2201 = vweird.f32 %v2195
        %vm2202 = vmor %vm2200, %vm2201
        %v2203 = vsel %vm2202, %v2195, %v2199
        %v2204 = vand.u32 2147483647, %v2191
        %vm2205 = vcmp.eq.f32.partialorder %v2204, 8.507059e+37
        %v2206 = vand.u32 %v2191, 2147483648
        %v2207 = vor.u32 1.1754944e-38, %v2206
        %v2208 = vsel %vm2205, %v2207, %v2203
        %v2209 = vmul.f32 1.0, %v2208
        %v2210 = vrcp.pop %v2192
        %v2211 = vmul.f32 %v2192, %v2210
        %v2212 = vsub.f32 1.0, %v2211
        %v2213 = vmul.f32 %v2210, %v2212
        %v2214 = vadd.f32 %v2210, %v2213
        %vm2215 = vweird.f32 %v2192
        %vm2216 = vweird.f32 %v2210
        %vm2217 = vmor %vm2215, %vm2216
        %v2218 = vsel %vm2217, %v2210, %v2214
        %v2219 = vand.u32 2147483647, %v2192
        %vm2220 = vcmp.eq.f32.partialorder %v2219, 8.507059e+37
        %v2221 = vand.u32 %v2192, 2147483648
        %v2222 = vor.u32 1.1754944e-38, %v2221
        %v2223 = vsel %vm2220, %v2222, %v2218
        %v2224 = vmul.f32 1.0, %v2223
        %v2225 = vrcp.pop %v2193
        %v2226 = vmul.f32 %v2193, %v2225
        %v2227 = vsub.f32 1.0, %v2226
        %v2228 = vmul.f32 %v2225, %v2227
        %v2229 = vadd.f32 %v2225, %v2228
        %vm2230 = vweird.f32 %v2193
        %vm2231 = vweird.f32 %v2225
        %vm2232 = vmor %vm2230, %vm2231
        %v2233 = vsel %vm2232, %v2225, %v2229
        %v2234 = vand.u32 2147483647, %v2193
        %vm2235 = vcmp.eq.f32.partialorder %v2234, 8.507059e+37
        %v2236 = vand.u32 %v2193, 2147483648
        %v2237 = vor.u32 1.1754944e-38, %v2236
        %v2238 = vsel %vm2235, %v2237, %v2233
        %v2239 = vmul.f32 1.0, %v2238
        %v2240 = vrcp.pop %v2194
        %v2241 = vmul.f32 %v2194, %v2240
        %v2242 = vsub.f32 1.0, %v2241
        %v2243 = vmul.f32 %v2240, %v2242
        %v2244 = vadd.f32 %v2240, %v2243
        %vm2245 = vweird.f32 %v2194
        %vm2246 = vweird.f32 %v2240
        %vm2247 = vmor %vm2245, %vm2246
        %v2248 = vsel %vm2247, %v2240, %v2244
        %v2249 = vand.u32 2147483647, %v2194
        %vm2250 = vcmp.eq.f32.partialorder %v2249, 8.507059e+37
        %v2251 = vand.u32 %v2194, 2147483648
        %v2252 = vor.u32 1.1754944e-38, %v2251
        %v2253 = vsel %vm2250, %v2252, %v2248
        %v2254 = vmul.f32 1.0, %v2253
        %v2255 = vld [vmem:[%s15] sm:$0xff]
        %v2256 = vld [vmem:[%s15 + $0x8] sm:$0xff]
        %v2257 = vld [vmem:[%s15 + $0x10] sm:$0xff]
        %v2258 = vld [vmem:[%s15 + $0x18] sm:$0xff]
        %v2259 = vmul.f32 %v2129, %v2255
        %v2260 = vmul.f32 %v2144, %v2256
        %v2261 = vmul.f32 %v2159, %v2257
        %v2262 = vmul.f32 %v2174, %v2258
        %v2263 = vmul.f32 %v2053, %v2175
        %v2264 = vmul.f32 %v2068, %v2176
        %v2265 = vmul.f32 %v2083, %v2177
        %v2266 = vmul.f32 %v2098, %v2178
        %v2267 = vadd.f32 %v2259, %v2263
        %v2268 = vadd.f32 %v2260, %v2264
        %v2269 = vadd.f32 %v2261, %v2265
        %v2270 = vadd.f32 %v2262, %v2266
        %2271 = vst [vmem:[%s18] sm:$0xff] %v2267
        %2272 = vst [vmem:[%s18 + $0x8] sm:$0xff] %v2268
        %2273 = vst [vmem:[%s18 + $0x10] sm:$0xff] %v2269
        %2274 = vst [vmem:[%s18 + $0x18] sm:$0xff] %v2270
        %v2275 = vtanh.pop %v2267
        %v2276 = vtanh.pop %v2268
        %v2277 = vtanh.pop %v2269
        %v2278 = vtanh.pop %v2270
        %v2279 = vmul.f32 %v2209, %v2275
        %v2280 = vmul.f32 %v2224, %v2276
        %v2281 = vmul.f32 %v2239, %v2277
        %v2282 = vmul.f32 %v2254, %v2278
        %2283 = vst [vmem:[%s17] sm:$0xff] %v2279
        %2284 = vst [vmem:[%s17 + $0x8] sm:$0xff] %v2280
        %2285 = vst [vmem:[%s17 + $0x10] sm:$0xff] %v2281
        %2286 = vst [vmem:[%s17 + $0x18] sm:$0xff] %v2282
      $region96: #{futoshiki_forward.4} parent=87 // pred_fallthru
        _
      // Predicated region
      $region97: #{futoshiki_forward.4} parent=87 // pred_check
        %p2287 = pneg %p465
      $region98: #{futoshiki_forward.4} parent=87 // pred_check_branch
        %2289 = sbr.rel (%p2287) target = $region100
      $region99: #{futoshiki_forward.4} parent=87 // pred_region
        _
      $region100: #{futoshiki_forward.4} parent=87 // pred_fallthru
        _
      // Predicated region
      $region101: #{futoshiki_forward.4} parent=87 // pred_check
        %p2290 = pneg %p486
      $region102: #{futoshiki_forward.4} parent=87 // pred_check_branch
        %2292 = sbr.rel (%p2290) target = $region104
      $region103: #{futoshiki_forward.4} parent=87 // pred_region
        _
      $region104: #{futoshiki_forward.4} parent=87 // pred_fallthru
        _
      // Predicated region
      $region105: #{futoshiki_forward.4} parent=87 // pred_check
        %p2293 = pneg %p465
      $region106: #{futoshiki_forward.4} parent=87 // pred_check_branch
        %2295 = sbr.rel (%p2293) target = $region108
      $region107: #{futoshiki_forward.4} parent=87 // pred_region
        _
      $region108: #{futoshiki_forward.4} parent=87 // pred_fallthru
        _
      // Predicated region
      $region109: #{futoshiki_forward.4} parent=87 // pred_check
        %p2296 = pneg %p486
      $region110: #{futoshiki_forward.4} parent=87 // pred_check_branch
        %2298 = sbr.rel (%p2296) target = $region112
      $region111: #{futoshiki_forward.4} parent=87 // pred_region
        _
      $region112: #{futoshiki_forward.4} parent=87 // pred_fallthru
        _
    $region88: #{futoshiki_forward.4} parent=5 // pred_fallthru
      _
    %p2299 = scmp.le.s32.totalorder 2, %s25
    // Predicated region
    $region113: #{futoshiki_forward.4} parent=5 // pred_check
      %p2300 = pneg %p2299
    $region114: #{futoshiki_forward.4} parent=5 // pred_check_branch
      %2302 = sbr.rel (%p2300) target = $region116
    $region115: #{futoshiki_forward.4} parent=5 // pred_region
      %s2303 = ssub.s32 %s25, 2
    $region116: #{futoshiki_forward.4} parent=5 // pred_fallthru
      _
  $region6: #{futoshiki_forward.4} parent=0 // loop_footer
    %s29 = sadd.s32 1, %s25
  $region7: #{futoshiki_forward.4} parent=0 // loop_footer_branch
    %24 = sbr.rel target = $region3
  $region8: #{futoshiki_forward.4} parent=0 // loop_exit
    _

// kernel: futoshiki_forward.6
$region0: #{futoshiki_forward.6}
  #allocation0 [shape = 'u32[]', space=smem, size = 0x4, offset = 0x4, fixed_abs, tag = 'smem constant byte address 0x4 - core index']
  #allocation1 [shape = 'u32[72,128]{1,0:T(1,128)}', space=vmem, size = 0x9000, scoped, tag = 'internal scratch']
  #allocation2 [shape = 'f32[32,512]{1,0:T(8,128)}', space=vmem, size = 0x10000, scoped, tag = 'scratch operand']
  %s0 = inlined_call_operand.vmem [shape: f32[5,192,128], index: 0, kind: input, shape index: {}]
  %s1 = inlined_call_operand.vmem [shape: f32[5,192,128], index: 1, kind: input, shape index: {}]
  %s2 = inlined_call_operand.vmem [shape: f32[5,32,192], index: 2, kind: input, shape index: {}]
  %s3 = inlined_call_operand.vmem [shape: f32[5,128,128], index: 3, kind: input, shape index: {}]
  %s4 = inlined_call_operand.vmem [shape: f32[5,128,128], index: 4, kind: input, shape index: {}]
  %s5 = inlined_call_operand.vmem [shape: f32[5,1,128], index: 5, kind: input, shape index: {}]
  %s6 = inlined_call_operand.vmem [shape: f32[5,128,128], index: 6, kind: input, shape index: {}]
  %s7 = inlined_call_operand.vmem [shape: f32[5,1,128], index: 7, kind: input, shape index: {}]
  %s8 = inlined_call_operand.vmem [shape: f32[5,128,128], index: 8, kind: input, shape index: {}]
  %s9 = inlined_call_operand.vmem [shape: f32[5,1,128], index: 9, kind: input, shape index: {}]
  %s10 = inlined_call_operand.vmem [shape: f32[5,128,128], index: 10, kind: input, shape index: {}]
  %s11 = inlined_call_operand.vmem [shape: f32[5,1,128], index: 11, kind: input, shape index: {}]
  %s12 = inlined_call_operand.vmem [shape: f32[5,128,512], index: 12, kind: input, shape index: {}]
  %s13 = inlined_call_operand.vmem [shape: f32[32,512], index: 13, kind: input, shape index: {}]
  %s14 = inlined_call_operand.vmem [shape: f32[32,128], index: 14, kind: input, shape index: {}]
  %s15 = inlined_call_operand.vmem [shape: f32[32,128], index: 15, kind: input, shape index: {}]
  %s16 = inlined_call_operand.vmem [shape: f32[128,512], index: 16, kind: input, shape index: {}]
  %s17 = inlined_call_operand.vmem [shape: f32[32,128], index: 17, kind: output, shape index: {0}]
  %s18 = inlined_call_operand.hbm [shape: f32[32,128], index: 18, kind: output, shape index: {1}]
  %19 = xla_tuple %s17, %s18
  %s20 = sld [smem:[#allocation0]]
  $region117: #{futoshiki_forward.6} parent=0
    _
  %s22 = ssub.s32 1, %s20
  %s23 = scalar_select 0, %s22, %s20
  $region1: #{futoshiki_forward.6} parent=0
    #allocation3 [shape = 'u8[16384]{0}', space=vmem, size = 0x4000, scoped, tag = 'output window, operand 1, single buffered']
    #allocation4 [shape = 's32[2]{0}', space=sflag, size = 0x8, scoped, tag = 'scoped memory for futoshiki_forward.6']
    %24 = vsyncpa [#allocation4], 0
    loop: start=0, step=1, limit=7
    $region2: #{futoshiki_forward.6} parent=1 // loop_pre_header
      _
    $region3: #{futoshiki_forward.6} parent=1 // loop_header
      %s26 = sphi 0, %s30
      %p27 = scmp.ge.s32.totalorder %s26, 7
      %s36 = sphi 0, %s38
      %s39 = sphi 0, %s36
      %s40 = sphi 0, %s39
      %s56 = sphi 0, %s40
      %s62 = sphi 0, %s64
      %s65 = sphi 0, %s62
      %s66 = sphi 0, %s65
      %s82 = sphi 0, %s66
      %s88 = sphi 0, %s90
      %s91 = sphi 0, %s88
      %s92 = sphi 0, %s91
      %s108 = sphi 0, %s92
      %s114 = sphi 0, %s116
      %s117 = sphi 0, %s114
      %s118 = sphi 0, %s117
      %s134 = sphi 0, %s118
      %s140 = sphi 0, %s142
      %s143 = sphi 0, %s140
      %s144 = sphi 0, %s143
      %s160 = sphi 0, %s144
      %s166 = sphi 0, %s168
      %s169 = sphi 0, %s166
      %s170 = sphi 0, %s169
      %s186 = sphi 0, %s170
      %s192 = sphi 0, %s194
      %s195 = sphi 0, %s192
      %s196 = sphi 0, %s195
      %s212 = sphi 0, %s196
      %s218 = sphi 0, %s220
      %s221 = sphi 0, %s218
      %s222 = sphi 0, %s221
      %s238 = sphi 0, %s222
      %s244 = sphi 0, %s246
      %s247 = sphi 0, %s244
      %s248 = sphi 0, %s247
      %s264 = sphi 0, %s248
      %s270 = sphi 0, %s272
      %s273 = sphi 0, %s270
      %s274 = sphi 0, %s273
      %s290 = sphi 0, %s274
      %s296 = sphi 0, %s298
      %s299 = sphi 0, %s296
      %s300 = sphi 0, %s299
      %s316 = sphi 0, %s300
      %s322 = sphi 0, %s324
      %s325 = sphi 0, %s322
      %s326 = sphi 0, %s325
      %s342 = sphi 0, %s326
      %s348 = sphi 0, %s350
      %s351 = sphi 0, %s348
      %s352 = sphi 0, %s351
      %s368 = sphi 0, %s352
      %s372 = sphi 0, %s372
      %s374 = sphi 0, %s372
      %s375 = sphi 0, %s374
      %s389 = sphi 0, %s375
      %s393 = sphi 0, %s393
      %s395 = sphi 0, %s393
      %s396 = sphi 0, %s395
      %s410 = sphi 0, %s396
      %s414 = sphi 0, %s414
      %s416 = sphi 0, %s414
      %s417 = sphi 0, %s416
      %s431 = sphi 0, %s417
      %s435 = sphi 0, %s435
      %s437 = sphi 0, %s435
      %s438 = sphi 0, %s437
      %s452 = sphi 0, %s438
      %s456 = sphi 0, %s456
      %s458 = sphi 0, %s456
      %s459 = sphi 0, %s458
      %s473 = sphi 0, %s459
      %s477 = sphi 0, %s477
      %s479 = sphi 0, %s477
      %s480 = sphi 0, %s479
      %s494 = sphi 0, %s480
    $region4: #{futoshiki_forward.6} parent=1 // loop_header_branch
      %29 = sbr.rel (%p27) target = $region8
    $region5: #{futoshiki_forward.6} parent=1 // loop_body
      %s31 = ssub.s32 %s26, 1
      %s32 = ssub.s32 %s26, 2
      %s33 = sadd.s32 %s26, 1
      %s34 = ssub.s32 %s26, %s33
      %p35 = scmp.eq.s32.totalorder %s34, 0
      %s37 = sadd.s32 %s36, 1
      %s38 = scalar_select %p35, %s36, %s37
      %p41 = pneg %p35
      %p42 = scmp.eq.s32.totalorder %s26, 4
      %p43 = por %p41, %p42
      %p44 = scmp.ne.s32.totalorder %s36, %s39
      %p45 = scmp.eq.s32.totalorder %s26, 0
      %p46 = por %p44, %p45
      %p47 = scmp.ne.s32.totalorder %s36, %s39
      %p48 = scmp.eq.s32.totalorder %s31, 4
      %p49 = por %p47, %p48
      %p50 = scmp.ne.s32.totalorder %s39, %s40
      %p51 = scmp.eq.s32.totalorder %s31, 0
      %p52 = por %p50, %p51
      %p53 = scmp.ne.s32.totalorder %s39, %s40
      %p54 = scmp.eq.s32.totalorder %s32, 4
      %p55 = por %p53, %p54
      %p57 = scmp.ne.s32.totalorder %s40, %s56
      %p58 = scmp.eq.s32.totalorder %s32, 0
      %p59 = por %p57, %p58
      %s60 = ssub.s32 %s26, %s33
      %p61 = scmp.eq.s32.totalorder %s60, 0
      %s63 = sadd.s32 %s62, 1
      %s64 = scalar_select %p61, %s62, %s63
      %p67 = pneg %p61
      %p68 = scmp.eq.s32.totalorder %s26, 4
      %p69 = por %p67, %p68
      %p70 = scmp.ne.s32.totalorder %s62, %s65
      %p71 = scmp.eq.s32.totalorder %s26, 0
      %p72 = por %p70, %p71
      %p73 = scmp.ne.s32.totalorder %s62, %s65
      %p74 = scmp.eq.s32.totalorder %s31, 4
      %p75 = por %p73, %p74
      %p76 = scmp.ne.s32.totalorder %s65, %s66
      %p77 = scmp.eq.s32.totalorder %s31, 0
      %p78 = por %p76, %p77
      %p79 = scmp.ne.s32.totalorder %s65, %s66
      %p80 = scmp.eq.s32.totalorder %s32, 4
      %p81 = por %p79, %p80
      %p83 = scmp.ne.s32.totalorder %s66, %s82
      %p84 = scmp.eq.s32.totalorder %s32, 0
      %p85 = por %p83, %p84
      %s86 = ssub.s32 %s26, %s33
      %p87 = scmp.eq.s32.totalorder %s86, 0
      %s89 = sadd.s32 %s88, 1
      %s90 = scalar_select %p87, %s88, %s89
      %p93 = pneg %p87
      %p94 = scmp.eq.s32.totalorder %s26, 4
      %p95 = por %p93, %p94
      %p96 = scmp.ne.s32.totalorder %s88, %s91
      %p97 = scmp.eq.s32.totalorder %s26, 0
      %p98 = por %p96, %p97
      %p99 = scmp.ne.s32.totalorder %s88, %s91
      %p100 = scmp.eq.s32.totalorder %s31, 4
      %p101 = por %p99, %p100
      %p102 = scmp.ne.s32.totalorder %s91, %s92
      %p103 = scmp.eq.s32.totalorder %s31, 0
      %p104 = por %p102, %p103
      %p105 = scmp.ne.s32.totalorder %s91, %s92
      %p106 = scmp.eq.s32.totalorder %s32, 4
      %p107 = por %p105, %p106
      %p109 = scmp.ne.s32.totalorder %s92, %s108
      %p110 = scmp.eq.s32.totalorder %s32, 0
      %p111 = por %p109, %p110
      %s112 = ssub.s32 %s26, %s33
      %p113 = scmp.eq.s32.totalorder %s112, 0
      %s115 = sadd.s32 %s114, 1
      %s116 = scalar_select %p113, %s114, %s115
      %p119 = pneg %p113
      %p120 = scmp.eq.s32.totalorder %s26, 4
      %p121 = por %p119, %p120
      %p122 = scmp.ne.s32.totalorder %s114, %s117
      %p123 = scmp.eq.s32.totalorder %s26, 0
      %p124 = por %p122, %p123
      %p125 = scmp.ne.s32.totalorder %s114, %s117
      %p126 = scmp.eq.s32.totalorder %s31, 4
      %p127 = por %p125, %p126
      %p128 = scmp.ne.s32.totalorder %s117, %s118
      %p129 = scmp.eq.s32.totalorder %s31, 0
      %p130 = por %p128, %p129
      %p131 = scmp.ne.s32.totalorder %s117, %s118
      %p132 = scmp.eq.s32.totalorder %s32, 4
      %p133 = por %p131, %p132
      %p135 = scmp.ne.s32.totalorder %s118, %s134
      %p136 = scmp.eq.s32.totalorder %s32, 0
      %p137 = por %p135, %p136
      %s138 = ssub.s32 %s26, %s33
      %p139 = scmp.eq.s32.totalorder %s138, 0
      %s141 = sadd.s32 %s140, 1
      %s142 = scalar_select %p139, %s140, %s141
      %p145 = pneg %p139
      %p146 = scmp.eq.s32.totalorder %s26, 4
      %p147 = por %p145, %p146
      %p148 = scmp.ne.s32.totalorder %s140, %s143
      %p149 = scmp.eq.s32.totalorder %s26, 0
      %p150 = por %p148, %p149
      %p151 = scmp.ne.s32.totalorder %s140, %s143
      %p152 = scmp.eq.s32.totalorder %s31, 4
      %p153 = por %p151, %p152
      %p154 = scmp.ne.s32.totalorder %s143, %s144
      %p155 = scmp.eq.s32.totalorder %s31, 0
      %p156 = por %p154, %p155
      %p157 = scmp.ne.s32.totalorder %s143, %s144
      %p158 = scmp.eq.s32.totalorder %s32, 4
      %p159 = por %p157, %p158
      %p161 = scmp.ne.s32.totalorder %s144, %s160
      %p162 = scmp.eq.s32.totalorder %s32, 0
      %p163 = por %p161, %p162
      %s164 = ssub.s32 %s26, %s33
      %p165 = scmp.eq.s32.totalorder %s164, 0
      %s167 = sadd.s32 %s166, 1
      %s168 = scalar_select %p165, %s166, %s167
      %p171 = pneg %p165
      %p172 = scmp.eq.s32.totalorder %s26, 4
      %p173 = por %p171, %p172
      %p174 = scmp.ne.s32.totalorder %s166, %s169
      %p175 = scmp.eq.s32.totalorder %s26, 0
      %p176 = por %p174, %p175
      %p177 = scmp.ne.s32.totalorder %s166, %s169
      %p178 = scmp.eq.s32.totalorder %s31, 4
      %p179 = por %p177, %p178
      %p180 = scmp.ne.s32.totalorder %s169, %s170
      %p181 = scmp.eq.s32.totalorder %s31, 0
      %p182 = por %p180, %p181
      %p183 = scmp.ne.s32.totalorder %s169, %s170
      %p184 = scmp.eq.s32.totalorder %s32, 4
      %p185 = por %p183, %p184
      %p187 = scmp.ne.s32.totalorder %s170, %s186
      %p188 = scmp.eq.s32.totalorder %s32, 0
      %p189 = por %p187, %p188
      %s190 = ssub.s32 %s26, %s33
      %p191 = scmp.eq.s32.totalorder %s190, 0
      %s193 = sadd.s32 %s192, 1
      %s194 = scalar_select %p191, %s192, %s193
      %p197 = pneg %p191
      %p198 = scmp.eq.s32.totalorder %s26, 4
      %p199 = por %p197, %p198
      %p200 = scmp.ne.s32.totalorder %s192, %s195
      %p201 = scmp.eq.s32.totalorder %s26, 0
      %p202 = por %p200, %p201
      %p203 = scmp.ne.s32.totalorder %s192, %s195
      %p204 = scmp.eq.s32.totalorder %s31, 4
      %p205 = por %p203, %p204
      %p206 = scmp.ne.s32.totalorder %s195, %s196
      %p207 = scmp.eq.s32.totalorder %s31, 0
      %p208 = por %p206, %p207
      %p209 = scmp.ne.s32.totalorder %s195, %s196
      %p210 = scmp.eq.s32.totalorder %s32, 4
      %p211 = por %p209, %p210
      %p213 = scmp.ne.s32.totalorder %s196, %s212
      %p214 = scmp.eq.s32.totalorder %s32, 0
      %p215 = por %p213, %p214
      %s216 = ssub.s32 %s26, %s33
      %p217 = scmp.eq.s32.totalorder %s216, 0
      %s219 = sadd.s32 %s218, 1
      %s220 = scalar_select %p217, %s218, %s219
      %p223 = pneg %p217
      %p224 = scmp.eq.s32.totalorder %s26, 4
      %p225 = por %p223, %p224
      %p226 = scmp.ne.s32.totalorder %s218, %s221
      %p227 = scmp.eq.s32.totalorder %s26, 0
      %p228 = por %p226, %p227
      %p229 = scmp.ne.s32.totalorder %s218, %s221
      %p230 = scmp.eq.s32.totalorder %s31, 4
      %p231 = por %p229, %p230
      %p232 = scmp.ne.s32.totalorder %s221, %s222
      %p233 = scmp.eq.s32.totalorder %s31, 0
      %p234 = por %p232, %p233
      %p235 = scmp.ne.s32.totalorder %s221, %s222
      %p236 = scmp.eq.s32.totalorder %s32, 4
      %p237 = por %p235, %p236
      %p239 = scmp.ne.s32.totalorder %s222, %s238
      %p240 = scmp.eq.s32.totalorder %s32, 0
      %p241 = por %p239, %p240
      %s242 = ssub.s32 %s26, %s33
      %p243 = scmp.eq.s32.totalorder %s242, 0
      %s245 = sadd.s32 %s244, 1
      %s246 = scalar_select %p243, %s244, %s245
      %p249 = pneg %p243
      %p250 = scmp.eq.s32.totalorder %s26, 4
      %p251 = por %p249, %p250
      %p252 = scmp.ne.s32.totalorder %s244, %s247
      %p253 = scmp.eq.s32.totalorder %s26, 0
      %p254 = por %p252, %p253
      %p255 = scmp.ne.s32.totalorder %s244, %s247
      %p256 = scmp.eq.s32.totalorder %s31, 4
      %p257 = por %p255, %p256
      %p258 = scmp.ne.s32.totalorder %s247, %s248
      %p259 = scmp.eq.s32.totalorder %s31, 0
      %p260 = por %p258, %p259
      %p261 = scmp.ne.s32.totalorder %s247, %s248
      %p262 = scmp.eq.s32.totalorder %s32, 4
      %p263 = por %p261, %p262
      %p265 = scmp.ne.s32.totalorder %s248, %s264
      %p266 = scmp.eq.s32.totalorder %s32, 0
      %p267 = por %p265, %p266
      %s268 = ssub.s32 %s26, %s33
      %p269 = scmp.eq.s32.totalorder %s268, 0
      %s271 = sadd.s32 %s270, 1
      %s272 = scalar_select %p269, %s270, %s271
      %p275 = pneg %p269
      %p276 = scmp.eq.s32.totalorder %s26, 4
      %p277 = por %p275, %p276
      %p278 = scmp.ne.s32.totalorder %s270, %s273
      %p279 = scmp.eq.s32.totalorder %s26, 0
      %p280 = por %p278, %p279
      %p281 = scmp.ne.s32.totalorder %s270, %s273
      %p282 = scmp.eq.s32.totalorder %s31, 4
      %p283 = por %p281, %p282
      %p284 = scmp.ne.s32.totalorder %s273, %s274
      %p285 = scmp.eq.s32.totalorder %s31, 0
      %p286 = por %p284, %p285
      %p287 = scmp.ne.s32.totalorder %s273, %s274
      %p288 = scmp.eq.s32.totalorder %s32, 4
      %p289 = por %p287, %p288
      %p291 = scmp.ne.s32.totalorder %s274, %s290
      %p292 = scmp.eq.s32.totalorder %s32, 0
      %p293 = por %p291, %p292
      %s294 = ssub.s32 %s26, %s33
      %p295 = scmp.eq.s32.totalorder %s294, 0
      %s297 = sadd.s32 %s296, 1
      %s298 = scalar_select %p295, %s296, %s297
      %p301 = pneg %p295
      %p302 = scmp.eq.s32.totalorder %s26, 4
      %p303 = por %p301, %p302
      %p304 = scmp.ne.s32.totalorder %s296, %s299
      %p305 = scmp.eq.s32.totalorder %s26, 0
      %p306 = por %p304, %p305
      %p307 = scmp.ne.s32.totalorder %s296, %s299
      %p308 = scmp.eq.s32.totalorder %s31, 4
      %p309 = por %p307, %p308
      %p310 = scmp.ne.s32.totalorder %s299, %s300
      %p311 = scmp.eq.s32.totalorder %s31, 0
      %p312 = por %p310, %p311
      %p313 = scmp.ne.s32.totalorder %s299, %s300
      %p314 = scmp.eq.s32.totalorder %s32, 4
      %p315 = por %p313, %p314
      %p317 = scmp.ne.s32.totalorder %s300, %s316
      %p318 = scmp.eq.s32.totalorder %s32, 0
      %p319 = por %p317, %p318
      %s320 = ssub.s32 %s26, %s33
      %p321 = scmp.eq.s32.totalorder %s320, 0
      %s323 = sadd.s32 %s322, 1
      %s324 = scalar_select %p321, %s322, %s323
      %p327 = pneg %p321
      %p328 = scmp.eq.s32.totalorder %s26, 4
      %p329 = por %p327, %p328
      %p330 = scmp.ne.s32.totalorder %s322, %s325
      %p331 = scmp.eq.s32.totalorder %s26, 0
      %p332 = por %p330, %p331
      %p333 = scmp.ne.s32.totalorder %s322, %s325
      %p334 = scmp.eq.s32.totalorder %s31, 4
      %p335 = por %p333, %p334
      %p336 = scmp.ne.s32.totalorder %s325, %s326
      %p337 = scmp.eq.s32.totalorder %s31, 0
      %p338 = por %p336, %p337
      %p339 = scmp.ne.s32.totalorder %s325, %s326
      %p340 = scmp.eq.s32.totalorder %s32, 4
      %p341 = por %p339, %p340
      %p343 = scmp.ne.s32.totalorder %s326, %s342
      %p344 = scmp.eq.s32.totalorder %s32, 0
      %p345 = por %p343, %p344
      %s346 = ssub.s32 %s26, %s33
      %p347 = scmp.eq.s32.totalorder %s346, 0
      %s349 = sadd.s32 %s348, 1
      %s350 = scalar_select %p347, %s348, %s349
      %p353 = pneg %p347
      %p354 = scmp.eq.s32.totalorder %s26, 4
      %p355 = por %p353, %p354
      %p356 = scmp.ne.s32.totalorder %s348, %s351
      %p357 = scmp.eq.s32.totalorder %s26, 0
      %p358 = por %p356, %p357
      %p359 = scmp.ne.s32.totalorder %s348, %s351
      %p360 = scmp.eq.s32.totalorder %s31, 4
      %p361 = por %p359, %p360
      %p362 = scmp.ne.s32.totalorder %s351, %s352
      %p363 = scmp.eq.s32.totalorder %s31, 0
      %p364 = por %p362, %p363
      %p365 = scmp.ne.s32.totalorder %s351, %s352
      %p366 = scmp.eq.s32.totalorder %s32, 4
      %p367 = por %p365, %p366
      %p369 = scmp.ne.s32.totalorder %s352, %s368
      %p370 = scmp.eq.s32.totalorder %s32, 0
      %p371 = por %p369, %p370
      %s373 = sadd.s32 %s372, 1
      %p376 = scmp.eq.s32.totalorder %s26, 4
      %p377 = scmp.ne.s32.totalorder %s372, %s374
      %p378 = scmp.eq.s32.totalorder %s26, 0
      %p379 = por %p377, %p378
      %p380 = scmp.ne.s32.totalorder %s372, %s374
      %p381 = scmp.eq.s32.totalorder %s31, 4
      %p382 = por %p380, %p381
      %p383 = scmp.ne.s32.totalorder %s374, %s375
      %p384 = scmp.eq.s32.totalorder %s31, 0
      %p385 = por %p383, %p384
      %p386 = scmp.ne.s32.totalorder %s374, %s375
      %p387 = scmp.eq.s32.totalorder %s32, 4
      %p388 = por %p386, %p387
      %p390 = scmp.ne.s32.totalorder %s375, %s389
      %p391 = scmp.eq.s32.totalorder %s32, 0
      %p392 = por %p390, %p391
      %s394 = sadd.s32 %s393, 1
      %p397 = scmp.eq.s32.totalorder %s26, 4
      %p398 = scmp.ne.s32.totalorder %s393, %s395
      %p399 = scmp.eq.s32.totalorder %s26, 0
      %p400 = por %p398, %p399
      %p401 = scmp.ne.s32.totalorder %s393, %s395
      %p402 = scmp.eq.s32.totalorder %s31, 4
      %p403 = por %p401, %p402
      %p404 = scmp.ne.s32.totalorder %s395, %s396
      %p405 = scmp.eq.s32.totalorder %s31, 0
      %p406 = por %p404, %p405
      %p407 = scmp.ne.s32.totalorder %s395, %s396
      %p408 = scmp.eq.s32.totalorder %s32, 4
      %p409 = por %p407, %p408
      %p411 = scmp.ne.s32.totalorder %s396, %s410
      %p412 = scmp.eq.s32.totalorder %s32, 0
      %p413 = por %p411, %p412
      %s415 = sadd.s32 %s414, 1
      %p418 = scmp.eq.s32.totalorder %s26, 4
      %p419 = scmp.ne.s32.totalorder %s414, %s416
      %p420 = scmp.eq.s32.totalorder %s26, 0
      %p421 = por %p419, %p420
      %p422 = scmp.ne.s32.totalorder %s414, %s416
      %p423 = scmp.eq.s32.totalorder %s31, 4
      %p424 = por %p422, %p423
      %p425 = scmp.ne.s32.totalorder %s416, %s417
      %p426 = scmp.eq.s32.totalorder %s31, 0
      %p427 = por %p425, %p426
      %p428 = scmp.ne.s32.totalorder %s416, %s417
      %p429 = scmp.eq.s32.totalorder %s32, 4
      %p430 = por %p428, %p429
      %p432 = scmp.ne.s32.totalorder %s417, %s431
      %p433 = scmp.eq.s32.totalorder %s32, 0
      %p434 = por %p432, %p433
      %s436 = sadd.s32 %s435, 1
      %p439 = scmp.eq.s32.totalorder %s26, 4
      %p440 = scmp.ne.s32.totalorder %s435, %s437
      %p441 = scmp.eq.s32.totalorder %s26, 0
      %p442 = por %p440, %p441
      %p443 = scmp.ne.s32.totalorder %s435, %s437
      %p444 = scmp.eq.s32.totalorder %s31, 4
      %p445 = por %p443, %p444
      %p446 = scmp.ne.s32.totalorder %s437, %s438
      %p447 = scmp.eq.s32.totalorder %s31, 0
      %p448 = por %p446, %p447
      %p449 = scmp.ne.s32.totalorder %s437, %s438
      %p450 = scmp.eq.s32.totalorder %s32, 4
      %p451 = por %p449, %p450
      %p453 = scmp.ne.s32.totalorder %s438, %s452
      %p454 = scmp.eq.s32.totalorder %s32, 0
      %p455 = por %p453, %p454
      %s457 = sadd.s32 %s456, 1
      %p460 = scmp.eq.s32.totalorder %s26, 4
      %p461 = scmp.ne.s32.totalorder %s456, %s458
      %p462 = scmp.eq.s32.totalorder %s26, 0
      %p463 = por %p461, %p462
      %p464 = scmp.ne.s32.totalorder %s456, %s458
      %p465 = scmp.eq.s32.totalorder %s31, 4
      %p466 = por %p464, %p465
      %p467 = scmp.ne.s32.totalorder %s458, %s459
      %p468 = scmp.eq.s32.totalorder %s31, 0
      %p469 = por %p467, %p468
      %p470 = scmp.ne.s32.totalorder %s458, %s459
      %p471 = scmp.eq.s32.totalorder %s32, 4
      %p472 = por %p470, %p471
      %p474 = scmp.ne.s32.totalorder %s459, %s473
      %p475 = scmp.eq.s32.totalorder %s32, 0
      %p476 = por %p474, %p475
      %s478 = sadd.s32 %s477, 1
      %p481 = scmp.eq.s32.totalorder %s26, 4
      %p482 = scmp.ne.s32.totalorder %s477, %s479
      %p483 = scmp.eq.s32.totalorder %s26, 0
      %p484 = por %p482, %p483
      %p485 = scmp.ne.s32.totalorder %s477, %s479
      %p486 = scmp.eq.s32.totalorder %s31, 4
      %p487 = por %p485, %p486
      %p488 = scmp.ne.s32.totalorder %s479, %s480
      %p489 = scmp.eq.s32.totalorder %s31, 0
      %p490 = por %p488, %p489
      %p491 = scmp.ne.s32.totalorder %s479, %s480
      %p492 = scmp.eq.s32.totalorder %s32, 4
      %p493 = por %p491, %p492
      %p495 = scmp.ne.s32.totalorder %s480, %s494
      %p496 = scmp.eq.s32.totalorder %s32, 0
      %p497 = por %p495, %p496
      %p498 = scmp.le.s32.totalorder 1, %s26
      %p499 = scmp.lt.s32.totalorder %s26, 6
      %p500 = pnand %p498, %p499
      %p501 = pneg %p500
      // Predicated region
      $region9: #{futoshiki_forward.6} parent=5 // pred_check
        _
      $region10: #{futoshiki_forward.6} parent=5 // pred_check_branch
        %503 = sbr.rel (%p500) target = $region12
      $region11: #{futoshiki_forward.6} parent=5 // pred_region
        %s504 = ssub.s32 %s26, 1
        // Predicated region
        $region13: #{futoshiki_forward.6} parent=11 // pred_check
          %p505 = pneg %p385
        $region14: #{futoshiki_forward.6} parent=11 // pred_check_branch
          %507 = sbr.rel (%p505) target = $region16
        $region15: #{futoshiki_forward.6} parent=11 // pred_region
          _
        $region16: #{futoshiki_forward.6} parent=11 // pred_fallthru
          _
        // Predicated region
        $region17: #{futoshiki_forward.6} parent=11 // pred_check
          %p508 = pneg %p406
        $region18: #{futoshiki_forward.6} parent=11 // pred_check_branch
          %510 = sbr.rel (%p508) target = $region20
        $region19: #{futoshiki_forward.6} parent=11 // pred_region
          _
        $region20: #{futoshiki_forward.6} parent=11 // pred_fallthru
          _
        // Predicated region
        $region21: #{futoshiki_forward.6} parent=11 // pred_check
          %p511 = pneg %p427
        $region22: #{futoshiki_forward.6} parent=11 // pred_check_branch
          %513 = sbr.rel (%p511) target = $region24
        $region23: #{futoshiki_forward.6} parent=11 // pred_region
          _
        $region24: #{futoshiki_forward.6} parent=11 // pred_fallthru
          _
        // Predicated region
        $region25: #{futoshiki_forward.6} parent=11 // pred_check
          %p514 = pneg %p448
        $region26: #{futoshiki_forward.6} parent=11 // pred_check_branch
          %516 = sbr.rel (%p514) target = $region28
        $region27: #{futoshiki_forward.6} parent=11 // pred_region
          _
        $region28: #{futoshiki_forward.6} parent=11 // pred_fallthru
          _
      $region12: #{futoshiki_forward.6} parent=5 // pred_fallthru
        _
      %p517 = scmp.lt.s32.totalorder %s26, 5
      // Predicated region
      $region29: #{futoshiki_forward.6} parent=5 // pred_check
        %p518 = pneg %p517
      $region30: #{futoshiki_forward.6} parent=5 // pred_check_branch
        %520 = sbr.rel (%p518) target = $region32
      $region31: #{futoshiki_forward.6} parent=5 // pred_region
        // Predicated region
        $region33: #{futoshiki_forward.6} parent=31 // pred_check
          %p521 = pneg %p46
        $region34: #{futoshiki_forward.6} parent=31 // pred_check_branch
          %523 = sbr.rel (%p521) target = $region36
        $region35: #{futoshiki_forward.6} parent=31 // pred_region
          %p524 = scmp.lt.s32.totalorder %s26, 4
          %s525 = scalar_select %p524, %s26, 4
          %s526 = smul.addr %s525, 24
          %s527 = smul.addr %s526, 8
          %s528 = scalar_lea.vmem %s0, %s527
        $region36: #{futoshiki_forward.6} parent=31 // pred_fallthru
          _
        // Predicated region
        $region37: #{futoshiki_forward.6} parent=31 // pred_check
          %p529 = pneg %p72
        $region38: #{futoshiki_forward.6} parent=31 // pred_check_branch
          %531 = sbr.rel (%p529) target = $region40
        $region39: #{futoshiki_forward.6} parent=31 // pred_region
          %p532 = scmp.lt.s32.totalorder %s26, 4
          %s533 = scalar_select %p532, %s26, 4
          %s534 = smul.addr %s533, 24
          %s535 = smul.addr %s534, 8
          %s536 = scalar_lea.vmem %s1, %s535
        $region40: #{futoshiki_forward.6} parent=31 // pred_fallthru
          _
        // Predicated region
        $region41: #{futoshiki_forward.6} parent=31 // pred_check
          %p537 = pneg %p98
        $region42: #{futoshiki_forward.6} parent=31 // pred_check_branch
          %539 = sbr.rel (%p537) target = $region44
        $region43: #{futoshiki_forward.6} parent=31 // pred_region
          %p540 = scmp.lt.s32.totalorder %s26, 4
          %s541 = scalar_select %p540, %s26, 4
          %s542 = smul.addr %s541, 8
          %s543 = smul.addr %s542, 8
          %s544 = scalar_lea.vmem %s2, %s543
        $region44: #{futoshiki_forward.6} parent=31 // pred_fallthru
          _
        // Predicated region
        $region45: #{futoshiki_forward.6} parent=31 // pred_check
          %p545 = pneg %p124
        $region46: #{futoshiki_forward.6} parent=31 // pred_check_branch
          %547 = sbr.rel (%p545) target = $region48
        $region47: #{futoshiki_forward.6} parent=31 // pred_region
          %p548 = scmp.lt.s32.totalorder %s26, 4
          %s549 = scalar_select %p548, %s26, 4
          %s550 = smul.addr %s549, 16
          %s551 = smul.addr %s550, 8
          %s552 = scalar_lea.vmem %s3, %s551
        $region48: #{futoshiki_forward.6} parent=31 // pred_fallthru
          _
        // Predicated region
        $region49: #{futoshiki_forward.6} parent=31 // pred_check
          %p553 = pneg %p150
        $region50: #{futoshiki_forward.6} parent=31 // pred_check_branch
          %555 = sbr.rel (%p553) target = $region52
        $region51: #{futoshiki_forward.6} parent=31 // pred_region
          %p556 = scmp.lt.s32.totalorder %s26, 4
          %s557 = scalar_select %p556, %s26, 4
          %s558 = smul.addr %s557, 16
          %s559 = smul.addr %s558, 8
          %s560 = scalar_lea.vmem %s4, %s559
        $region52: #{futoshiki_forward.6} parent=31 // pred_fallthru
          _
        // Predicated region
        $region53: #{futoshiki_forward.6} parent=31 // pred_check
          %p561 = pneg %p176
        $region54: #{futoshiki_forward.6} parent=31 // pred_check_branch
          %563 = sbr.rel (%p561) target = $region56
        $region55: #{futoshiki_forward.6} parent=31 // pred_region
          %p564 = scmp.lt.s32.totalorder %s26, 4
          %s565 = scalar_select %p564, %s26, 4
          %s566 = scalar_lea.vmem %s5, %s565
        $region56: #{futoshiki_forward.6} parent=31 // pred_fallthru
          _
        // Predicated region
        $region57: #{futoshiki_forward.6} parent=31 // pred_check
          %p567 = pneg %p202
        $region58: #{futoshiki_forward.6} parent=31 // pred_check_branch
          %569 = sbr.rel (%p567) target = $region60
        $region59: #{futoshiki_forward.6} parent=31 // pred_region
          %p570 = scmp.lt.s32.totalorder %s26, 4
          %s571 = scalar_select %p570, %s26, 4
          %s572 = smul.addr %s571, 16
          %s573 = smul.addr %s572, 8
          %s574 = scalar_lea.vmem %s6, %s573
        $region60: #{futoshiki_forward.6} parent=31 // pred_fallthru
          _
        // Predicated region
        $region61: #{futoshiki_forward.6} parent=31 // pred_check
          %p575 = pneg %p228
        $region62: #{futoshiki_forward.6} parent=31 // pred_check_branch
          %577 = sbr.rel (%p575) target = $region64
        $region63: #{futoshiki_forward.6} parent=31 // pred_region
          %p578 = scmp.lt.s32.totalorder %s26, 4
          %s579 = scalar_select %p578, %s26, 4
          %s580 = scalar_lea.vmem %s7, %s579
        $region64: #{futoshiki_forward.6} parent=31 // pred_fallthru
          _
        // Predicated region
        $region65: #{futoshiki_forward.6} parent=31 // pred_check
          %p581 = pneg %p254
        $region66: #{futoshiki_forward.6} parent=31 // pred_check_branch
          %583 = sbr.rel (%p581) target = $region68
        $region67: #{futoshiki_forward.6} parent=31 // pred_region
          %p584 = scmp.lt.s32.totalorder %s26, 4
          %s585 = scalar_select %p584, %s26, 4
          %s586 = smul.addr %s585, 16
          %s587 = smul.addr %s586, 8
          %s588 = scalar_lea.vmem %s8, %s587
        $region68: #{futoshiki_forward.6} parent=31 // pred_fallthru
          _
        // Predicated region
        $region69: #{futoshiki_forward.6} parent=31 // pred_check
          %p589 = pneg %p280
        $region70: #{futoshiki_forward.6} parent=31 // pred_check_branch
          %591 = sbr.rel (%p589) target = $region72
        $region71: #{futoshiki_forward.6} parent=31 // pred_region
          %p592 = scmp.lt.s32.totalorder %s26, 4
          %s593 = scalar_select %p592, %s26, 4
          %s594 = scalar_lea.vmem %s9, %s593
        $region72: #{futoshiki_forward.6} parent=31 // pred_fallthru
          _
        // Predicated region
        $region73: #{futoshiki_forward.6} parent=31 // pred_check
          %p595 = pneg %p306
        $region74: #{futoshiki_forward.6} parent=31 // pred_check_branch
          %597 = sbr.rel (%p595) target = $region76
        $region75: #{futoshiki_forward.6} parent=31 // pred_region
          %p598 = scmp.lt.s32.totalorder %s26, 4
          %s599 = scalar_select %p598, %s26, 4
          %s600 = smul.addr %s599, 16
          %s601 = smul.addr %s600, 8
          %s602 = scalar_lea.vmem %s10, %s601
        $region76: #{futoshiki_forward.6} parent=31 // pred_fallthru
          _
        // Predicated region
        $region77: #{futoshiki_forward.6} parent=31 // pred_check
          %p603 = pneg %p332
        $region78: #{futoshiki_forward.6} parent=31 // pred_check_branch
          %605 = sbr.rel (%p603) target = $region80
        $region79: #{futoshiki_forward.6} parent=31 // pred_region
          %p606 = scmp.lt.s32.totalorder %s26, 4
          %s607 = scalar_select %p606, %s26, 4
          %s608 = scalar_lea.vmem %s11, %s607
        $region80: #{futoshiki_forward.6} parent=31 // pred_fallthru
          _
        // Predicated region
        $region81: #{futoshiki_forward.6} parent=31 // pred_check
          %p609 = pneg %p358
        $region82: #{futoshiki_forward.6} parent=31 // pred_check_branch
          %611 = sbr.rel (%p609) target = $region84
        $region83: #{futoshiki_forward.6} parent=31 // pred_region
          %p612 = scmp.lt.s32.totalorder %s26, 4
          %s613 = scalar_select %p612, %s26, 4
          %s614 = smul.addr %s613, 64
          %s615 = smul.addr %s614, 8
          %s616 = scalar_lea.vmem %s12, %s615
        $region84: #{futoshiki_forward.6} parent=31 // pred_fallthru
          _
      $region32: #{futoshiki_forward.6} parent=5 // pred_fallthru
        _
      %p617 = scmp.le.s32.totalorder 1, %s26
      %p618 = scmp.lt.s32.totalorder %s26, 6
      %p619 = pnand %p617, %p618
      %p620 = pneg %p619
      // Predicated region
      $region85: #{futoshiki_forward.6} parent=5 // pred_check
        _
      $region86: #{futoshiki_forward.6} parent=5 // pred_check_branch
        %622 = sbr.rel (%p619) target = $region88
      $region87: #{futoshiki_forward.6} parent=5 // pred_region
        %s623 = ssub.s32 %s26, 1
        %p624 = scmp.lt.s32.totalorder %s31, 4
        %s625 = scalar_select %p624, %s31, 4
        %s626 = smul.addr %s625, 24
        %s627 = smul.addr %s626, 8
        %s628 = scalar_lea.vmem %s0, %s627
        %p629 = pneg %p52
        %p630 = pneg %p49
        %p631 = scmp.lt.s32.totalorder %s31, 4
        %s632 = scalar_select %p631, %s31, 4
        %s633 = smul.addr %s632, 24
        %s634 = smul.addr %s633, 8
        %s635 = scalar_lea.vmem %s1, %s634
        %p636 = pneg %p78
        %p637 = pneg %p75
        %p638 = scmp.lt.s32.totalorder %s31, 4
        %s639 = scalar_select %p638, %s31, 4
        %s640 = smul.addr %s639, 8
        %s641 = smul.addr %s640, 8
        %s642 = scalar_lea.vmem %s2, %s641
        %p643 = pneg %p104
        %p644 = pneg %p101
        %p645 = scmp.lt.s32.totalorder %s31, 4
        %s646 = scalar_select %p645, %s31, 4
        %s647 = smul.addr %s646, 16
        %s648 = smul.addr %s647, 8
        %s649 = scalar_lea.vmem %s3, %s648
        %p650 = pneg %p130
        %p651 = pneg %p127
        %p652 = scmp.lt.s32.totalorder %s31, 4
        %s653 = scalar_select %p652, %s31, 4
        %s654 = smul.addr %s653, 16
        %s655 = smul.addr %s654, 8
        %s656 = scalar_lea.vmem %s4, %s655
        %p657 = pneg %p156
        %p658 = pneg %p153
        %p659 = scmp.lt.s32.totalorder %s31, 4
        %s660 = scalar_select %p659, %s31, 4
        %s661 = scalar_lea.vmem %s5, %s660
        %p662 = pneg %p182
        %p663 = pneg %p179
        %p664 = scmp.lt.s32.totalorder %s31, 4
        %s665 = scalar_select %p664, %s31, 4
        %s666 = smul.addr %s665, 16
        %s667 = smul.addr %s666, 8
        %s668 = scalar_lea.vmem %s6, %s667
        %p669 = pneg %p208
        %p670 = pneg %p205
        %p671 = scmp.lt.s32.totalorder %s31, 4
        %s672 = scalar_select %p671, %s31, 4
        %s673 = scalar_lea.vmem %s7, %s672
        %p674 = pneg %p234
        %p675 = pneg %p231
        %p676 = scmp.lt.s32.totalorder %s31, 4
        %s677 = scalar_select %p676, %s31, 4
        %s678 = smul.addr %s677, 16
        %s679 = smul.addr %s678, 8
        %s680 = scalar_lea.vmem %s8, %s679
        %p681 = pneg %p260
        %p682 = pneg %p257
        %p683 = scmp.lt.s32.totalorder %s31, 4
        %s684 = scalar_select %p683, %s31, 4
        %s685 = scalar_lea.vmem %s9, %s684
        %p686 = pneg %p286
        %p687 = pneg %p283
        %p688 = scmp.lt.s32.totalorder %s31, 4
        %s689 = scalar_select %p688, %s31, 4
        %s690 = smul.addr %s689, 16
        %s691 = smul.addr %s690, 8
        %s692 = scalar_lea.vmem %s10, %s691
        %p693 = pneg %p312
        %p694 = pneg %p309
        %p695 = scmp.lt.s32.totalorder %s31, 4
        %s696 = scalar_select %p695, %s31, 4
        %s697 = scalar_lea.vmem %s11, %s696
        %p698 = pneg %p338
        %p699 = pneg %p335
        %p700 = scmp.lt.s32.totalorder %s31, 4
        %s701 = scalar_select %p700, %s31, 4
        %s702 = smul.addr %s701, 64
        %s703 = smul.addr %s702, 8
        %s704 = scalar_lea.vmem %s12, %s703
        %p705 = pneg %p364
        %p706 = pneg %p361
        %p707 = pneg %p385
        %p708 = pneg %p382
        %p709 = pneg %p406
        %p710 = pneg %p403
        %p711 = pneg %p427
        %p712 = pneg %p424
        %p713 = pneg %p448
        %p714 = pneg %p445
        %p715 = pneg %p469
        %p716 = pneg %p466
        %p717 = pneg %p490
        %p718 = pneg %p487
        %p719 = scmp.lt.s32.totalorder %s31, 4
        %s720 = scalar_select %p719, %s31, 4
        %s721 = smul.addr %s720, 24
        %s722 = smul.addr %s721, 8
        %s723 = scalar_lea.vmem %s0, %s722
        %p724 = scmp.lt.s32.totalorder %s31, 4
        %s725 = scalar_select %p724, %s31, 4
        %s726 = smul.addr %s725, 24
        %s727 = smul.addr %s726, 8
        %s728 = scalar_lea.vmem %s1, %s727
        %p729 = scmp.lt.s32.totalorder %s31, 4
        %s730 = scalar_select %p729, %s31, 4
        %s731 = smul.addr %s730, 8
        %s732 = smul.addr %s731, 8
        %s733 = scalar_lea.vmem %s2, %s732
        %p734 = scmp.lt.s32.totalorder %s31, 4
        %s735 = scalar_select %p734, %s31, 4
        %s736 = smul.addr %s735, 16
        %s737 = smul.addr %s736, 8
        %s738 = scalar_lea.vmem %s3, %s737
        %p739 = scmp.lt.s32.totalorder %s31, 4
        %s740 = scalar_select %p739, %s31, 4
        %s741 = smul.addr %s740, 16
        %s742 = smul.addr %s741, 8
        %s743 = scalar_lea.vmem %s4, %s742
        %p744 = scmp.lt.s32.totalorder %s31, 4
        %s745 = scalar_select %p744, %s31, 4
        %s746 = scalar_lea.vmem %s5, %s745
        %p747 = scmp.lt.s32.totalorder %s31, 4
        %s748 = scalar_select %p747, %s31, 4
        %s749 = smul.addr %s748, 16
        %s750 = smul.addr %s749, 8
        %s751 = scalar_lea.vmem %s6, %s750
        %p752 = scmp.lt.s32.totalorder %s31, 4
        %s753 = scalar_select %p752, %s31, 4
        %s754 = scalar_lea.vmem %s7, %s753
        %p755 = scmp.lt.s32.totalorder %s31, 4
        %s756 = scalar_select %p755, %s31, 4
        %s757 = smul.addr %s756, 16
        %s758 = smul.addr %s757, 8
        %s759 = scalar_lea.vmem %s8, %s758
        %p760 = scmp.lt.s32.totalorder %s31, 4
        %s761 = scalar_select %p760, %s31, 4
        %s762 = scalar_lea.vmem %s9, %s761
        %p763 = scmp.lt.s32.totalorder %s31, 4
        %s764 = scalar_select %p763, %s31, 4
        %s765 = smul.addr %s764, 16
        %s766 = smul.addr %s765, 8
        %s767 = scalar_lea.vmem %s10, %s766
        %p768 = scmp.lt.s32.totalorder %s31, 4
        %s769 = scalar_select %p768, %s31, 4
        %s770 = scalar_lea.vmem %s11, %s769
        %p771 = scmp.lt.s32.totalorder %s31, 4
        %s772 = scalar_select %p771, %s31, 4
        %s773 = smul.addr %s772, 64
        %s774 = smul.addr %s773, 8
        %s775 = scalar_lea.vmem %s12, %s774
        %v776 = vld [vmem:[%s14] sm:$0xff]
        %v777 = vld [vmem:[%s14 + $0x8] sm:$0xff]
        %v778 = vld [vmem:[%s14 + $0x10] sm:$0xff]
        %v779 = vld [vmem:[%s14 + $0x18] sm:$0xff]
        %v780 = vld [vmem:[%s16] sm:$0xff]
        %v781 = vld [vmem:[%s16 + $0x8] sm:$0xff]
        %v782 = vld [vmem:[%s16 + $0x10] sm:$0xff]
        %v783 = vld [vmem:[%s16 + $0x18] sm:$0xff]
        %v784 = vld [vmem:[%s16 + $0x20] sm:$0xff]
        %v785 = vld [vmem:[%s16 + $0x28] sm:$0xff]
        %v786 = vld [vmem:[%s16 + $0x30] sm:$0xff]
        %v787 = vld [vmem:[%s16 + $0x38] sm:$0xff]
        %v788 = vld [vmem:[%s16 + $0x40] sm:$0xff]
        %v789 = vld [vmem:[%s16 + $0x48] sm:$0xff]
        %v790 = vld [vmem:[%s16 + $0x50] sm:$0xff]
        %v791 = vld [vmem:[%s16 + $0x58] sm:$0xff]
        %v792 = vld [vmem:[%s16 + $0x60] sm:$0xff]
        %v793 = vld [vmem:[%s16 + $0x68] sm:$0xff]
        %v794 = vld [vmem:[%s16 + $0x70] sm:$0xff]
        %v795 = vld [vmem:[%s16 + $0x78] sm:$0xff]
        %v796 = vld [vmem:[%s16 + $0x80] sm:$0xff]
        %v797 = vld [vmem:[%s16 + $0x88] sm:$0xff]
        %v798 = vld [vmem:[%s16 + $0x90] sm:$0xff]
        %v799 = vld [vmem:[%s16 + $0x98] sm:$0xff]
        %v800 = vld [vmem:[%s16 + $0xa0] sm:$0xff]
        %v801 = vld [vmem:[%s16 + $0xa8] sm:$0xff]
        %v802 = vld [vmem:[%s16 + $0xb0] sm:$0xff]
        %v803 = vld [vmem:[%s16 + $0xb8] sm:$0xff]
        %v804 = vld [vmem:[%s16 + $0xc0] sm:$0xff]
        %v805 = vld [vmem:[%s16 + $0xc8] sm:$0xff]
        %v806 = vld [vmem:[%s16 + $0xd0] sm:$0xff]
        %v807 = vld [vmem:[%s16 + $0xd8] sm:$0xff]
        %v808 = vld [vmem:[%s16 + $0xe0] sm:$0xff]
        %v809 = vld [vmem:[%s16 + $0xe8] sm:$0xff]
        %v810 = vld [vmem:[%s16 + $0xf0] sm:$0xff]
        %v811 = vld [vmem:[%s16 + $0xf8] sm:$0xff]
        %v812 = vld [vmem:[%s16 + $0x100] sm:$0xff]
        %v813 = vld [vmem:[%s16 + $0x108] sm:$0xff]
        %v814 = vld [vmem:[%s16 + $0x110] sm:$0xff]
        %v815 = vld [vmem:[%s16 + $0x118] sm:$0xff]
        %v816 = vld [vmem:[%s16 + $0x120] sm:$0xff]
        %v817 = vld [vmem:[%s16 + $0x128] sm:$0xff]
        %v818 = vld [vmem:[%s16 + $0x130] sm:$0xff]
        %v819 = vld [vmem:[%s16 + $0x138] sm:$0xff]
        %v820 = vld [vmem:[%s16 + $0x140] sm:$0xff]
        %v821 = vld [vmem:[%s16 + $0x148] sm:$0xff]
        %v822 = vld [vmem:[%s16 + $0x150] sm:$0xff]
        %v823 = vld [vmem:[%s16 + $0x158] sm:$0xff]
        %v824 = vld [vmem:[%s16 + $0x160] sm:$0xff]
        %v825 = vld [vmem:[%s16 + $0x168] sm:$0xff]
        %v826 = vld [vmem:[%s16 + $0x170] sm:$0xff]
        %v827 = vld [vmem:[%s16 + $0x178] sm:$0xff]
        %v828 = vld [vmem:[%s16 + $0x180] sm:$0xff]
        %v829 = vld [vmem:[%s16 + $0x188] sm:$0xff]
        %v830 = vld [vmem:[%s16 + $0x190] sm:$0xff]
        %v831 = vld [vmem:[%s16 + $0x198] sm:$0xff]
        %v832 = vld [vmem:[%s16 + $0x1a0] sm:$0xff]
        %v833 = vld [vmem:[%s16 + $0x1a8] sm:$0xff]
        %v834 = vld [vmem:[%s16 + $0x1b0] sm:$0xff]
        %v835 = vld [vmem:[%s16 + $0x1b8] sm:$0xff]
        %v836 = vld [vmem:[%s16 + $0x1c0] sm:$0xff]
        %v837 = vld [vmem:[%s16 + $0x1c8] sm:$0xff]
        %v838 = vld [vmem:[%s16 + $0x1d0] sm:$0xff]
        %v839 = vld [vmem:[%s16 + $0x1d8] sm:$0xff]
        %v840 = vld [vmem:[%s16 + $0x1e0] sm:$0xff]
        %v841 = vld [vmem:[%s16 + $0x1e8] sm:$0xff]
        %v842 = vld [vmem:[%s16 + $0x1f0] sm:$0xff]
        %v843 = vld [vmem:[%s16 + $0x1f8] sm:$0xff]
        %844 = vmatpush.msra.mxu0 %v840
        %845 = vmatpush.msra.mxu0 %v836
        %846 = vmatpush.msra.mxu0 %v832
        %847 = vmatpush.msra.mxu0 %v828
        %848 = vmatpush.msra.mxu0 %v824
        %849 = vmatpush.msra.mxu0 %v820
        %850 = vmatpush.msra.mxu0 %v816
        %851 = vmatpush.msra.mxu0 %v812
        %852 = vmatpush.msra.mxu0 %v808
        %853 = vmatpush.msra.mxu0 %v804
        %854 = vmatpush.msra.mxu0 %v800
        %855 = vmatpush.msra.mxu0 %v796
        %856 = vmatpush.msra.mxu0 %v792
        %857 = vmatpush.msra.mxu0 %v788
        %858 = vmatpush.msra.mxu0 %v784
        %859 = vmatpush.msra.mxu0 %v780
        %860 = vmatmul.f32.gmra.mxu0 %v776
        %v861 = vpop.f32.mrf.mxu0
        %v862 = vadd.f32 0.0, %v861
        %863 = vmatmul.f32.gmra.mxu0 %v777
        %v864 = vpop.f32.mrf.mxu0
        %v865 = vadd.f32 0.0, %v864
        %866 = vmatmul.f32.gmra.mxu0 %v778
        %v867 = vpop.f32.mrf.mxu0
        %v868 = vadd.f32 0.0, %v867
        %869 = vmatmul.f32.gmra.mxu0 %v779
        %v870 = vpop.f32.mrf.mxu0
        %v871 = vadd.f32 0.0, %v870
        %872 = vdwg.mxu0
        %873 = vmatpush.msra.mxu0 %v841
        %874 = vmatpush.msra.mxu0 %v837
        %875 = vmatpush.msra.mxu0 %v833
        %876 = vmatpush.msra.mxu0 %v829
        %877 = vmatpush.msra.mxu0 %v825
        %878 = vmatpush.msra.mxu0 %v821
        %879 = vmatpush.msra.mxu0 %v817
        %880 = vmatpush.msra.mxu0 %v813
        %881 = vmatpush.msra.mxu0 %v809
        %882 = vmatpush.msra.mxu0 %v805
        %883 = vmatpush.msra.mxu0 %v801
        %884 = vmatpush.msra.mxu0 %v797
        %885 = vmatpush.msra.mxu0 %v793
        %886 = vmatpush.msra.mxu0 %v789
        %887 = vmatpush.msra.mxu0 %v785
        %888 = vmatpush.msra.mxu0 %v781
        %889 = vmatmul.f32.gmra.mxu0 %v776
        %v890 = vpop.f32.mrf.mxu0
        %v891 = vadd.f32 0.0, %v890
        %892 = vmatmul.f32.gmra.mxu0 %v777
        %v893 = vpop.f32.mrf.mxu0
        %v894 = vadd.f32 0.0, %v893
        %895 = vmatmul.f32.gmra.mxu0 %v778
        %v896 = vpop.f32.mrf.mxu0
        %v897 = vadd.f32 0.0, %v896
        %898 = vmatmul.f32.gmra.mxu0 %v779
        %v899 = vpop.f32.mrf.mxu0
        %v900 = vadd.f32 0.0, %v899
        %901 = vdwg.mxu0
        %902 = vmatpush.msra.mxu0 %v842
        %903 = vmatpush.msra.mxu0 %v838
        %904 = vmatpush.msra.mxu0 %v834
        %905 = vmatpush.msra.mxu0 %v830
        %906 = vmatpush.msra.mxu0 %v826
        %907 = vmatpush.msra.mxu0 %v822
        %908 = vmatpush.msra.mxu0 %v818
        %909 = vmatpush.msra.mxu0 %v814
        %910 = vmatpush.msra.mxu0 %v810
        %911 = vmatpush.msra.mxu0 %v806
        %912 = vmatpush.msra.mxu0 %v802
        %913 = vmatpush.msra.mxu0 %v798
        %914 = vmatpush.msra.mxu0 %v794
        %915 = vmatpush.msra.mxu0 %v790
        %916 = vmatpush.msra.mxu0 %v786
        %917 = vmatpush.msra.mxu0 %v782
        %918 = vmatmul.f32.gmra.mxu0 %v776
        %v919 = vpop.f32.mrf.mxu0
        %v920 = vadd.f32 0.0, %v919
        %921 = vmatmul.f32.gmra.mxu0 %v777
        %v922 = vpop.f32.mrf.mxu0
        %v923 = vadd.f32 0.0, %v922
        %924 = vmatmul.f32.gmra.mxu0 %v778
        %v925 = vpop.f32.mrf.mxu0
        %v926 = vadd.f32 0.0, %v925
        %927 = vmatmul.f32.gmra.mxu0 %v779
        %v928 = vpop.f32.mrf.mxu0
        %v929 = vadd.f32 0.0, %v928
        %930 = vdwg.mxu0
        %931 = vmatpush.msra.mxu0 %v843
        %932 = vmatpush.msra.mxu0 %v839
        %933 = vmatpush.msra.mxu0 %v835
        %934 = vmatpush.msra.mxu0 %v831
        %935 = vmatpush.msra.mxu0 %v827
        %936 = vmatpush.msra.mxu0 %v823
        %937 = vmatpush.msra.mxu0 %v819
        %938 = vmatpush.msra.mxu0 %v815
        %939 = vmatpush.msra.mxu0 %v811
        %940 = vmatpush.msra.mxu0 %v807
        %941 = vmatpush.msra.mxu0 %v803
        %942 = vmatpush.msra.mxu0 %v799
        %943 = vmatpush.msra.mxu0 %v795
        %944 = vmatpush.msra.mxu0 %v791
        %945 = vmatpush.msra.mxu0 %v787
        %946 = vmatpush.msra.mxu0 %v783
        %947 = vmatmul.f32.gmra.mxu0 %v776
        %v948 = vpop.f32.mrf.mxu0
        %v949 = vadd.f32 0.0, %v948
        %950 = vmatmul.f32.gmra.mxu0 %v777
        %v951 = vpop.f32.mrf.mxu0
        %v952 = vadd.f32 0.0, %v951
        %953 = vmatmul.f32.gmra.mxu0 %v778
        %v954 = vpop.f32.mrf.mxu0
        %v955 = vadd.f32 0.0, %v954
        %956 = vmatmul.f32.gmra.mxu0 %v779
        %v957 = vpop.f32.mrf.mxu0
        %v958 = vadd.f32 0.0, %v957
        %959 = vdwg.mxu0
        %p960 = scmp.eq.s32.totalorder %s31, 0
        // Predicated region
        $region89: #{futoshiki_forward.6} parent=87 // pred_check
          %p961 = pneg %p960
        $region90: #{futoshiki_forward.6} parent=87 // pred_check_branch
          %963 = sbr.rel (%p961) target = $region92
        $region91: #{futoshiki_forward.6} parent=87 // pred_region
          %v964 = vld [vmem:[%s13] sm:$0xff]
          %v965 = vld [vmem:[%s13 + $0x8] sm:$0xff]
          %v966 = vld [vmem:[%s13 + $0x10] sm:$0xff]
          %v967 = vld [vmem:[%s13 + $0x18] sm:$0xff]
          %v968 = vld [vmem:[%s13 + $0x20] sm:$0xff]
          %v969 = vld [vmem:[%s13 + $0x28] sm:$0xff]
          %v970 = vld [vmem:[%s13 + $0x30] sm:$0xff]
          %v971 = vld [vmem:[%s13 + $0x38] sm:$0xff]
          %v972 = vld [vmem:[%s13 + $0x40] sm:$0xff]
          %v973 = vld [vmem:[%s13 + $0x48] sm:$0xff]
          %v974 = vld [vmem:[%s13 + $0x50] sm:$0xff]
          %v975 = vld [vmem:[%s13 + $0x58] sm:$0xff]
          %v976 = vld [vmem:[%s13 + $0x60] sm:$0xff]
          %v977 = vld [vmem:[%s13 + $0x68] sm:$0xff]
          %v978 = vld [vmem:[%s13 + $0x70] sm:$0xff]
          %v979 = vld [vmem:[%s13 + $0x78] sm:$0xff]
          %v980 = vadd.f32 %v964, %v862
          %v981 = vadd.f32 %v965, %v891
          %v982 = vadd.f32 %v966, %v920
          %v983 = vadd.f32 %v967, %v949
          %v984 = vadd.f32 %v968, %v865
          %v985 = vadd.f32 %v969, %v894
          %v986 = vadd.f32 %v970, %v923
          %v987 = vadd.f32 %v971, %v952
          %v988 = vadd.f32 %v972, %v868
          %v989 = vadd.f32 %v973, %v897
          %v990 = vadd.f32 %v974, %v926
          %v991 = vadd.f32 %v975, %v955
          %v992 = vadd.f32 %v976, %v871
          %v993 = vadd.f32 %v977, %v900
          %v994 = vadd.f32 %v978, %v929
          %v995 = vadd.f32 %v979, %v958
          %996 = vst [vmem:[#allocation2] sm:$0xff] %v980
          %997 = vst [vmem:[#allocation2 + $0x8] sm:$0xff] %v981
          %998 = vst [vmem:[#allocation2 + $0x10] sm:$0xff] %v982
          %999 = vst [vmem:[#allocation2 + $0x18] sm:$0xff] %v983
          %1000 = vst [vmem:[#allocation2 + $0x20] sm:$0xff] %v984
          %1001 = vst [vmem:[#allocation2 + $0x28] sm:$0xff] %v985
          %1002 = vst [vmem:[#allocation2 + $0x30] sm:$0xff] %v986
          %1003 = vst [vmem:[#allocation2 + $0x38] sm:$0xff] %v987
          %1004 = vst [vmem:[#allocation2 + $0x40] sm:$0xff] %v988
          %1005 = vst [vmem:[#allocation2 + $0x48] sm:$0xff] %v989
          %1006 = vst [vmem:[#allocation2 + $0x50] sm:$0xff] %v990
          %1007 = vst [vmem:[#allocation2 + $0x58] sm:$0xff] %v991
          %1008 = vst [vmem:[#allocation2 + $0x60] sm:$0xff] %v992
          %1009 = vst [vmem:[#allocation2 + $0x68] sm:$0xff] %v993
          %1010 = vst [vmem:[#allocation2 + $0x70] sm:$0xff] %v994
          %1011 = vst [vmem:[#allocation2 + $0x78] sm:$0xff] %v995
        $region92: #{futoshiki_forward.6} parent=87 // pred_fallthru
          _
        %v1012 = vld [vmem:[%s723] sm:$0xff]
        %v1013 = vld [vmem:[%s723 + $0x8] sm:$0xff]
        %v1014 = vld [vmem:[%s723 + $0x10] sm:$0xff]
        %v1015 = vld [vmem:[%s723 + $0x18] sm:$0xff]
        %v1016 = vld [vmem:[%s723 + $0x20] sm:$0xff]
        %v1017 = vld [vmem:[%s723 + $0x28] sm:$0xff]
        %v1018 = vld [vmem:[%s723 + $0x30] sm:$0xff]
        %v1019 = vld [vmem:[%s723 + $0x38] sm:$0xff]
        %v1020 = vld [vmem:[%s723 + $0x40] sm:$0xff]
        %v1021 = vld [vmem:[%s723 + $0x48] sm:$0xff]
        %v1022 = vld [vmem:[%s723 + $0x50] sm:$0xff]
        %v1023 = vld [vmem:[%s723 + $0x58] sm:$0xff]
        %v1024 = vld [vmem:[%s723 + $0x60] sm:$0xff]
        %v1025 = vld [vmem:[%s723 + $0x68] sm:$0xff]
        %v1026 = vld [vmem:[%s723 + $0x70] sm:$0xff]
        %v1027 = vld [vmem:[%s723 + $0x78] sm:$0xff]
        %v1028 = vld [vmem:[%s723 + $0x80] sm:$0xff]
        %v1029 = vld [vmem:[%s723 + $0x88] sm:$0xff]
        %v1030 = vld [vmem:[%s723 + $0x90] sm:$0xff]
        %v1031 = vld [vmem:[%s723 + $0x98] sm:$0xff]
        %v1032 = vld [vmem:[%s723 + $0xa0] sm:$0xff]
        %v1033 = vld [vmem:[%s723 + $0xa8] sm:$0xff]
        %v1034 = vld [vmem:[%s723 + $0xb0] sm:$0xff]
        %v1035 = vld [vmem:[%s723 + $0xb8] sm:$0xff]
        %v1036 = vld [vmem:[%s728] sm:$0xff]
        %v1037 = vld [vmem:[%s728 + $0x8] sm:$0xff]
        %v1038 = vld [vmem:[%s728 + $0x10] sm:$0xff]
        %v1039 = vld [vmem:[%s728 + $0x18] sm:$0xff]
        %v1040 = vld [vmem:[%s728 + $0x20] sm:$0xff]
        %v1041 = vld [vmem:[%s728 + $0x28] sm:$0xff]
        %v1042 = vld [vmem:[%s728 + $0x30] sm:$0xff]
        %v1043 = vld [vmem:[%s728 + $0x38] sm:$0xff]
        %v1044 = vld [vmem:[%s728 + $0x40] sm:$0xff]
        %v1045 = vld [vmem:[%s728 + $0x48] sm:$0xff]
        %v1046 = vld [vmem:[%s728 + $0x50] sm:$0xff]
        %v1047 = vld [vmem:[%s728 + $0x58] sm:$0xff]
        %v1048 = vld [vmem:[%s728 + $0x60] sm:$0xff]
        %v1049 = vld [vmem:[%s728 + $0x68] sm:$0xff]
        %v1050 = vld [vmem:[%s728 + $0x70] sm:$0xff]
        %v1051 = vld [vmem:[%s728 + $0x78] sm:$0xff]
        %v1052 = vld [vmem:[%s728 + $0x80] sm:$0xff]
        %v1053 = vld [vmem:[%s728 + $0x88] sm:$0xff]
        %v1054 = vld [vmem:[%s728 + $0x90] sm:$0xff]
        %v1055 = vld [vmem:[%s728 + $0x98] sm:$0xff]
        %v1056 = vld [vmem:[%s728 + $0xa0] sm:$0xff]
        %v1057 = vld [vmem:[%s728 + $0xa8] sm:$0xff]
        %v1058 = vld [vmem:[%s728 + $0xb0] sm:$0xff]
        %v1059 = vld [vmem:[%s728 + $0xb8] sm:$0xff]
        %v1060 = vld [vmem:[%s738] sm:$0xff]
        %v1061 = vld [vmem:[%s738 + $0x8] sm:$0xff]
        %v1062 = vld [vmem:[%s738 + $0x10] sm:$0xff]
        %v1063 = vld [vmem:[%s738 + $0x18] sm:$0xff]
        %v1064 = vld [vmem:[%s738 + $0x20] sm:$0xff]
        %v1065 = vld [vmem:[%s738 + $0x28] sm:$0xff]
        %v1066 = vld [vmem:[%s738 + $0x30] sm:$0xff]
        %v1067 = vld [vmem:[%s738 + $0x38] sm:$0xff]
        %v1068 = vld [vmem:[%s738 + $0x40] sm:$0xff]
        %v1069 = vld [vmem:[%s738 + $0x48] sm:$0xff]
        %v1070 = vld [vmem:[%s738 + $0x50] sm:$0xff]
        %v1071 = vld [vmem:[%s738 + $0x58] sm:$0xff]
        %v1072 = vld [vmem:[%s738 + $0x60] sm:$0xff]
        %v1073 = vld [vmem:[%s738 + $0x68] sm:$0xff]
        %v1074 = vld [vmem:[%s738 + $0x70] sm:$0xff]
        %v1075 = vld [vmem:[%s738 + $0x78] sm:$0xff]
        %v1076 = vld [vmem:[%s743] sm:$0xff]
        %v1077 = vld [vmem:[%s743 + $0x8] sm:$0xff]
        %v1078 = vld [vmem:[%s743 + $0x10] sm:$0xff]
        %v1079 = vld [vmem:[%s743 + $0x18] sm:$0xff]
        %v1080 = vld [vmem:[%s743 + $0x20] sm:$0xff]
        %v1081 = vld [vmem:[%s743 + $0x28] sm:$0xff]
        %v1082 = vld [vmem:[%s743 + $0x30] sm:$0xff]
        %v1083 = vld [vmem:[%s743 + $0x38] sm:$0xff]
        %v1084 = vld [vmem:[%s743 + $0x40] sm:$0xff]
        %v1085 = vld [vmem:[%s743 + $0x48] sm:$0xff]
        %v1086 = vld [vmem:[%s743 + $0x50] sm:$0xff]
        %v1087 = vld [vmem:[%s743 + $0x58] sm:$0xff]
        %v1088 = vld [vmem:[%s743 + $0x60] sm:$0xff]
        %v1089 = vld [vmem:[%s743 + $0x68] sm:$0xff]
        %v1090 = vld [vmem:[%s743 + $0x70] sm:$0xff]
        %v1091 = vld [vmem:[%s743 + $0x78] sm:$0xff]
        %1092 = vmatpush.msra.mxu0 %v1091
        %1093 = vmatpush.msra.mxu0 %v1090
        %1094 = vmatpush.msra.mxu0 %v1089
        %1095 = vmatpush.msra.mxu0 %v1088
        %1096 = vmatpush.msra.mxu0 %v1087
        %1097 = vmatpush.msra.mxu0 %v1086
        %1098 = vmatpush.msra.mxu0 %v1085
        %1099 = vmatpush.msra.mxu0 %v1084
        %1100 = vmatpush.msra.mxu0 %v1083
        %1101 = vmatpush.msra.mxu0 %v1082
        %1102 = vmatpush.msra.mxu0 %v1081
        %1103 = vmatpush.msra.mxu0 %v1080
        %1104 = vmatpush.msra.mxu0 %v1079
        %1105 = vmatpush.msra.mxu0 %v1078
        %1106 = vmatpush.msra.mxu0 %v1077
        %1107 = vmatpush.msra.mxu0 %v1076
        %1108 = vmatmul.f32.gmra.mxu0 %v1036
        %v1109 = vpop.f32.mrf.mxu0
        %v1110 = vadd.f32 0.0, %v1109
        %1111 = vmatmul.f32.gmra.mxu0 %v1037
        %v1112 = vpop.f32.mrf.mxu0
        %v1113 = vadd.f32 0.0, %v1112
        %1114 = vmatmul.f32.gmra.mxu0 %v1038
        %v1115 = vpop.f32.mrf.mxu0
        %v1116 = vadd.f32 0.0, %v1115
        %1117 = vmatmul.f32.gmra.mxu0 %v1039
        %v1118 = vpop.f32.mrf.mxu0
        %v1119 = vadd.f32 0.0, %v1118
        %1120 = vmatmul.f32.gmra.mxu0 %v1040
        %v1121 = vpop.f32.mrf.mxu0
        %v1122 = vadd.f32 0.0, %v1121
        %1123 = vmatmul.f32.gmra.mxu0 %v1041
        %v1124 = vpop.f32.mrf.mxu0
        %v1125 = vadd.f32 0.0, %v1124
        %1126 = vmatmul.f32.gmra.mxu0 %v1042
        %v1127 = vpop.f32.mrf.mxu0
        %v1128 = vadd.f32 0.0, %v1127
        %1129 = vmatmul.f32.gmra.mxu0 %v1043
        %v1130 = vpop.f32.mrf.mxu0
        %v1131 = vadd.f32 0.0, %v1130
        %1132 = vmatmul.f32.gmra.mxu0 %v1044
        %v1133 = vpop.f32.mrf.mxu0
        %v1134 = vadd.f32 0.0, %v1133
        %1135 = vmatmul.f32.gmra.mxu0 %v1045
        %v1136 = vpop.f32.mrf.mxu0
        %v1137 = vadd.f32 0.0, %v1136
        %1138 = vmatmul.f32.gmra.mxu0 %v1046
        %v1139 = vpop.f32.mrf.mxu0
        %v1140 = vadd.f32 0.0, %v1139
        %1141 = vmatmul.f32.gmra.mxu0 %v1047
        %v1142 = vpop.f32.mrf.mxu0
        %v1143 = vadd.f32 0.0, %v1142
        %1144 = vmatmul.f32.gmra.mxu0 %v1048
        %v1145 = vpop.f32.mrf.mxu0
        %v1146 = vadd.f32 0.0, %v1145
        %1147 = vmatmul.f32.gmra.mxu0 %v1049
        %v1148 = vpop.f32.mrf.mxu0
        %v1149 = vadd.f32 0.0, %v1148
        %1150 = vmatmul.f32.gmra.mxu0 %v1050
        %v1151 = vpop.f32.mrf.mxu0
        %v1152 = vadd.f32 0.0, %v1151
        %1153 = vmatmul.f32.gmra.mxu0 %v1051
        %v1154 = vpop.f32.mrf.mxu0
        %v1155 = vadd.f32 0.0, %v1154
        %1156 = vmatmul.f32.gmra.mxu0 %v1052
        %v1157 = vpop.f32.mrf.mxu0
        %v1158 = vadd.f32 0.0, %v1157
        %1159 = vmatmul.f32.gmra.mxu0 %v1053
        %v1160 = vpop.f32.mrf.mxu0
        %v1161 = vadd.f32 0.0, %v1160
        %1162 = vmatmul.f32.gmra.mxu0 %v1054
        %v1163 = vpop.f32.mrf.mxu0
        %v1164 = vadd.f32 0.0, %v1163
        %1165 = vmatmul.f32.gmra.mxu0 %v1055
        %v1166 = vpop.f32.mrf.mxu0
        %v1167 = vadd.f32 0.0, %v1166
        %1168 = vmatmul.f32.gmra.mxu0 %v1056
        %v1169 = vpop.f32.mrf.mxu0
        %v1170 = vadd.f32 0.0, %v1169
        %1171 = vmatmul.f32.gmra.mxu0 %v1057
        %v1172 = vpop.f32.mrf.mxu0
        %v1173 = vadd.f32 0.0, %v1172
        %1174 = vmatmul.f32.gmra.mxu0 %v1058
        %v1175 = vpop.f32.mrf.mxu0
        %v1176 = vadd.f32 0.0, %v1175
        %1177 = vmatmul.f32.gmra.mxu0 %v1059
        %v1178 = vpop.f32.mrf.mxu0
        %v1179 = vadd.f32 0.0, %v1178
        %1180 = vdwg.mxu0
        %1181 = vmatpush.msra.mxu0 %v1075
        %1182 = vmatpush.msra.mxu0 %v1074
        %1183 = vmatpush.msra.mxu0 %v1073
        %1184 = vmatpush.msra.mxu0 %v1072
        %1185 = vmatpush.msra.mxu0 %v1071
        %1186 = vmatpush.msra.mxu0 %v1070
        %1187 = vmatpush.msra.mxu0 %v1069
        %1188 = vmatpush.msra.mxu0 %v1068
        %1189 = vmatpush.msra.mxu0 %v1067
        %1190 = vmatpush.msra.mxu0 %v1066
        %1191 = vmatpush.msra.mxu0 %v1065
        %1192 = vmatpush.msra.mxu0 %v1064
        %1193 = vmatpush.msra.mxu0 %v1063
        %1194 = vmatpush.msra.mxu0 %v1062
        %1195 = vmatpush.msra.mxu0 %v1061
        %1196 = vmatpush.msra.mxu0 %v1060
        %1197 = vmatmul.f32.gmra.mxu0 %v1012
        %v1198 = vpop.f32.mrf.mxu0
        %v1199 = vadd.f32 %v1110, %v1198
        %1200 = vmatmul.f32.gmra.mxu0 %v1013
        %v1201 = vpop.f32.mrf.mxu0
        %v1202 = vadd.f32 %v1113, %v1201
        %1203 = vmatmul.f32.gmra.mxu0 %v1014
        %v1204 = vpop.f32.mrf.mxu0
        %v1205 = vadd.f32 %v1116, %v1204
        %1206 = vmatmul.f32.gmra.mxu0 %v1015
        %v1207 = vpop.f32.mrf.mxu0
        %v1208 = vadd.f32 %v1119, %v1207
        %1209 = vmatmul.f32.gmra.mxu0 %v1016
        %v1210 = vpop.f32.mrf.mxu0
        %v1211 = vadd.f32 %v1122, %v1210
        %1212 = vmatmul.f32.gmra.mxu0 %v1017
        %v1213 = vpop.f32.mrf.mxu0
        %v1214 = vadd.f32 %v1125, %v1213
        %1215 = vmatmul.f32.gmra.mxu0 %v1018
        %v1216 = vpop.f32.mrf.mxu0
        %v1217 = vadd.f32 %v1128, %v1216
        %1218 = vmatmul.f32.gmra.mxu0 %v1019
        %v1219 = vpop.f32.mrf.mxu0
        %v1220 = vadd.f32 %v1131, %v1219
        %1221 = vmatmul.f32.gmra.mxu0 %v1020
        %v1222 = vpop.f32.mrf.mxu0
        %v1223 = vadd.f32 %v1134, %v1222
        %1224 = vmatmul.f32.gmra.mxu0 %v1021
        %v1225 = vpop.f32.mrf.mxu0
        %v1226 = vadd.f32 %v1137, %v1225
        %1227 = vmatmul.f32.gmra.mxu0 %v1022
        %v1228 = vpop.f32.mrf.mxu0
        %v1229 = vadd.f32 %v1140, %v1228
        %1230 = vmatmul.f32.gmra.mxu0 %v1023
        %v1231 = vpop.f32.mrf.mxu0
        %v1232 = vadd.f32 %v1143, %v1231
        %1233 = vmatmul.f32.gmra.mxu0 %v1024
        %v1234 = vpop.f32.mrf.mxu0
        %v1235 = vadd.f32 %v1146, %v1234
        %1236 = vmatmul.f32.gmra.mxu0 %v1025
        %v1237 = vpop.f32.mrf.mxu0
        %v1238 = vadd.f32 %v1149, %v1237
        %1239 = vmatmul.f32.gmra.mxu0 %v1026
        %v1240 = vpop.f32.mrf.mxu0
        %v1241 = vadd.f32 %v1152, %v1240
        %1242 = vmatmul.f32.gmra.mxu0 %v1027
        %v1243 = vpop.f32.mrf.mxu0
        %v1244 = vadd.f32 %v1155, %v1243
        %1245 = vmatmul.f32.gmra.mxu0 %v1028
        %v1246 = vpop.f32.mrf.mxu0
        %v1247 = vadd.f32 %v1158, %v1246
        %1248 = vmatmul.f32.gmra.mxu0 %v1029
        %v1249 = vpop.f32.mrf.mxu0
        %v1250 = vadd.f32 %v1161, %v1249
        %1251 = vmatmul.f32.gmra.mxu0 %v1030
        %v1252 = vpop.f32.mrf.mxu0
        %v1253 = vadd.f32 %v1164, %v1252
        %1254 = vmatmul.f32.gmra.mxu0 %v1031
        %v1255 = vpop.f32.mrf.mxu0
        %v1256 = vadd.f32 %v1167, %v1255
        %1257 = vmatmul.f32.gmra.mxu0 %v1032
        %v1258 = vpop.f32.mrf.mxu0
        %v1259 = vadd.f32 %v1170, %v1258
        %1260 = vmatmul.f32.gmra.mxu0 %v1033
        %v1261 = vpop.f32.mrf.mxu0
        %v1262 = vadd.f32 %v1173, %v1261
        %1263 = vmatmul.f32.gmra.mxu0 %v1034
        %v1264 = vpop.f32.mrf.mxu0
        %v1265 = vadd.f32 %v1176, %v1264
        %1266 = vmatmul.f32.gmra.mxu0 %v1035
        %v1267 = vpop.f32.mrf.mxu0
        %v1268 = vadd.f32 %v1179, %v1267
        %1269 = vdwg.mxu0
        %v1270 = vld [vmem:[%s746] sm:$0x1]
        %v1272 = vperm.slane %v1270, 0
        %v1274 = vadd.f32 %v1199, %v1272
        %v1275 = vadd.f32 %v1202, %v1272
        %v1276 = vadd.f32 %v1205, %v1272
        %v1277 = vadd.f32 %v1208, %v1272
        %v1278 = vadd.f32 %v1211, %v1272
        %v1279 = vadd.f32 %v1214, %v1272
        %v1280 = vadd.f32 %v1217, %v1272
        %v1281 = vadd.f32 %v1220, %v1272
        %v1282 = vadd.f32 %v1223, %v1272
        %v1283 = vadd.f32 %v1226, %v1272
        %v1284 = vadd.f32 %v1229, %v1272
        %v1285 = vadd.f32 %v1232, %v1272
        %v1286 = vadd.f32 %v1235, %v1272
        %v1287 = vadd.f32 %v1238, %v1272
        %v1288 = vadd.f32 %v1241, %v1272
        %v1289 = vadd.f32 %v1244, %v1272
        %v1290 = vadd.f32 %v1247, %v1272
        %v1291 = vadd.f32 %v1250, %v1272
        %v1292 = vadd.f32 %v1253, %v1272
        %v1293 = vadd.f32 %v1256, %v1272
        %v1294 = vadd.f32 %v1259, %v1272
        %v1295 = vadd.f32 %v1262, %v1272
        %v1296 = vadd.f32 %v1265, %v1272
        %v1297 = vadd.f32 %v1268, %v1272
        %v1298 = vmax.f32 %v1274, 0.0
        %v1299 = vmax.f32 %v1275, 0.0
        %v1300 = vmax.f32 %v1276, 0.0
        %v1301 = vmax.f32 %v1277, 0.0
        %v1302 = vmax.f32 %v1278, 0.0
        %v1303 = vmax.f32 %v1279, 0.0
        %v1304 = vmax.f32 %v1280, 0.0
        %v1305 = vmax.f32 %v1281, 0.0
        %v1306 = vmax.f32 %v1282, 0.0
        %v1307 = vmax.f32 %v1283, 0.0
        %v1308 = vmax.f32 %v1284, 0.0
        %v1309 = vmax.f32 %v1285, 0.0
        %v1310 = vmax.f32 %v1286, 0.0
        %v1311 = vmax.f32 %v1287, 0.0
        %v1312 = vmax.f32 %v1288, 0.0
        %v1313 = vmax.f32 %v1289, 0.0
        %v1314 = vmax.f32 %v1290, 0.0
        %v1315 = vmax.f32 %v1291, 0.0
        %v1316 = vmax.f32 %v1292, 0.0
        %v1317 = vmax.f32 %v1293, 0.0
        %v1318 = vmax.f32 %v1294, 0.0
        %v1319 = vmax.f32 %v1295, 0.0
        %v1320 = vmax.f32 %v1296, 0.0
        %v1321 = vmax.f32 %v1297, 0.0
        %v1322 = vld [vmem:[%s751] sm:$0xff]
        %v1323 = vld [vmem:[%s751 + $0x8] sm:$0xff]
        %v1324 = vld [vmem:[%s751 + $0x10] sm:$0xff]
        %v1325 = vld [vmem:[%s751 + $0x18] sm:$0xff]
        %v1326 = vld [vmem:[%s751 + $0x20] sm:$0xff]
        %v1327 = vld [vmem:[%s751 + $0x28] sm:$0xff]
        %v1328 = vld [vmem:[%s751 + $0x30] sm:$0xff]
        %v1329 = vld [vmem:[%s751 + $0x38] sm:$0xff]
        %v1330 = vld [vmem:[%s751 + $0x40] sm:$0xff]
        %v1331 = vld [vmem:[%s751 + $0x48] sm:$0xff]
        %v1332 = vld [vmem:[%s751 + $0x50] sm:$0xff]
        %v1333 = vld [vmem:[%s751 + $0x58] sm:$0xff]
        %v1334 = vld [vmem:[%s751 + $0x60] sm:$0xff]
        %v1335 = vld [vmem:[%s751 + $0x68] sm:$0xff]
        %v1336 = vld [vmem:[%s751 + $0x70] sm:$0xff]
        %v1337 = vld [vmem:[%s751 + $0x78] sm:$0xff]
        %v1338 = vld [vmem:[%s754] sm:$0x1]
        %v1340 = vperm.slane %v1338, 0
        %1342 = vmatpush.msra.mxu0 %v1337
        %1343 = vmatpush.msra.mxu0 %v1336
        %1344 = vmatpush.msra.mxu0 %v1335
        %1345 = vmatpush.msra.mxu0 %v1334
        %1346 = vmatpush.msra.mxu0 %v1333
        %1347 = vmatpush.msra.mxu0 %v1332
        %1348 = vmatpush.msra.mxu0 %v1331
        %1349 = vmatpush.msra.mxu0 %v1330
        %1350 = vmatpush.msra.mxu0 %v1329
        %1351 = vmatpush.msra.mxu0 %v1328
        %1352 = vmatpush.msra.mxu0 %v1327
        %1353 = vmatpush.msra.mxu0 %v1326
        %1354 = vmatpush.msra.mxu0 %v1325
        %1355 = vmatpush.msra.mxu0 %v1324
        %1356 = vmatpush.msra.mxu0 %v1323
        %1357 = vmatpush.msra.mxu0 %v1322
        %1358 = vmatmul.f32.gmra.mxu0 %v1298
        %v1359 = vpop.f32.mrf.mxu0
        %v1360 = vadd.f32 %v1340, %v1359
        %1361 = vmatmul.f32.gmra.mxu0 %v1299
        %v1362 = vpop.f32.mrf.mxu0
        %v1363 = vadd.f32 %v1340, %v1362
        %1364 = vmatmul.f32.gmra.mxu0 %v1300
        %v1365 = vpop.f32.mrf.mxu0
        %v1366 = vadd.f32 %v1340, %v1365
        %1367 = vmatmul.f32.gmra.mxu0 %v1301
        %v1368 = vpop.f32.mrf.mxu0
        %v1369 = vadd.f32 %v1340, %v1368
        %1370 = vmatmul.f32.gmra.mxu0 %v1302
        %v1371 = vpop.f32.mrf.mxu0
        %v1372 = vadd.f32 %v1340, %v1371
        %1373 = vmatmul.f32.gmra.mxu0 %v1303
        %v1374 = vpop.f32.mrf.mxu0
        %v1375 = vadd.f32 %v1340, %v1374
        %1376 = vmatmul.f32.gmra.mxu0 %v1304
        %v1377 = vpop.f32.mrf.mxu0
        %v1378 = vadd.f32 %v1340, %v1377
        %1379 = vmatmul.f32.gmra.mxu0 %v1305
        %v1380 = vpop.f32.mrf.mxu0
        %v1381 = vadd.f32 %v1340, %v1380
        %1382 = vmatmul.f32.gmra.mxu0 %v1306
        %v1383 = vpop.f32.mrf.mxu0
        %v1384 = vadd.f32 %v1340, %v1383
        %1385 = vmatmul.f32.gmra.mxu0 %v1307
        %v1386 = vpop.f32.mrf.mxu0
        %v1387 = vadd.f32 %v1340, %v1386
        %1388 = vmatmul.f32.gmra.mxu0 %v1308
        %v1389 = vpop.f32.mrf.mxu0
        %v1390 = vadd.f32 %v1340, %v1389
        %1391 = vmatmul.f32.gmra.mxu0 %v1309
        %v1392 = vpop.f32.mrf.mxu0
        %v1393 = vadd.f32 %v1340, %v1392
        %1394 = vmatmul.f32.gmra.mxu0 %v1310
        %v1395 = vpop.f32.mrf.mxu0
        %v1396 = vadd.f32 %v1340, %v1395
        %1397 = vmatmul.f32.gmra.mxu0 %v1311
        %v1398 = vpop.f32.mrf.mxu0
        %v1399 = vadd.f32 %v1340, %v1398
        %1400 = vmatmul.f32.gmra.mxu0 %v1312
        %v1401 = vpop.f32.mrf.mxu0
        %v1402 = vadd.f32 %v1340, %v1401
        %1403 = vmatmul.f32.gmra.mxu0 %v1313
        %v1404 = vpop.f32.mrf.mxu0
        %v1405 = vadd.f32 %v1340, %v1404
        %1406 = vmatmul.f32.gmra.mxu0 %v1314
        %v1407 = vpop.f32.mrf.mxu0
        %v1408 = vadd.f32 %v1340, %v1407
        %1409 = vmatmul.f32.gmra.mxu0 %v1315
        %v1410 = vpop.f32.mrf.mxu0
        %v1411 = vadd.f32 %v1340, %v1410
        %1412 = vmatmul.f32.gmra.mxu0 %v1316
        %v1413 = vpop.f32.mrf.mxu0
        %v1414 = vadd.f32 %v1340, %v1413
        %1415 = vmatmul.f32.gmra.mxu0 %v1317
        %v1416 = vpop.f32.mrf.mxu0
        %v1417 = vadd.f32 %v1340, %v1416
        %1418 = vmatmul.f32.gmra.mxu0 %v1318
        %v1419 = vpop.f32.mrf.mxu0
        %v1420 = vadd.f32 %v1340, %v1419
        %1421 = vmatmul.f32.gmra.mxu0 %v1319
        %v1422 = vpop.f32.mrf.mxu0
        %v1423 = vadd.f32 %v1340, %v1422
        %1424 = vmatmul.f32.gmra.mxu0 %v1320
        %v1425 = vpop.f32.mrf.mxu0
        %v1426 = vadd.f32 %v1340, %v1425
        %1427 = vmatmul.f32.gmra.mxu0 %v1321
        %v1428 = vpop.f32.mrf.mxu0
        %v1429 = vadd.f32 %v1340, %v1428
        %1430 = vdwg.mxu0
        %v1431 = vmax.f32 %v1360, 0.0
        %v1432 = vmax.f32 %v1363, 0.0
        %v1433 = vmax.f32 %v1366, 0.0
        %v1434 = vmax.f32 %v1369, 0.0
        %v1435 = vmax.f32 %v1372, 0.0
        %v1436 = vmax.f32 %v1375, 0.0
        %v1437 = vmax.f32 %v1378, 0.0
        %v1438 = vmax.f32 %v1381, 0.0
        %v1439 = vmax.f32 %v1384, 0.0
        %v1440 = vmax.f32 %v1387, 0.0
        %v1441 = vmax.f32 %v1390, 0.0
        %v1442 = vmax.f32 %v1393, 0.0
        %v1443 = vmax.f32 %v1396, 0.0
        %v1444 = vmax.f32 %v1399, 0.0
        %v1445 = vmax.f32 %v1402, 0.0
        %v1446 = vmax.f32 %v1405, 0.0
        %v1447 = vmax.f32 %v1408, 0.0
        %v1448 = vmax.f32 %v1411, 0.0
        %v1449 = vmax.f32 %v1414, 0.0
        %v1450 = vmax.f32 %v1417, 0.0
        %v1451 = vmax.f32 %v1420, 0.0
        %v1452 = vmax.f32 %v1423, 0.0
        %v1453 = vmax.f32 %v1426, 0.0
        %v1454 = vmax.f32 %v1429, 0.0
        %v1455 = vld [vmem:[%s759] sm:$0xff]
        %v1456 = vld [vmem:[%s759 + $0x8] sm:$0xff]
        %v1457 = vld [vmem:[%s759 + $0x10] sm:$0xff]
        %v1458 = vld [vmem:[%s759 + $0x18] sm:$0xff]
        %v1459 = vld [vmem:[%s759 + $0x20] sm:$0xff]
        %v1460 = vld [vmem:[%s759 + $0x28] sm:$0xff]
        %v1461 = vld [vmem:[%s759 + $0x30] sm:$0xff]
        %v1462 = vld [vmem:[%s759 + $0x38] sm:$0xff]
        %v1463 = vld [vmem:[%s759 + $0x40] sm:$0xff]
        %v1464 = vld [vmem:[%s759 + $0x48] sm:$0xff]
        %v1465 = vld [vmem:[%s759 + $0x50] sm:$0xff]
        %v1466 = vld [vmem:[%s759 + $0x58] sm:$0xff]
        %v1467 = vld [vmem:[%s759 + $0x60] sm:$0xff]
        %v1468 = vld [vmem:[%s759 + $0x68] sm:$0xff]
        %v1469 = vld [vmem:[%s759 + $0x70] sm:$0xff]
        %v1470 = vld [vmem:[%s759 + $0x78] sm:$0xff]
        %v1471 = vld [vmem:[%s762] sm:$0x1]
        %v1473 = vperm.slane %v1471, 0
        %1475 = vmatpush.msra.mxu0 %v1470
        %1476 = vmatpush.msra.mxu0 %v1469
        %1477 = vmatpush.msra.mxu0 %v1468
        %1478 = vmatpush.msra.mxu0 %v1467
        %1479 = vmatpush.msra.mxu0 %v1466
        %1480 = vmatpush.msra.mxu0 %v1465
        %1481 = vmatpush.msra.mxu0 %v1464
        %1482 = vmatpush.msra.mxu0 %v1463
        %1483 = vmatpush.msra.mxu0 %v1462
        %1484 = vmatpush.msra.mxu0 %v1461
        %1485 = vmatpush.msra.mxu0 %v1460
        %1486 = vmatpush.msra.mxu0 %v1459
        %1487 = vmatpush.msra.mxu0 %v1458
        %1488 = vmatpush.msra.mxu0 %v1457
        %1489 = vmatpush.msra.mxu0 %v1456
        %1490 = vmatpush.msra.mxu0 %v1455
        %1491 = vmatmul.f32.gmra.mxu0 %v1431
        %v1492 = vpop.f32.mrf.mxu0
        %v1493 = vadd.f32 %v1473, %v1492
        %1494 = vmatmul.f32.gmra.mxu0 %v1432
        %v1495 = vpop.f32.mrf.mxu0
        %v1496 = vadd.f32 %v1473, %v1495
        %1497 = vmatmul.f32.gmra.mxu0 %v1433
        %v1498 = vpop.f32.mrf.mxu0
        %v1499 = vadd.f32 %v1473, %v1498
        %1500 = vmatmul.f32.gmra.mxu0 %v1434
        %v1501 = vpop.f32.mrf.mxu0
        %v1502 = vadd.f32 %v1473, %v1501
        %1503 = vmatmul.f32.gmra.mxu0 %v1435
        %v1504 = vpop.f32.mrf.mxu0
        %v1505 = vadd.f32 %v1473, %v1504
        %1506 = vmatmul.f32.gmra.mxu0 %v1436
        %v1507 = vpop.f32.mrf.mxu0
        %v1508 = vadd.f32 %v1473, %v1507
        %1509 = vmatmul.f32.gmra.mxu0 %v1437
        %v1510 = vpop.f32.mrf.mxu0
        %v1511 = vadd.f32 %v1473, %v1510
        %1512 = vmatmul.f32.gmra.mxu0 %v1438
        %v1513 = vpop.f32.mrf.mxu0
        %v1514 = vadd.f32 %v1473, %v1513
        %1515 = vmatmul.f32.gmra.mxu0 %v1439
        %v1516 = vpop.f32.mrf.mxu0
        %v1517 = vadd.f32 %v1473, %v1516
        %1518 = vmatmul.f32.gmra.mxu0 %v1440
        %v1519 = vpop.f32.mrf.mxu0
        %v1520 = vadd.f32 %v1473, %v1519
        %1521 = vmatmul.f32.gmra.mxu0 %v1441
        %v1522 = vpop.f32.mrf.mxu0
        %v1523 = vadd.f32 %v1473, %v1522
        %1524 = vmatmul.f32.gmra.mxu0 %v1442
        %v1525 = vpop.f32.mrf.mxu0
        %v1526 = vadd.f32 %v1473, %v1525
        %1527 = vmatmul.f32.gmra.mxu0 %v1443
        %v1528 = vpop.f32.mrf.mxu0
        %v1529 = vadd.f32 %v1473, %v1528
        %1530 = vmatmul.f32.gmra.mxu0 %v1444
        %v1531 = vpop.f32.mrf.mxu0
        %v1532 = vadd.f32 %v1473, %v1531
        %1533 = vmatmul.f32.gmra.mxu0 %v1445
        %v1534 = vpop.f32.mrf.mxu0
        %v1535 = vadd.f32 %v1473, %v1534
        %1536 = vmatmul.f32.gmra.mxu0 %v1446
        %v1537 = vpop.f32.mrf.mxu0
        %v1538 = vadd.f32 %v1473, %v1537
        %1539 = vmatmul.f32.gmra.mxu0 %v1447
        %v1540 = vpop.f32.mrf.mxu0
        %v1541 = vadd.f32 %v1473, %v1540
        %1542 = vmatmul.f32.gmra.mxu0 %v1448
        %v1543 = vpop.f32.mrf.mxu0
        %v1544 = vadd.f32 %v1473, %v1543
        %1545 = vmatmul.f32.gmra.mxu0 %v1449
        %v1546 = vpop.f32.mrf.mxu0
        %v1547 = vadd.f32 %v1473, %v1546
        %1548 = vmatmul.f32.gmra.mxu0 %v1450
        %v1549 = vpop.f32.mrf.mxu0
        %v1550 = vadd.f32 %v1473, %v1549
        %1551 = vmatmul.f32.gmra.mxu0 %v1451
        %v1552 = vpop.f32.mrf.mxu0
        %v1553 = vadd.f32 %v1473, %v1552
        %1554 = vmatmul.f32.gmra.mxu0 %v1452
        %v1555 = vpop.f32.mrf.mxu0
        %v1556 = vadd.f32 %v1473, %v1555
        %1557 = vmatmul.f32.gmra.mxu0 %v1453
        %v1558 = vpop.f32.mrf.mxu0
        %v1559 = vadd.f32 %v1473, %v1558
        %1560 = vmatmul.f32.gmra.mxu0 %v1454
        %v1561 = vpop.f32.mrf.mxu0
        %v1562 = vadd.f32 %v1473, %v1561
        %1563 = vdwg.mxu0
        %v1564 = vmax.f32 %v1493, 0.0
        %v1565 = vmax.f32 %v1496, 0.0
        %v1566 = vmax.f32 %v1499, 0.0
        %v1567 = vmax.f32 %v1502, 0.0
        %v1568 = vmax.f32 %v1505, 0.0
        %v1569 = vmax.f32 %v1508, 0.0
        %v1570 = vmax.f32 %v1511, 0.0
        %v1571 = vmax.f32 %v1514, 0.0
        %v1572 = vmax.f32 %v1517, 0.0
        %v1573 = vmax.f32 %v1520, 0.0
        %v1574 = vmax.f32 %v1523, 0.0
        %v1575 = vmax.f32 %v1526, 0.0
        %v1576 = vmax.f32 %v1529, 0.0
        %v1577 = vmax.f32 %v1532, 0.0
        %v1578 = vmax.f32 %v1535, 0.0
        %v1579 = vmax.f32 %v1538, 0.0
        %v1580 = vmax.f32 %v1541, 0.0
        %v1581 = vmax.f32 %v1544, 0.0
        %v1582 = vmax.f32 %v1547, 0.0
        %v1583 = vmax.f32 %v1550, 0.0
        %v1584 = vmax.f32 %v1553, 0.0
        %v1585 = vmax.f32 %v1556, 0.0
        %v1586 = vmax.f32 %v1559, 0.0
        %v1587 = vmax.f32 %v1562, 0.0
        %v1588 = vld [vmem:[%s767] sm:$0xff]
        %v1589 = vld [vmem:[%s767 + $0x8] sm:$0xff]
        %v1590 = vld [vmem:[%s767 + $0x10] sm:$0xff]
        %v1591 = vld [vmem:[%s767 + $0x18] sm:$0xff]
        %v1592 = vld [vmem:[%s767 + $0x20] sm:$0xff]
        %v1593 = vld [vmem:[%s767 + $0x28] sm:$0xff]
        %v1594 = vld [vmem:[%s767 + $0x30] sm:$0xff]
        %v1595 = vld [vmem:[%s767 + $0x38] sm:$0xff]
        %v1596 = vld [vmem:[%s767 + $0x40] sm:$0xff]
        %v1597 = vld [vmem:[%s767 + $0x48] sm:$0xff]
        %v1598 = vld [vmem:[%s767 + $0x50] sm:$0xff]
        %v1599 = vld [vmem:[%s767 + $0x58] sm:$0xff]
        %v1600 = vld [vmem:[%s767 + $0x60] sm:$0xff]
        %v1601 = vld [vmem:[%s767 + $0x68] sm:$0xff]
        %v1602 = vld [vmem:[%s767 + $0x70] sm:$0xff]
        %v1603 = vld [vmem:[%s767 + $0x78] sm:$0xff]
        %v1604 = vld [vmem:[%s770] sm:$0x1]
        %v1606 = vperm.slane %v1604, 0
        %1608 = vmatpush.msra.mxu0 %v1603
        %1609 = vmatpush.msra.mxu0 %v1602
        %1610 = vmatpush.msra.mxu0 %v1601
        %1611 = vmatpush.msra.mxu0 %v1600
        %1612 = vmatpush.msra.mxu0 %v1599
        %1613 = vmatpush.msra.mxu0 %v1598
        %1614 = vmatpush.msra.mxu0 %v1597
        %1615 = vmatpush.msra.mxu0 %v1596
        %1616 = vmatpush.msra.mxu0 %v1595
        %1617 = vmatpush.msra.mxu0 %v1594
        %1618 = vmatpush.msra.mxu0 %v1593
        %1619 = vmatpush.msra.mxu0 %v1592
        %1620 = vmatpush.msra.mxu0 %v1591
        %1621 = vmatpush.msra.mxu0 %v1590
        %1622 = vmatpush.msra.mxu0 %v1589
        %1623 = vmatpush.msra.mxu0 %v1588
        %1624 = vmatmul.f32.gmra.mxu0 %v1564
        %v1625 = vpop.f32.mrf.mxu0
        %v1626 = vadd.f32 %v1606, %v1625
        %1627 = vmatmul.f32.gmra.mxu0 %v1565
        %v1628 = vpop.f32.mrf.mxu0
        %v1629 = vadd.f32 %v1606, %v1628
        %1630 = vmatmul.f32.gmra.mxu0 %v1566
        %v1631 = vpop.f32.mrf.mxu0
        %v1632 = vadd.f32 %v1606, %v1631
        %1633 = vmatmul.f32.gmra.mxu0 %v1567
        %v1634 = vpop.f32.mrf.mxu0
        %v1635 = vadd.f32 %v1606, %v1634
        %1636 = vmatmul.f32.gmra.mxu0 %v1568
        %v1637 = vpop.f32.mrf.mxu0
        %v1638 = vadd.f32 %v1606, %v1637
        %1639 = vmatmul.f32.gmra.mxu0 %v1569
        %v1640 = vpop.f32.mrf.mxu0
        %v1641 = vadd.f32 %v1606, %v1640
        %1642 = vmatmul.f32.gmra.mxu0 %v1570
        %v1643 = vpop.f32.mrf.mxu0
        %v1644 = vadd.f32 %v1606, %v1643
        %1645 = vmatmul.f32.gmra.mxu0 %v1571
        %v1646 = vpop.f32.mrf.mxu0
        %v1647 = vadd.f32 %v1606, %v1646
        %1648 = vmatmul.f32.gmra.mxu0 %v1572
        %v1649 = vpop.f32.mrf.mxu0
        %v1650 = vadd.f32 %v1606, %v1649
        %1651 = vmatmul.f32.gmra.mxu0 %v1573
        %v1652 = vpop.f32.mrf.mxu0
        %v1653 = vadd.f32 %v1606, %v1652
        %1654 = vmatmul.f32.gmra.mxu0 %v1574
        %v1655 = vpop.f32.mrf.mxu0
        %v1656 = vadd.f32 %v1606, %v1655
        %1657 = vmatmul.f32.gmra.mxu0 %v1575
        %v1658 = vpop.f32.mrf.mxu0
        %v1659 = vadd.f32 %v1606, %v1658
        %1660 = vmatmul.f32.gmra.mxu0 %v1576
        %v1661 = vpop.f32.mrf.mxu0
        %v1662 = vadd.f32 %v1606, %v1661
        %1663 = vmatmul.f32.gmra.mxu0 %v1577
        %v1664 = vpop.f32.mrf.mxu0
        %v1665 = vadd.f32 %v1606, %v1664
        %1666 = vmatmul.f32.gmra.mxu0 %v1578
        %v1667 = vpop.f32.mrf.mxu0
        %v1668 = vadd.f32 %v1606, %v1667
        %1669 = vmatmul.f32.gmra.mxu0 %v1579
        %v1670 = vpop.f32.mrf.mxu0
        %v1671 = vadd.f32 %v1606, %v1670
        %1672 = vmatmul.f32.gmra.mxu0 %v1580
        %v1673 = vpop.f32.mrf.mxu0
        %v1674 = vadd.f32 %v1606, %v1673
        %1675 = vmatmul.f32.gmra.mxu0 %v1581
        %v1676 = vpop.f32.mrf.mxu0
        %v1677 = vadd.f32 %v1606, %v1676
        %1678 = vmatmul.f32.gmra.mxu0 %v1582
        %v1679 = vpop.f32.mrf.mxu0
        %v1680 = vadd.f32 %v1606, %v1679
        %1681 = vmatmul.f32.gmra.mxu0 %v1583
        %v1682 = vpop.f32.mrf.mxu0
        %v1683 = vadd.f32 %v1606, %v1682
        %1684 = vmatmul.f32.gmra.mxu0 %v1584
        %v1685 = vpop.f32.mrf.mxu0
        %v1686 = vadd.f32 %v1606, %v1685
        %1687 = vmatmul.f32.gmra.mxu0 %v1585
        %v1688 = vpop.f32.mrf.mxu0
        %v1689 = vadd.f32 %v1606, %v1688
        %1690 = vmatmul.f32.gmra.mxu0 %v1586
        %v1691 = vpop.f32.mrf.mxu0
        %v1692 = vadd.f32 %v1606, %v1691
        %1693 = vmatmul.f32.gmra.mxu0 %v1587
        %v1694 = vpop.f32.mrf.mxu0
        %v1695 = vadd.f32 %v1606, %v1694
        %1696 = vdwg.mxu0
        %v1697 = vld [vmem:[%s733] sm:$0xff]
        %v1698 = vld [vmem:[%s733 + $0x8] sm:$0xff]
        %v1699 = vld [vmem:[%s733 + $0x10] sm:$0xff]
        %v1700 = vld [vmem:[%s733 + $0x18] sm:$0xff]
        %v1701 = vld [vmem:[%s733 + $0x20] sm:$0xff]
        %v1702 = vld [vmem:[%s733 + $0x28] sm:$0xff]
        %v1703 = vld [vmem:[%s733 + $0x30] sm:$0xff]
        %v1704 = vld [vmem:[%s733 + $0x38] sm:$0xff]
        %vm1705 = vcmask 523264
        %v1707 = vsel %vm1705, %v1698, 0
        %v1710 = vsel %vm1705, %v1700, 0
        %v1713 = vsel %vm1705, %v1702, 0
        %v1716 = vsel %vm1705, %v1704, 0
        %1718 = vmatpush.msra.mxu0 %v1671
        %1719 = vmatpush.msra.mxu0 %v1668
        %1720 = vmatpush.msra.mxu0 %v1665
        %1721 = vmatpush.msra.mxu0 %v1662
        %1722 = vmatpush.msra.mxu0 %v1659
        %1723 = vmatpush.msra.mxu0 %v1656
        %1724 = vmatpush.msra.mxu0 %v1653
        %1725 = vmatpush.msra.mxu0 %v1650
        %1726 = vmatpush.msra.mxu0 %v1647
        %1727 = vmatpush.msra.mxu0 %v1644
        %1728 = vmatpush.msra.mxu0 %v1641
        %1729 = vmatpush.msra.mxu0 %v1638
        %1730 = vmatpush.msra.mxu0 %v1635
        %1731 = vmatpush.msra.mxu0 %v1632
        %1732 = vmatpush.msra.mxu0 %v1629
        %1733 = vmatpush.msra.mxu0 %v1626
        %1734 = vmatmul.f32.gmra.mxu0 %v1697
        %v1735 = vpop.f32.mrf.mxu0
        %v1736 = vadd.f32 0.0, %v1735
        %1737 = vmatmul.f32.gmra.mxu0 %v1699
        %v1738 = vpop.f32.mrf.mxu0
        %v1739 = vadd.f32 0.0, %v1738
        %1740 = vmatmul.f32.gmra.mxu0 %v1701
        %v1741 = vpop.f32.mrf.mxu0
        %v1742 = vadd.f32 0.0, %v1741
        %1743 = vmatmul.f32.gmra.mxu0 %v1703
        %v1744 = vpop.f32.mrf.mxu0
        %v1745 = vadd.f32 0.0, %v1744
        %1746 = vdwg.mxu0
        %1747 = vmatpush.msra.mxu0 0.0
        %1748 = vmatpush.msra.mxu0 0.0
        %1749 = vmatpush.msra.mxu0 0.0
        %1750 = vmatpush.msra.mxu0 0.0
        %1751 = vmatpush.msra.mxu0 0.0
        %1752 = vmatpush.msra.mxu0 0.0
        %1753 = vmatpush.msra.mxu0 0.0
        %1754 = vmatpush.msra.mxu0 0.0
        %1755 = vmatpush.msra.mxu0 %v1695
        %1756 = vmatpush.msra.mxu0 %v1692
        %1757 = vmatpush.msra.mxu0 %v1689
        %1758 = vmatpush.msra.mxu0 %v1686
        %1759 = vmatpush.msra.mxu0 %v1683
        %1760 = vmatpush.msra.mxu0 %v1680
        %1761 = vmatpush.msra.mxu0 %v1677
        %1762 = vmatpush.msra.mxu0 %v1674
        %1763 = vmatmul.f32.gmra.mxu0 %v1707
        %v1764 = vpop.f32.mrf.mxu0
        %v1765 = vadd.f32 %v1736, %v1764
        %1766 = vmatmul.f32.gmra.mxu0 %v1710
        %v1767 = vpop.f32.mrf.mxu0
        %v1768 = vadd.f32 %v1739, %v1767
        %1769 = vmatmul.f32.gmra.mxu0 %v1713
        %v1770 = vpop.f32.mrf.mxu0
        %v1771 = vadd.f32 %v1742, %v1770
        %1772 = vmatmul.f32.gmra.mxu0 %v1716
        %v1773 = vpop.f32.mrf.mxu0
        %v1774 = vadd.f32 %v1745, %v1773
        %1775 = vdwg.mxu0
        %v1776 = vld [vmem:[#allocation2] sm:$0xff]
        %v1777 = vld [vmem:[#allocation2 + $0x8] sm:$0xff]
        %v1778 = vld [vmem:[#allocation2 + $0x10] sm:$0xff]
        %v1779 = vld [vmem:[#allocation2 + $0x18] sm:$0xff]
        %v1780 = vld [vmem:[#allocation2 + $0x20] sm:$0xff]
        %v1781 = vld [vmem:[#allocation2 + $0x28] sm:$0xff]
        %v1782 = vld [vmem:[#allocation2 + $0x30] sm:$0xff]
        %v1783 = vld [vmem:[#allocation2 + $0x38] sm:$0xff]
        %v1784 = vld [vmem:[#allocation2 + $0x40] sm:$0xff]
        %v1785 = vld [vmem:[#allocation2 + $0x48] sm:$0xff]
        %v1786 = vld [vmem:[#allocation2 + $0x50] sm:$0xff]
        %v1787 = vld [vmem:[#allocation2 + $0x58] sm:$0xff]
        %v1788 = vld [vmem:[#allocation2 + $0x60] sm:$0xff]
        %v1789 = vld [vmem:[#allocation2 + $0x68] sm:$0xff]
        %v1790 = vld [vmem:[#allocation2 + $0x70] sm:$0xff]
        %v1791 = vld [vmem:[#allocation2 + $0x78] sm:$0xff]
        %v1792 = vld [vmem:[%s775] sm:$0xff]
        %v1793 = vld [vmem:[%s775 + $0x8] sm:$0xff]
        %v1794 = vld [vmem:[%s775 + $0x10] sm:$0xff]
        %v1795 = vld [vmem:[%s775 + $0x18] sm:$0xff]
        %v1796 = vld [vmem:[%s775 + $0x20] sm:$0xff]
        %v1797 = vld [vmem:[%s775 + $0x28] sm:$0xff]
        %v1798 = vld [vmem:[%s775 + $0x30] sm:$0xff]
        %v1799 = vld [vmem:[%s775 + $0x38] sm:$0xff]
        %v1800 = vld [vmem:[%s775 + $0x40] sm:$0xff]
        %v1801 = vld [vmem:[%s775 + $0x48] sm:$0xff]
        %v1802 = vld [vmem:[%s775 + $0x50] sm:$0xff]
        %v1803 = vld [vmem:[%s775 + $0x58] sm:$0xff]
        %v1804 = vld [vmem:[%s775 + $0x60] sm:$0xff]
        %v1805 = vld [vmem:[%s775 + $0x68] sm:$0xff]
        %v1806 = vld [vmem:[%s775 + $0x70] sm:$0xff]
        %v1807 = vld [vmem:[%s775 + $0x78] sm:$0xff]
        %v1808 = vld [vmem:[%s775 + $0x80] sm:$0xff]
        %v1809 = vld [vmem:[%s775 + $0x88] sm:$0xff]
        %v1810 = vld [vmem:[%s775 + $0x90] sm:$0xff]
        %v1811 = vld [vmem:[%s775 + $0x98] sm:$0xff]
        %v1812 = vld [vmem:[%s775 + $0xa0] sm:$0xff]
        %v1813 = vld [vmem:[%s775 + $0xa8] sm:$0xff]
        %v1814 = vld [vmem:[%s775 + $0xb0] sm:$0xff]
        %v1815 = vld [vmem:[%s775 + $0xb8] sm:$0xff]
        %v1816 = vld [vmem:[%s775 + $0xc0] sm:$0xff]
        %v1817 = vld [vmem:[%s775 + $0xc8] sm:$0xff]
        %v1818 = vld [vmem:[%s775 + $0xd0] sm:$0xff]
        %v1819 = vld [vmem:[%s775 + $0xd8] sm:$0xff]
        %v1820 = vld [vmem:[%s775 + $0xe0] sm:$0xff]
        %v1821 = vld [vmem:[%s775 + $0xe8] sm:$0xff]
        %v1822 = vld [vmem:[%s775 + $0xf0] sm:$0xff]
        %v1823 = vld [vmem:[%s775 + $0xf8] sm:$0xff]
        %v1824 = vld [vmem:[%s775 + $0x100] sm:$0xff]
        %v1825 = vld [vmem:[%s775 + $0x108] sm:$0xff]
        %v1826 = vld [vmem:[%s775 + $0x110] sm:$0xff]
        %v1827 = vld [vmem:[%s775 + $0x118] sm:$0xff]
        %v1828 = vld [vmem:[%s775 + $0x120] sm:$0xff]
        %v1829 = vld [vmem:[%s775 + $0x128] sm:$0xff]
        %v1830 = vld [vmem:[%s775 + $0x130] sm:$0xff]
        %v1831 = vld [vmem:[%s775 + $0x138] sm:$0xff]
        %v1832 = vld [vmem:[%s775 + $0x140] sm:$0xff]
        %v1833 = vld [vmem:[%s775 + $0x148] sm:$0xff]
        %v1834 = vld [vmem:[%s775 + $0x150] sm:$0xff]
        %v1835 = vld [vmem:[%s775 + $0x158] sm:$0xff]
        %v1836 = vld [vmem:[%s775 + $0x160] sm:$0xff]
        %v1837 = vld [vmem:[%s775 + $0x168] sm:$0xff]
        %v1838 = vld [vmem:[%s775 + $0x170] sm:$0xff]
        %v1839 = vld [vmem:[%s775 + $0x178] sm:$0xff]
        %v1840 = vld [vmem:[%s775 + $0x180] sm:$0xff]
        %v1841 = vld [vmem:[%s775 + $0x188] sm:$0xff]
        %v1842 = vld [vmem:[%s775 + $0x190] sm:$0xff]
        %v1843 = vld [vmem:[%s775 + $0x198] sm:$0xff]
        %v1844 = vld [vmem:[%s775 + $0x1a0] sm:$0xff]
        %v1845 = vld [vmem:[%s775 + $0x1a8] sm:$0xff]
        %v1846 = vld [vmem:[%s775 + $0x1b0] sm:$0xff]
        %v1847 = vld [vmem:[%s775 + $0x1b8] sm:$0xff]
        %v1848 = vld [vmem:[%s775 + $0x1c0] sm:$0xff]
        %v1849 = vld [vmem:[%s775 + $0x1c8] sm:$0xff]
        %v1850 = vld [vmem:[%s775 + $0x1d0] sm:$0xff]
        %v1851 = vld [vmem:[%s775 + $0x1d8] sm:$0xff]
        %v1852 = vld [vmem:[%s775 + $0x1e0] sm:$0xff]
        %v1853 = vld [vmem:[%s775 + $0x1e8] sm:$0xff]
        %v1854 = vld [vmem:[%s775 + $0x1f0] sm:$0xff]
        %v1855 = vld [vmem:[%s775 + $0x1f8] sm:$0xff]
        %1856 = vmatpush.msra.mxu0 %v1852
        %1857 = vmatpush.msra.mxu0 %v1848
        %1858 = vmatpush.msra.mxu0 %v1844
        %1859 = vmatpush.msra.mxu0 %v1840
        %1860 = vmatpush.msra.mxu0 %v1836
        %1861 = vmatpush.msra.mxu0 %v1832
        %1862 = vmatpush.msra.mxu0 %v1828
        %1863 = vmatpush.msra.mxu0 %v1824
        %1864 = vmatpush.msra.mxu0 %v1820
        %1865 = vmatpush.msra.mxu0 %v1816
        %1866 = vmatpush.msra.mxu0 %v1812
        %1867 = vmatpush.msra.mxu0 %v1808
        %1868 = vmatpush.msra.mxu0 %v1804
        %1869 = vmatpush.msra.mxu0 %v1800
        %1870 = vmatpush.msra.mxu0 %v1796
        %1871 = vmatpush.msra.mxu0 %v1792
        %1872 = vmatmul.f32.gmra.mxu0 %v1765
        %v1873 = vpop.f32.mrf.mxu0
        %v1874 = vadd.f32 0.0, %v1873
        %1875 = vmatmul.f32.gmra.mxu0 %v1768
        %v1876 = vpop.f32.mrf.mxu0
        %v1877 = vadd.f32 0.0, %v1876
        %1878 = vmatmul.f32.gmra.mxu0 %v1771
        %v1879 = vpop.f32.mrf.mxu0
        %v1880 = vadd.f32 0.0, %v1879
        %1881 = vmatmul.f32.gmra.mxu0 %v1774
        %v1882 = vpop.f32.mrf.mxu0
        %v1883 = vadd.f32 0.0, %v1882
        %1884 = vdwg.mxu0
        %1885 = vmatpush.msra.mxu0 %v1853
        %1886 = vmatpush.msra.mxu0 %v1849
        %1887 = vmatpush.msra.mxu0 %v1845
        %1888 = vmatpush.msra.mxu0 %v1841
        %1889 = vmatpush.msra.mxu0 %v1837
        %1890 = vmatpush.msra.mxu0 %v1833
        %1891 = vmatpush.msra.mxu0 %v1829
        %1892 = vmatpush.msra.mxu0 %v1825
        %1893 = vmatpush.msra.mxu0 %v1821
        %1894 = vmatpush.msra.mxu0 %v1817
        %1895 = vmatpush.msra.mxu0 %v1813
        %1896 = vmatpush.msra.mxu0 %v1809
        %1897 = vmatpush.msra.mxu0 %v1805
        %1898 = vmatpush.msra.mxu0 %v1801
        %1899 = vmatpush.msra.mxu0 %v1797
        %1900 = vmatpush.msra.mxu0 %v1793
        %1901 = vmatmul.f32.gmra.mxu0 %v1765
        %v1902 = vpop.f32.mrf.mxu0
        %v1903 = vadd.f32 0.0, %v1902
        %1904 = vmatmul.f32.gmra.mxu0 %v1768
        %v1905 = vpop.f32.mrf.mxu0
        %v1906 = vadd.f32 0.0, %v1905
        %1907 = vmatmul.f32.gmra.mxu0 %v1771
        %v1908 = vpop.f32.mrf.mxu0
        %v1909 = vadd.f32 0.0, %v1908
        %1910 = vmatmul.f32.gmra.mxu0 %v1774
        %v1911 = vpop.f32.mrf.mxu0
        %v1912 = vadd.f32 0.0, %v1911
        %1913 = vdwg.mxu0
        %1914 = vmatpush.msra.mxu0 %v1854
        %1915 = vmatpush.msra.mxu0 %v1850
        %1916 = vmatpush.msra.mxu0 %v1846
        %1917 = vmatpush.msra.mxu0 %v1842
        %1918 = vmatpush.msra.mxu0 %v1838
        %1919 = vmatpush.msra.mxu0 %v1834
        %1920 = vmatpush.msra.mxu0 %v1830
        %1921 = vmatpush.msra.mxu0 %v1826
        %1922 = vmatpush.msra.mxu0 %v1822
        %1923 = vmatpush.msra.mxu0 %v1818
        %1924 = vmatpush.msra.mxu0 %v1814
        %1925 = vmatpush.msra.mxu0 %v1810
        %1926 = vmatpush.msra.mxu0 %v1806
        %1927 = vmatpush.msra.mxu0 %v1802
        %1928 = vmatpush.msra.mxu0 %v1798
        %1929 = vmatpush.msra.mxu0 %v1794
        %1930 = vmatmul.f32.gmra.mxu0 %v1765
        %v1931 = vpop.f32.mrf.mxu0
        %v1932 = vadd.f32 0.0, %v1931
        %1933 = vmatmul.f32.gmra.mxu0 %v1768
        %v1934 = vpop.f32.mrf.mxu0
        %v1935 = vadd.f32 0.0, %v1934
        %1936 = vmatmul.f32.gmra.mxu0 %v1771
        %v1937 = vpop.f32.mrf.mxu0
        %v1938 = vadd.f32 0.0, %v1937
        %1939 = vmatmul.f32.gmra.mxu0 %v1774
        %v1940 = vpop.f32.mrf.mxu0
        %v1941 = vadd.f32 0.0, %v1940
        %1942 = vdwg.mxu0
        %1943 = vmatpush.msra.mxu0 %v1855
        %1944 = vmatpush.msra.mxu0 %v1851
        %1945 = vmatpush.msra.mxu0 %v1847
        %1946 = vmatpush.msra.mxu0 %v1843
        %1947 = vmatpush.msra.mxu0 %v1839
        %1948 = vmatpush.msra.mxu0 %v1835
        %1949 = vmatpush.msra.mxu0 %v1831
        %1950 = vmatpush.msra.mxu0 %v1827
        %1951 = vmatpush.msra.mxu0 %v1823
        %1952 = vmatpush.msra.mxu0 %v1819
        %1953 = vmatpush.msra.mxu0 %v1815
        %1954 = vmatpush.msra.mxu0 %v1811
        %1955 = vmatpush.msra.mxu0 %v1807
        %1956 = vmatpush.msra.mxu0 %v1803
        %1957 = vmatpush.msra.mxu0 %v1799
        %1958 = vmatpush.msra.mxu0 %v1795
        %1959 = vmatmul.f32.gmra.mxu0 %v1765
        %v1960 = vpop.f32.mrf.mxu0
        %v1961 = vadd.f32 0.0, %v1960
        %1962 = vmatmul.f32.gmra.mxu0 %v1768
        %v1963 = vpop.f32.mrf.mxu0
        %v1964 = vadd.f32 0.0, %v1963
        %1965 = vmatmul.f32.gmra.mxu0 %v1771
        %v1966 = vpop.f32.mrf.mxu0
        %v1967 = vadd.f32 0.0, %v1966
        %1968 = vmatmul.f32.gmra.mxu0 %v1774
        %v1969 = vpop.f32.mrf.mxu0
        %v1970 = vadd.f32 0.0, %v1969
        %1971 = vdwg.mxu0
        %v1972 = vadd.f32 %v1776, %v1874
        %v1973 = vadd.f32 %v1777, %v1903
        %v1974 = vadd.f32 %v1778, %v1932
        %v1975 = vadd.f32 %v1779, %v1961
        %v1976 = vadd.f32 %v1780, %v1877
        %v1977 = vadd.f32 %v1781, %v1906
        %v1978 = vadd.f32 %v1782, %v1935
        %v1979 = vadd.f32 %v1783, %v1964
        %v1980 = vadd.f32 %v1784, %v1880
        %v1981 = vadd.f32 %v1785, %v1909
        %v1982 = vadd.f32 %v1786, %v1938
        %v1983 = vadd.f32 %v1787, %v1967
        %v1984 = vadd.f32 %v1788, %v1883
        %v1985 = vadd.f32 %v1789, %v1912
        %v1986 = vadd.f32 %v1790, %v1941
        %v1987 = vadd.f32 %v1791, %v1970
        %1988 = vst [vmem:[#allocation2] sm:$0xff] %v1972
        %1989 = vst [vmem:[#allocation2 + $0x8] sm:$0xff] %v1973
        %1990 = vst [vmem:[#allocation2 + $0x10] sm:$0xff] %v1974
        %1991 = vst [vmem:[#allocation2 + $0x18] sm:$0xff] %v1975
        %1992 = vst [vmem:[#allocation2 + $0x20] sm:$0xff] %v1976
        %1993 = vst [vmem:[#allocation2 + $0x28] sm:$0xff] %v1977
        %1994 = vst [vmem:[#allocation2 + $0x30] sm:$0xff] %v1978
        %1995 = vst [vmem:[#allocation2 + $0x38] sm:$0xff] %v1979
        %1996 = vst [vmem:[#allocation2 + $0x40] sm:$0xff] %v1980
        %1997 = vst [vmem:[#allocation2 + $0x48] sm:$0xff] %v1981
        %1998 = vst [vmem:[#allocation2 + $0x50] sm:$0xff] %v1982
        %1999 = vst [vmem:[#allocation2 + $0x58] sm:$0xff] %v1983
        %2000 = vst [vmem:[#allocation2 + $0x60] sm:$0xff] %v1984
        %2001 = vst [vmem:[#allocation2 + $0x68] sm:$0xff] %v1985
        %2002 = vst [vmem:[#allocation2 + $0x70] sm:$0xff] %v1986
        %2003 = vst [vmem:[#allocation2 + $0x78] sm:$0xff] %v1987
        %p2004 = scmp.eq.s32.totalorder %s31, 4
        // Predicated region
        $region93: #{futoshiki_forward.6} parent=87 // pred_check
          %p2005 = pneg %p2004
        $region94: #{futoshiki_forward.6} parent=87 // pred_check_branch
          %2007 = sbr.rel (%p2005) target = $region96
        $region95: #{futoshiki_forward.6} parent=87 // pred_region
          %v2008 = vld [vmem:[#allocation2] sm:$0xff]
          %v2009 = vld [vmem:[#allocation2 + $0x8] sm:$0xff]
          %v2010 = vld [vmem:[#allocation2 + $0x10] sm:$0xff]
          %v2011 = vld [vmem:[#allocation2 + $0x18] sm:$0xff]
          %v2012 = vld [vmem:[#allocation2 + $0x20] sm:$0xff]
          %v2013 = vld [vmem:[#allocation2 + $0x28] sm:$0xff]
          %v2014 = vld [vmem:[#allocation2 + $0x30] sm:$0xff]
          %v2015 = vld [vmem:[#allocation2 + $0x38] sm:$0xff]
          %v2016 = vld [vmem:[#allocation2 + $0x40] sm:$0xff]
          %v2017 = vld [vmem:[#allocation2 + $0x48] sm:$0xff]
          %v2018 = vld [vmem:[#allocation2 + $0x50] sm:$0xff]
          %v2019 = vld [vmem:[#allocation2 + $0x58] sm:$0xff]
          %v2020 = vld [vmem:[#allocation2 + $0x60] sm:$0xff]
          %v2021 = vld [vmem:[#allocation2 + $0x68] sm:$0xff]
          %v2022 = vld [vmem:[#allocation2 + $0x70] sm:$0xff]
          %v2023 = vld [vmem:[#allocation2 + $0x78] sm:$0xff]
          %v2024 = vxor.u32 %v2008, 2147483648
          %v2025 = vxor.u32 %v2012, 2147483648
          %v2026 = vxor.u32 %v2016, 2147483648
          %v2027 = vxor.u32 %v2020, 2147483648
          %v2028 = vmul.f32 %v2024, 1.442695
          %v2029 = vpow.pop %v2028
          %v2030 = vmul.f32 %v2025, 1.442695
          %v2031 = vpow.pop %v2030
          %v2032 = vmul.f32 %v2026, 1.442695
          %v2033 = vpow.pop %v2032
          %v2034 = vmul.f32 %v2027, 1.442695
          %v2035 = vpow.pop %v2034
          %v2036 = vadd.f32 %v2029, 1.0
          %v2037 = vadd.f32 %v2031, 1.0
          %v2038 = vadd.f32 %v2033, 1.0
          %v2039 = vadd.f32 %v2035, 1.0
          %v2040 = vrcp.pop %v2036
          %v2041 = vmul.f32 %v2036, %v2040
          %v2042 = vsub.f32 1.0, %v2041
          %v2043 = vmul.f32 %v2040, %v2042
          %v2044 = vadd.f32 %v2040, %v2043
          %vm2045 = vweird.f32 %v2036
          %vm2046 = vweird.f32 %v2040
          %vm2047 = vmor %vm2045, %vm2046
          %v2048 = vsel %vm2047, %v2040, %v2044
          %v2049 = vand.u32 2147483647, %v2036
          %vm2050 = vcmp.eq.f32.partialorder %v2049, 8.507059e+37
          %v2051 = vand.u32 %v2036, 2147483648
          %v2052 = vor.u32 1.1754944e-38, %v2051
          %v2053 = vsel %vm2050, %v2052, %v2048
          %v2054 = vmul.f32 1.0, %v2053
          %v2055 = vrcp.pop %v2037
          %v2056 = vmul.f32 %v2037, %v2055
          %v2057 = vsub.f32 1.0, %v2056
          %v2058 = vmul.f32 %v2055, %v2057
          %v2059 = vadd.f32 %v2055, %v2058
          %vm2060 = vweird.f32 %v2037
          %vm2061 = vweird.f32 %v2055
          %vm2062 = vmor %vm2060, %vm2061
          %v2063 = vsel %vm2062, %v2055, %v2059
          %v2064 = vand.u32 2147483647, %v2037
          %vm2065 = vcmp.eq.f32.partialorder %v2064, 8.507059e+37
          %v2066 = vand.u32 %v2037, 2147483648
          %v2067 = vor.u32 1.1754944e-38, %v2066
          %v2068 = vsel %vm2065, %v2067, %v2063
          %v2069 = vmul.f32 1.0, %v2068
          %v2070 = vrcp.pop %v2038
          %v2071 = vmul.f32 %v2038, %v2070
          %v2072 = vsub.f32 1.0, %v2071
          %v2073 = vmul.f32 %v2070, %v2072
          %v2074 = vadd.f32 %v2070, %v2073
          %vm2075 = vweird.f32 %v2038
          %vm2076 = vweird.f32 %v2070
          %vm2077 = vmor %vm2075, %vm2076
          %v2078 = vsel %vm2077, %v2070, %v2074
          %v2079 = vand.u32 2147483647, %v2038
          %vm2080 = vcmp.eq.f32.partialorder %v2079, 8.507059e+37
          %v2081 = vand.u32 %v2038, 2147483648
          %v2082 = vor.u32 1.1754944e-38, %v2081
          %v2083 = vsel %vm2080, %v2082, %v2078
          %v2084 = vmul.f32 1.0, %v2083
          %v2085 = vrcp.pop %v2039
          %v2086 = vmul.f32 %v2039, %v2085
          %v2087 = vsub.f32 1.0, %v2086
          %v2088 = vmul.f32 %v2085, %v2087
          %v2089 = vadd.f32 %v2085, %v2088
          %vm2090 = vweird.f32 %v2039
          %vm2091 = vweird.f32 %v2085
          %vm2092 = vmor %vm2090, %vm2091
          %v2093 = vsel %vm2092, %v2085, %v2089
          %v2094 = vand.u32 2147483647, %v2039
          %vm2095 = vcmp.eq.f32.partialorder %v2094, 8.507059e+37
          %v2096 = vand.u32 %v2039, 2147483648
          %v2097 = vor.u32 1.1754944e-38, %v2096
          %v2098 = vsel %vm2095, %v2097, %v2093
          %v2099 = vmul.f32 1.0, %v2098
          %v2100 = vxor.u32 %v2009, 2147483648
          %v2101 = vxor.u32 %v2013, 2147483648
          %v2102 = vxor.u32 %v2017, 2147483648
          %v2103 = vxor.u32 %v2021, 2147483648
          %v2104 = vmul.f32 %v2100, 1.442695
          %v2105 = vpow.pop %v2104
          %v2106 = vmul.f32 %v2101, 1.442695
          %v2107 = vpow.pop %v2106
          %v2108 = vmul.f32 %v2102, 1.442695
          %v2109 = vpow.pop %v2108
          %v2110 = vmul.f32 %v2103, 1.442695
          %v2111 = vpow.pop %v2110
          %v2112 = vadd.f32 %v2105, 1.0
          %v2113 = vadd.f32 %v2107, 1.0
          %v2114 = vadd.f32 %v2109, 1.0
          %v2115 = vadd.f32 %v2111, 1.0
          %v2116 = vrcp.pop %v2112
          %v2117 = vmul.f32 %v2112, %v2116
          %v2118 = vsub.f32 1.0, %v2117
          %v2119 = vmul.f32 %v2116, %v2118
          %v2120 = vadd.f32 %v2116, %v2119
          %vm2121 = vweird.f32 %v2112
          %vm2122 = vweird.f32 %v2116
          %vm2123 = vmor %vm2121, %vm2122
          %v2124 = vsel %vm2123, %v2116, %v2120
          %v2125 = vand.u32 2147483647, %v2112
          %vm2126 = vcmp.eq.f32.partialorder %v2125, 8.507059e+37
          %v2127 = vand.u32 %v2112, 2147483648
          %v2128 = vor.u32 1.1754944e-38, %v2127
          %v2129 = vsel %vm2126, %v2128, %v2124
          %v2130 = vmul.f32 1.0, %v2129
          %v2131 = vrcp.pop %v2113
          %v2132 = vmul.f32 %v2113, %v2131
          %v2133 = vsub.f32 1.0, %v2132
          %v2134 = vmul.f32 %v2131, %v2133
          %v2135 = vadd.f32 %v2131, %v2134
          %vm2136 = vweird.f32 %v2113
          %vm2137 = vweird.f32 %v2131
          %vm2138 = vmor %vm2136, %vm2137
          %v2139 = vsel %vm2138, %v2131, %v2135
          %v2140 = vand.u32 2147483647, %v2113
          %vm2141 = vcmp.eq.f32.partialorder %v2140, 8.507059e+37
          %v2142 = vand.u32 %v2113, 2147483648
          %v2143 = vor.u32 1.1754944e-38, %v2142
          %v2144 = vsel %vm2141, %v2143, %v2139
          %v2145 = vmul.f32 1.0, %v2144
          %v2146 = vrcp.pop %v2114
          %v2147 = vmul.f32 %v2114, %v2146
          %v2148 = vsub.f32 1.0, %v2147
          %v2149 = vmul.f32 %v2146, %v2148
          %v2150 = vadd.f32 %v2146, %v2149
          %vm2151 = vweird.f32 %v2114
          %vm2152 = vweird.f32 %v2146
          %vm2153 = vmor %vm2151, %vm2152
          %v2154 = vsel %vm2153, %v2146, %v2150
          %v2155 = vand.u32 2147483647, %v2114
          %vm2156 = vcmp.eq.f32.partialorder %v2155, 8.507059e+37
          %v2157 = vand.u32 %v2114, 2147483648
          %v2158 = vor.u32 1.1754944e-38, %v2157
          %v2159 = vsel %vm2156, %v2158, %v2154
          %v2160 = vmul.f32 1.0, %v2159
          %v2161 = vrcp.pop %v2115
          %v2162 = vmul.f32 %v2115, %v2161
          %v2163 = vsub.f32 1.0, %v2162
          %v2164 = vmul.f32 %v2161, %v2163
          %v2165 = vadd.f32 %v2161, %v2164
          %vm2166 = vweird.f32 %v2115
          %vm2167 = vweird.f32 %v2161
          %vm2168 = vmor %vm2166, %vm2167
          %v2169 = vsel %vm2168, %v2161, %v2165
          %v2170 = vand.u32 2147483647, %v2115
          %vm2171 = vcmp.eq.f32.partialorder %v2170, 8.507059e+37
          %v2172 = vand.u32 %v2115, 2147483648
          %v2173 = vor.u32 1.1754944e-38, %v2172
          %v2174 = vsel %vm2171, %v2173, %v2169
          %v2175 = vmul.f32 1.0, %v2174
          %v2176 = vtanh.pop %v2010
          %v2177 = vtanh.pop %v2014
          %v2178 = vtanh.pop %v2018
          %v2179 = vtanh.pop %v2022
          %v2180 = vxor.u32 %v2011, 2147483648
          %v2181 = vxor.u32 %v2015, 2147483648
          %v2182 = vxor.u32 %v2019, 2147483648
          %v2183 = vxor.u32 %v2023, 2147483648
          %v2184 = vmul.f32 %v2180, 1.442695
          %v2185 = vpow.pop %v2184
          %v2186 = vmul.f32 %v2181, 1.442695
          %v2187 = vpow.pop %v2186
          %v2188 = vmul.f32 %v2182, 1.442695
          %v2189 = vpow.pop %v2188
          %v2190 = vmul.f32 %v2183, 1.442695
          %v2191 = vpow.pop %v2190
          %v2192 = vadd.f32 %v2185, 1.0
          %v2193 = vadd.f32 %v2187, 1.0
          %v2194 = vadd.f32 %v2189, 1.0
          %v2195 = vadd.f32 %v2191, 1.0
          %v2196 = vrcp.pop %v2192
          %v2197 = vmul.f32 %v2192, %v2196
          %v2198 = vsub.f32 1.0, %v2197
          %v2199 = vmul.f32 %v2196, %v2198
          %v2200 = vadd.f32 %v2196, %v2199
          %vm2201 = vweird.f32 %v2192
          %vm2202 = vweird.f32 %v2196
          %vm2203 = vmor %vm2201, %vm2202
          %v2204 = vsel %vm2203, %v2196, %v2200
          %v2205 = vand.u32 2147483647, %v2192
          %vm2206 = vcmp.eq.f32.partialorder %v2205, 8.507059e+37
          %v2207 = vand.u32 %v2192, 2147483648
          %v2208 = vor.u32 1.1754944e-38, %v2207
          %v2209 = vsel %vm2206, %v2208, %v2204
          %v2210 = vmul.f32 1.0, %v2209
          %v2211 = vrcp.pop %v2193
          %v2212 = vmul.f32 %v2193, %v2211
          %v2213 = vsub.f32 1.0, %v2212
          %v2214 = vmul.f32 %v2211, %v2213
          %v2215 = vadd.f32 %v2211, %v2214
          %vm2216 = vweird.f32 %v2193
          %vm2217 = vweird.f32 %v2211
          %vm2218 = vmor %vm2216, %vm2217
          %v2219 = vsel %vm2218, %v2211, %v2215
          %v2220 = vand.u32 2147483647, %v2193
          %vm2221 = vcmp.eq.f32.partialorder %v2220, 8.507059e+37
          %v2222 = vand.u32 %v2193, 2147483648
          %v2223 = vor.u32 1.1754944e-38, %v2222
          %v2224 = vsel %vm2221, %v2223, %v2219
          %v2225 = vmul.f32 1.0, %v2224
          %v2226 = vrcp.pop %v2194
          %v2227 = vmul.f32 %v2194, %v2226
          %v2228 = vsub.f32 1.0, %v2227
          %v2229 = vmul.f32 %v2226, %v2228
          %v2230 = vadd.f32 %v2226, %v2229
          %vm2231 = vweird.f32 %v2194
          %vm2232 = vweird.f32 %v2226
          %vm2233 = vmor %vm2231, %vm2232
          %v2234 = vsel %vm2233, %v2226, %v2230
          %v2235 = vand.u32 2147483647, %v2194
          %vm2236 = vcmp.eq.f32.partialorder %v2235, 8.507059e+37
          %v2237 = vand.u32 %v2194, 2147483648
          %v2238 = vor.u32 1.1754944e-38, %v2237
          %v2239 = vsel %vm2236, %v2238, %v2234
          %v2240 = vmul.f32 1.0, %v2239
          %v2241 = vrcp.pop %v2195
          %v2242 = vmul.f32 %v2195, %v2241
          %v2243 = vsub.f32 1.0, %v2242
          %v2244 = vmul.f32 %v2241, %v2243
          %v2245 = vadd.f32 %v2241, %v2244
          %vm2246 = vweird.f32 %v2195
          %vm2247 = vweird.f32 %v2241
          %vm2248 = vmor %vm2246, %vm2247
          %v2249 = vsel %vm2248, %v2241, %v2245
          %v2250 = vand.u32 2147483647, %v2195
          %vm2251 = vcmp.eq.f32.partialorder %v2250, 8.507059e+37
          %v2252 = vand.u32 %v2195, 2147483648
          %v2253 = vor.u32 1.1754944e-38, %v2252
          %v2254 = vsel %vm2251, %v2253, %v2249
          %v2255 = vmul.f32 1.0, %v2254
          %v2256 = vld [vmem:[%s15] sm:$0xff]
          %v2257 = vld [vmem:[%s15 + $0x8] sm:$0xff]
          %v2258 = vld [vmem:[%s15 + $0x10] sm:$0xff]
          %v2259 = vld [vmem:[%s15 + $0x18] sm:$0xff]
          %v2260 = vmul.f32 %v2130, %v2256
          %v2261 = vmul.f32 %v2145, %v2257
          %v2262 = vmul.f32 %v2160, %v2258
          %v2263 = vmul.f32 %v2175, %v2259
          %v2264 = vmul.f32 %v2054, %v2176
          %v2265 = vmul.f32 %v2069, %v2177
          %v2266 = vmul.f32 %v2084, %v2178
          %v2267 = vmul.f32 %v2099, %v2179
          %v2268 = vadd.f32 %v2260, %v2264
          %v2269 = vadd.f32 %v2261, %v2265
          %v2270 = vadd.f32 %v2262, %v2266
          %v2271 = vadd.f32 %v2263, %v2267
          %2272 = vst [vmem:[#allocation3] sm:$0xff] %v2268
          %2273 = vst [vmem:[#allocation3 + $0x8] sm:$0xff] %v2269
          %2274 = vst [vmem:[#allocation3 + $0x10] sm:$0xff] %v2270
          %2275 = vst [vmem:[#allocation3 + $0x18] sm:$0xff] %v2271
          %v2276 = vtanh.pop %v2268
          %v2277 = vtanh.pop %v2269
          %v2278 = vtanh.pop %v2270
          %v2279 = vtanh.pop %v2271
          %v2280 = vmul.f32 %v2210, %v2276
          %v2281 = vmul.f32 %v2225, %v2277
          %v2282 = vmul.f32 %v2240, %v2278
          %v2283 = vmul.f32 %v2255, %v2279
          %2284 = vst [vmem:[%s17] sm:$0xff] %v2280
          %2285 = vst [vmem:[%s17 + $0x8] sm:$0xff] %v2281
          %2286 = vst [vmem:[%s17 + $0x10] sm:$0xff] %v2282
          %2287 = vst [vmem:[%s17 + $0x18] sm:$0xff] %v2283
        $region96: #{futoshiki_forward.6} parent=87 // pred_fallthru
          _
        // Predicated region
        $region97: #{futoshiki_forward.6} parent=87 // pred_check
          %p2288 = pneg %p466
        $region98: #{futoshiki_forward.6} parent=87 // pred_check_branch
          %2290 = sbr.rel (%p2288) target = $region100
        $region99: #{futoshiki_forward.6} parent=87 // pred_region
          _
        $region100: #{futoshiki_forward.6} parent=87 // pred_fallthru
          _
        // Predicated region
        $region101: #{futoshiki_forward.6} parent=87 // pred_check
          %p2291 = pneg %p487
        $region102: #{futoshiki_forward.6} parent=87 // pred_check_branch
          %2293 = sbr.rel (%p2291) target = $region104
        $region103: #{futoshiki_forward.6} parent=87 // pred_region
          %2295 = vsyncadd [#allocation4], 0
          %s2296 = sshll.u32 [#allocation3], 4
          %s2297 = int_to_ptr.vmem [resolvable:$true] %s2296
          %s2298 = sshll.u32 %s18, 4
          %s2299 = int_to_ptr.hbm [resolvable:$true] %s2298
          %2304 = dma.vmem_to_hbm [thread:$0]  %s2297, 512, %s2299, [#allocation4], 128, 128, 8
        $region104: #{futoshiki_forward.6} parent=87 // pred_fallthru
          _
        // Predicated region
        $region105: #{futoshiki_forward.6} parent=87 // pred_check
          %p2305 = pneg %p466
        $region106: #{futoshiki_forward.6} parent=87 // pred_check_branch
          %2307 = sbr.rel (%p2305) target = $region108
        $region107: #{futoshiki_forward.6} parent=87 // pred_region
          _
        $region108: #{futoshiki_forward.6} parent=87 // pred_fallthru
          _
        // Predicated region
        $region109: #{futoshiki_forward.6} parent=87 // pred_check
          %p2308 = pneg %p487
        $region110: #{futoshiki_forward.6} parent=87 // pred_check_branch
          %2310 = sbr.rel (%p2308) target = $region112
        $region111: #{futoshiki_forward.6} parent=87 // pred_region
          %2312 = dma.done [#allocation4], 512
        $region112: #{futoshiki_forward.6} parent=87 // pred_fallthru
          _
      $region88: #{futoshiki_forward.6} parent=5 // pred_fallthru
        _
      %p2313 = scmp.le.s32.totalorder 2, %s26
      // Predicated region
      $region113: #{futoshiki_forward.6} parent=5 // pred_check
        %p2314 = pneg %p2313
      $region114: #{futoshiki_forward.6} parent=5 // pred_check_branch
        %2316 = sbr.rel (%p2314) target = $region116
      $region115: #{futoshiki_forward.6} parent=5 // pred_region
        %s2317 = ssub.s32 %s26, 2
      $region116: #{futoshiki_forward.6} parent=5 // pred_fallthru
        _
    $region6: #{futoshiki_forward.6} parent=1 // loop_footer
      %s30 = sadd.s32 1, %s26
    $region7: #{futoshiki_forward.6} parent=1 // loop_footer_branch
      %25 = sbr.rel target = $region3
    $region8: #{futoshiki_forward.6} parent=1 // loop_exit
      _
    %2318 = vsyncpa [#allocation4], 1
    %s2319 = scalar_lea.sflag [#allocation4], 1
    %2320 = vsyncpa %s2319, 1

</llo_original>
